<compile_context>
chip_gen: v6e
topology: v6e:2x2x1
jax: 0.10.0
libtpu: 0.0.40
codegen_flags: <defaults>
</compile_context>

<pallas_src>
import math
import functools

import jax
import jax.numpy as jnp
from jax import lax
from jax.experimental import pallas as pl
from jax.experimental.pallas import tpu as pltpu


LANE = 128
SUBLANE = 8
COMPUTE_DTYPE = jnp.bfloat16          # matmul-operand dtype (f32 accumulation everywhere)
VMEM_LIMIT_BYTES = 64 * 1024 * 1024   # scoped VMEM budget; tune per generation if needed


def _round_up(n, m):
    return ((n + m - 1) // m) * m


def _pad_to(x, shape):
    return jnp.pad(x, [(0, s - d) for d, s in zip(x.shape, shape)])


def _pick_tile(n, candidates):
    for c in candidates:
        if n % c == 0:
            return c
    return n


# ---------------------------------------------------------------------------
# Kernels
# ---------------------------------------------------------------------------

def lstm_recurrent_kernel(hidden_real, xw_ref, wh_hbm_ref, h_out_ref,
                          h_sc, c_sc, wh_vmem, dma_sem):
    """One grid step == TT LSTM time steps for one batch tile.

    xw_ref    : (TT, BT, 4*Hp)  bf16, precomputed x @ Wx + b (gate order g,i,f,o)
    wh_hbm_ref: (Hp, 4*Hp)      bf16 fused recurrent weights, memory_space=ANY (HBM)
    h_out_ref : (TT, BT, Hp)    bf16 hidden states for this chunk
    h_sc,c_sc : (BT, Hp)        f32 recurrent state, persists across the time grid axis
    wh_vmem   : (Hp, 4*Hp)      bf16 single resident VMEM copy of Wh
    dma_sem   : scalar DMA semaphore
    """
    # First time-chunk of each batch tile: copy Wh into VMEM once and reset the state.
    @pl.when(pl.program_id(1) == 0)
    def _():
        cp = pltpu.make_async_copy(wh_hbm_ref, wh_vmem, dma_sem)
        cp.start()
        cp.wait()
        h_sc[...] = jnp.zeros_like(h_sc)
        # PyTorch module: h0 = zeros, c0 = ones. Initialize c=1 only on real lanes so the
        # padded hidden lanes stay exactly 0 for all time steps.
        lane = lax.broadcasted_iota(jnp.int32, c_sc.shape, 1)
        c_sc[...] = jnp.where(lane < hidden_real, 1.0, 0.0).astype(c_sc.dtype)

    tt = xw_ref.shape[0]
    hp = h_sc.shape[-1]

    def sigmoid(z):
        # Exactly sigmoid(z); single EUP op (tanh) instead of exp + divide.
        return 0.5 * jnp.tanh(0.5 * z) + 0.5

    # TODO(synk): Wh could be held stationary in the MXU weight staging across the whole
    # chunk (pltpu.matmul_push_rhs / matmul_acc_lhs / matmul_pop); kept as jnp.dot for
    # robustness.
    def step(t, carry):
        h, c = carry                                   # f32 (BT, Hp)
        pre = xw_ref[t] + jnp.dot(h.astype(COMPUTE_DTYPE), wh_vmem[...],
                                  preferred_element_type=jnp.float32)   # f32 (BT, 4Hp)
        g = jnp.tanh(pre[:, 0 * hp:1 * hp])
        i = sigmoid(pre[:, 1 * hp:2 * hp])
        f = sigmoid(pre[:, 2 * hp:3 * hp])
        o = sigmoid(pre[:, 3 * hp:4 * hp])
        c = g * i + c * f
        h = jnp.tanh(c) * o
        h_out_ref[t] = h.astype(h_out_ref.dtype)
        return h, c

    h, c = lax.fori_loop(0, tt, step, (h_sc[...], c_sc[...]), unroll=8)
    h_sc[...] = h
    c_sc[...] = c


def matmul_bias_kernel(x_ref, w_ref, b_ref, y_ref):
    """Lane-dense (TM, Kp) @ (Kp, TN) + (1, TN) with f32 accumulation."""
    y_ref[...] = (jnp.dot(x_ref[...], w_ref[...], preferred_element_type=jnp.float32)
                  + b_ref[...]).astype(y_ref.dtype)


def _matmul_bias(x, w, b, *, out_dtype):
    """Tiled y = x @ w + b. Pads M/K/N to TPU tiles, casts operands to COMPUTE_DTYPE.

    Returns the padded (Mp, Np) result; caller slices the valid region.
    """
    M, K = x.shape
    Kw, N = w.shape
    Kp = _round_up(max(K, Kw), LANE)
    Mp = _round_up(M, 512) if M >= 512 else _round_up(M, SUBLANE)
    Np = _round_up(N, 512) if N >= 512 else _round_up(N, LANE)

    xp = _pad_to(x, (Mp, Kp)).astype(COMPUTE_DTYPE)
    wp = _pad_to(w, (Kp, Np)).astype(COMPUTE_DTYPE)
    bp = _pad_to(b.reshape(1, -1), (1, Np)).astype(jnp.float32)

    TM = _pick_tile(Mp, (512, 256, 128, 64, 32, 16, 8))
    TN = _pick_tile(Np, (512, 256, 128))

    return pl.pallas_call(
        matmul_bias_kernel,
        out_shape=jax.ShapeDtypeStruct((Mp, Np), out_dtype),
        grid_spec=pltpu.PrefetchScalarGridSpec(
            num_scalar_prefetch=0,
            grid=(Mp // TM, Np // TN),
            in_specs=[
                pl.BlockSpec((TM, Kp), lambda i, j: (i, 0)),
                pl.BlockSpec((Kp, TN), lambda i, j: (0, j)),
                pl.BlockSpec((1, TN), lambda i, j: (0, j)),
            ],
            out_specs=pl.BlockSpec((TM, TN), lambda i, j: (i, j)),
        ),
        compiler_params=pltpu.CompilerParams(
            dimension_semantics=("parallel", "parallel"),
            vmem_limit_bytes=VMEM_LIMIT_BYTES,
        ),
    )(xp, wp, bp)


# ---------------------------------------------------------------------------
# Forward wrapper
# ---------------------------------------------------------------------------

@jax.jit
def text_generation_forward(tokens, emb_table, wx, wh, b, wout, bout):
    """tokens: (T, B) int32 -> logits (T, B, V) float32 (Embedding -> LSTM -> Linear)."""
    T, B = tokens.shape
    E = emb_table.shape[1]
    H = wh.shape[-1]
    V = wout.shape[-1]

    Hp = _round_up(H, LANE)
    Vocab = V

    # Time chunking: up to 64 steps per grid iteration (per-grid-step overhead amortized).
    TT = max(8, min(64, T))
    Tp = _round_up(T, TT)

    # Batch tiling: leading "parallel" grid axis so v7x megacore can split the recurrence.
    Bp = _round_up(B, SUBLANE)
    if Bp > SUBLANE:
        BT = _round_up((Bp + 1) // 2, SUBLANE)
        Bp = _round_up(Bp, BT)
    else:
        BT = Bp
    NB = Bp // BT

    # --- Fuse the 4 gates into one lane-wide (.., 4*Hp) layout (g, i, f, o order). ---
    wx_f = jnp.concatenate([_pad_to(wx[k], (E, Hp)) for k in range(4)], axis=1)   # (E, 4Hp) f32
    wh_f = jnp.concatenate([_pad_to(wh[k], (H, Hp)) for k in range(4)], axis=1)
    wh_f = _pad_to(wh_f, (Hp, 4 * Hp)).astype(COMPUTE_DTYPE)                      # (Hp, 4Hp) bf16
    b_f = jnp.concatenate([_pad_to(b[k], (1, Hp)) for k in range(4)], axis=1)     # (1, 4Hp) f32

    # --- x-side projection + gate bias hoisted out of the serial recurrence. ---
    if Vocab <= T * B:
        # Fold into the embedding table: one (V, E) @ (E, 4Hp) matmul, then a row gather.
        emb_proj = _matmul_bias(emb_table, wx_f, b_f, out_dtype=COMPUTE_DTYPE)[:Vocab]
        # TODO(synk): token row-gather stays in XLA glue; an in-kernel DMA gather is possible
        # but not worthwhile at these sizes.
        xw = emb_proj[tokens]                                                     # (T, B, 4Hp)
    else:
        # Per-token path (avoids a V*E*4H precompute at realistic vocab sizes).
        embeds = emb_table[tokens].reshape(T * B, E)
        xw = _matmul_bias(embeds, wx_f, b_f, out_dtype=COMPUTE_DTYPE)[:T * B]
        xw = xw.reshape(T, B, 4 * Hp)
    xw = _pad_to(xw, (Tp, Bp, 4 * Hp))                                            # bf16

    # --- Sequential recurrent kernel: h, c persist in VMEM scratch; TT steps / grid iter. ---
    # TODO(synk): the vocab projection below could be overlapped with the recurrence
    # (emit_pipeline over V tiles inside this kernel); kept as two back-to-back calls.
    h_states = pl.pallas_call(
        functools.partial(lstm_recurrent_kernel, H),
        out_shape=jax.ShapeDtypeStruct((Tp, Bp, Hp), COMPUTE_DTYPE),
        grid_spec=pltpu.PrefetchScalarGridSpec(
            num_scalar_prefetch=0,
            grid=(NB, Tp // TT),
            in_specs=[
                pl.BlockSpec((TT, BT, 4 * Hp), lambda bi, t: (t, bi, 0)),  # xW chunk
                pl.BlockSpec(memory_space=pl.ANY),                         # Wh stays in HBM
            ],
            out_specs=pl.BlockSpec((TT, BT, Hp), lambda bi, t: (t, bi, 0)),
            scratch_shapes=[
                pltpu.VMEM((BT, Hp), jnp.float32),          # h state
                pltpu.VMEM((BT, Hp), jnp.float32),          # c state
                pltpu.VMEM((Hp, 4 * Hp), COMPUTE_DTYPE),    # single resident copy of Wh
                pltpu.SemaphoreType.DMA(()),
            ],
        ),
        compiler_params=pltpu.CompilerParams(
            dimension_semantics=("parallel", "arbitrary"),   # batch parallel, time sequential
            vmem_limit_bytes=VMEM_LIMIT_BYTES,
        ),
    )(xw, wh_f)

    # --- Lane-dense vocab projection over all Tp*Bp rows (tiles up to 512x512). ---
    h_flat = h_states.reshape(Tp * Bp, Hp)                   # bf16
    logits = _matmul_bias(h_flat, wout, bout, out_dtype=jnp.float32)
    logits = logits[:Tp * Bp, :Vocab].reshape(Tp, Bp, Vocab)[:T, :B, :]
    return logits


# ---------------------------------------------------------------------------
# Pure-JAX reference (mirrors the PyTorch module exactly, f32)
# ---------------------------------------------------------------------------

def reference_forward(tokens, emb_table, wx, wh, b, wout, bout):
    dot = functools.partial(jnp.dot, precision=lax.Precision.HIGHEST)
    embeds = emb_table[tokens]                  # (T, B, E)
    T, B, E = embeds.shape
    H = wh.shape[-1]

    h0 = jnp.zeros((B, H), jnp.float32)
    c0 = jnp.ones((B, H), jnp.float32)

    def step(carry, x):
        h, c = carry
        g = jnp.tanh(dot(x, wx[0]) + dot(h, wh[0]) + b[0])
        i = jax.nn.sigmoid(dot(x, wx[1]) + dot(h, wh[1]) + b[1])
        f = jax.nn.sigmoid(dot(x, wx[2]) + dot(h, wh[2]) + b[2])
        o = jax.nn.sigmoid(dot(x, wx[3]) + dot(h, wh[3]) + b[3])
        c = g * i + c * f
        h = jnp.tanh(c) * o
        return (h, c), h

    _, hs = lax.scan(step, (h0, c0), embeds)    # (T, B, H)
    return dot(hs, wout) + bout


def init_params(key, vocab_size, embed_dim, hidden_dim):
    """Deterministic parameter init mirroring the PyTorch module's __init__."""
    keys = jax.random.split(key, 12)
    r = 1.0 / math.sqrt(hidden_dim)

    def u(k, shape, bound):
        return jax.random.uniform(k, shape, jnp.float32, -bound, bound)

    # Gate order: g, i, f, o (stacked along leading axis).
    wx = jnp.stack([u(keys[0], (embed_dim, hidden_dim), r),
                    u(keys[1], (embed_dim, hidden_dim), r),
                    u(keys[2], (embed_dim, hidden_dim), r),
                    u(keys[3], (embed_dim, hidden_dim), r)])
    wh = jnp.stack([u(keys[4], (hidden_dim, hidden_dim), r),
                    u(keys[5], (hidden_dim, hidden_dim), r),
                    u(keys[6], (hidden_dim, hidden_dim), r),
                    u(keys[7], (hidden_dim, hidden_dim), r)])
    # Biases are NOT uniform-initialized (shape[0] == 1): bg = bi = bo = 0, bf = 1.
    b = jnp.stack([jnp.zeros((1, hidden_dim), jnp.float32),
                   jnp.zeros((1, hidden_dim), jnp.float32),
                   jnp.ones((1, hidden_dim), jnp.float32),
                   jnp.zeros((1, hidden_dim), jnp.float32)])

    rl = 1.0 / math.sqrt(hidden_dim)
    wout = u(keys[8], (hidden_dim, vocab_size), rl)   # stored as (in, out)
    bout = u(keys[9], (1, vocab_size), rl)

    emb_table = jax.random.normal(keys[10], (vocab_size, embed_dim), jnp.float32)

    return emb_table, wx, wh, b, wout, bout


if __name__ == "__main__":
    # Small shapes consistent with the module's forward.
    T, B = 8, 2          # sequence length, batch size
    vocab_size = 16
    embed_dim = 32
    hidden_dim = 32

    key = jax.random.PRNGKey(0)
    pkey, tkey = jax.random.split(key)

    emb_table, wx, wh, b, wout, bout = init_params(
        pkey, vocab_size, embed_dim, hidden_dim)

    tokens = jax.random.randint(tkey, (T, B), 0, vocab_size, dtype=jnp.int32)

    y = text_generation_forward(tokens, emb_table, wx, wh, b, wout, bout)
    y = jax.block_until_ready(y)

    y_ref = reference_forward(tokens, emb_table, wx, wh, b, wout, bout)
    y_ref = jax.block_until_ready(y_ref)

    assert y.shape == (T, B, vocab_size)
    # bf16 matmul operands (f32 accumulation) -> tolerance re-baselined vs. the f32 reference.
    max_err = float(jnp.max(jnp.abs(y - y_ref)))
    assert max_err < 5e-2, f"max abs err {max_err}"

    print("KERNEL_OK")
</pallas_src>

<mosaic_0001>
module attributes {stable_mosaic.version = 11 : i64} {
  func.func @matmul_bias_kernel(%arg0: i32, %arg1: i32, %arg2: memref<16x128xbf16, #tpu.memory_space<vmem>>, %arg3: memref<128x512xbf16, #tpu.memory_space<vmem>>, %arg4: memref<1x512xf32, #tpu.memory_space<vmem>>, %arg5: memref<16x512xbf16, #tpu.memory_space<vmem>>) attributes {dimension_semantics = [#tpu.dimension_semantics<parallel>, #tpu.dimension_semantics<parallel>], iteration_bounds = array<i64: 1, 1>, scalar_prefetch = 0 : i64, scratch_operands = 0 : i64, tpu.core_type = #tpu.core_type<tc>, window_params = [{transform_indices = @transform_0, window_bounds = array<i64: 16, 128>}, {transform_indices = @transform_1, window_bounds = array<i64: 128, 512>}, {transform_indices = @transform_2, window_bounds = array<i64: 1, 512>}, {transform_indices = @transform_3, window_bounds = array<i64: 16, 512>}]} {
    %c0 = arith.constant 0 : index
    %c0_0 = arith.constant 0 : index
    %0 = vector.load %arg2[%c0, %c0_0] : memref<16x128xbf16, #tpu.memory_space<vmem>>, vector<16x128xbf16>
    %c0_1 = arith.constant 0 : index
    %c0_2 = arith.constant 0 : index
    %1 = vector.load %arg3[%c0_1, %c0_2] : memref<128x512xbf16, #tpu.memory_space<vmem>>, vector<128x512xbf16>
    %cst = arith.constant dense<0.000000e+00> : vector<16x512xf32>
    %2 = tpu.matmul %0, %1, %cst {dimension_numbers = #tpu.dot_dimension_numbers<[1], [0], [0], [1], [0, 0, 1, 1], [], []>} : vector<16x128xbf16>, vector<128x512xbf16>, vector<16x512xf32> -> vector<16x512xf32>
    %c0_3 = arith.constant 0 : index
    %c0_4 = arith.constant 0 : index
    %3 = vector.load %arg4[%c0_3, %c0_4] : memref<1x512xf32, #tpu.memory_space<vmem>>, vector<1x512xf32>
    %4 = vector.broadcast %3 : vector<1x512xf32> to vector<16x512xf32>
    %5 = arith.addf %2, %4 : vector<16x512xf32>
    %6 = arith.truncf %5 : vector<16x512xf32> to vector<16x512xbf16>
    %c0_5 = arith.constant 0 : index
    %c0_6 = arith.constant 0 : index
    %7 = vector.load %arg5[%c0_5, %c0_6] : memref<16x512xbf16, #tpu.memory_space<vmem>>, vector<16x512xbf16>
    tpu.vector_store %arg5[%c0_5, %c0_6], %6 {strides = array<i32>} : memref<16x512xbf16, #tpu.memory_space<vmem>>, vector<16x512xbf16>,
    return
  }
  func.func @transform_0(%arg0: i32, %arg1: i32) -> (i32, i32) {
    %c0_i32 = arith.constant 0 : i32
    %c0_i32_0 = arith.constant 0 : i32
    return %arg0, %c0_i32 : i32, i32
  }
  func.func @transform_1(%arg0: i32, %arg1: i32) -> (i32, i32) {
    %c0_i32 = arith.constant 0 : i32
    %c0_i32_0 = arith.constant 0 : i32
    return %c0_i32, %arg1 : i32, i32
  }
  func.func @transform_2(%arg0: i32, %arg1: i32) -> (i32, i32) {
    %c0_i32 = arith.constant 0 : i32
    %c0_i32_0 = arith.constant 0 : i32
    return %c0_i32, %arg1 : i32, i32
  }
  func.func @transform_3(%arg0: i32, %arg1: i32) -> (i32, i32) {
    %c0_i32 = arith.constant 0 : i32
    return %arg0, %arg1 : i32, i32
  }
}

module attributes {stable_mosaic.version = 11 : i64} {
  func.func @lstm_recurrent_kernel(%arg0: i32, %arg1: i32, %arg2: memref<8x8x512xbf16, #tpu.memory_space<vmem>>, %arg3: memref<128x512xbf16, #tpu.memory_space<any>>, %arg4: memref<8x8x128xbf16, #tpu.memory_space<vmem>>, %arg5: memref<8x128xf32, #tpu.memory_space<vmem>>, %arg6: memref<8x128xf32, #tpu.memory_space<vmem>>, %arg7: memref<128x512xbf16, #tpu.memory_space<vmem>>, %arg8: memref<!tpu.dma_semaphore, #tpu.memory_space<semaphore_mem>>) attributes {dimension_semantics = [#tpu.dimension_semantics<parallel>, #tpu.dimension_semantics<arbitrary>], iteration_bounds = array<i64: 1, 1>, scalar_prefetch = 0 : i64, scratch_operands = 4 : i64, tpu.core_type = #tpu.core_type<tc>, window_params = [{transform_indices = @transform_0, window_bounds = array<i64: 8, 8, 512>}, {}, {transform_indices = @transform_2, window_bounds = array<i64: 8, 8, 128>}]} {
    %c0_i32 = arith.constant 0 : i32
    %0 = arith.cmpi eq, %arg1, %c0_i32 : i32
    %1 = arith.extui %0 : i1 to i32
    %c0_i32_0 = arith.constant 0 : i32
    %2 = arith.cmpi ne, %1, %c0_i32_0 : i32
    scf.if %2 {
      tpu.enqueue_dma source(%arg3 : memref<128x512xbf16, #tpu.memory_space<any>>) target(%arg7 : memref<128x512xbf16, #tpu.memory_space<vmem>>) target_semaphore(%arg8 : memref<!tpu.dma_semaphore, #tpu.memory_space<semaphore_mem>>)
      tpu.wait_dma2 semaphore(%arg8 : memref<!tpu.dma_semaphore, #tpu.memory_space<semaphore_mem>>) src(%arg3 : memref<128x512xbf16, #tpu.memory_space<any>>) dst(%arg7 : memref<128x512xbf16, #tpu.memory_space<vmem>>)
      %cst_136 = arith.constant 0.000000e+00 : f32
      %359 = vector.broadcast %cst_136 : f32 to vector<8x128xf32>
      %c0_137 = arith.constant 0 : index
      %c0_138 = arith.constant 0 : index
      %360 = vector.load %arg5[%c0_137, %c0_138] : memref<8x128xf32, #tpu.memory_space<vmem>>, vector<8x128xf32>
      tpu.vector_store %arg5[%c0_137, %c0_138], %359 {strides = array<i32>} : memref<8x128xf32, #tpu.memory_space<vmem>>, vector<8x128xf32>,
      %361 = tpu.iota {dimensions = array<i32: 1>} : vector<8x128xi32>
      %c32_i32 = arith.constant 32 : i32
      %362 = vector.broadcast %c32_i32 : i32 to vector<8x128xi32>
      %363 = arith.cmpi slt, %361, %362 : vector<8x128xi32>
      %cst_139 = arith.constant 1.000000e+00 : f32
      %cst_140 = arith.constant 0.000000e+00 : f32
      %364 = vector.broadcast %cst_139 : f32 to vector<8x128xf32>
      %365 = vector.broadcast %cst_140 : f32 to vector<8x128xf32>
      %366 = arith.select %363, %364, %365 : vector<8x128xi1>, vector<8x128xf32>
      %c0_141 = arith.constant 0 : index
      %c0_142 = arith.constant 0 : index
      %367 = vector.load %arg6[%c0_141, %c0_142] : memref<8x128xf32, #tpu.memory_space<vmem>>, vector<8x128xf32>
      tpu.vector_store %arg6[%c0_141, %c0_142], %366 {strides = array<i32>} : memref<8x128xf32, #tpu.memory_space<vmem>>, vector<8x128xf32>,
    } else {
    }
    %c0 = arith.constant 0 : index
    %c0_1 = arith.constant 0 : index
    %3 = vector.load %arg5[%c0, %c0_1] : memref<8x128xf32, #tpu.memory_space<vmem>>, vector<8x128xf32>
    %c0_2 = arith.constant 0 : index
    %c0_3 = arith.constant 0 : index
    %4 = vector.load %arg6[%c0_2, %c0_3] : memref<8x128xf32, #tpu.memory_space<vmem>>, vector<8x128xf32>
    %c0_i32_4 = arith.constant 0 : i32
    %5 = arith.index_cast %c0_i32_4 : i32 to index
    %c0_5 = arith.constant 0 : index
    %c0_6 = arith.constant 0 : index
    %6 = vector.load %arg2[%5, %c0_5, %c0_6] : memref<8x8x512xbf16, #tpu.memory_space<vmem>>, vector<1x8x512xbf16>
    %7 = vector.shape_cast %6 : vector<1x8x512xbf16> to vector<8x512xbf16>
    %8 = arith.truncf %3 : vector<8x128xf32> to vector<8x128xbf16>
    %c0_7 = arith.constant 0 : index
    %c0_8 = arith.constant 0 : index
    %9 = vector.load %arg7[%c0_7, %c0_8] : memref<128x512xbf16, #tpu.memory_space<vmem>>, vector<128x512xbf16>
    %cst = arith.constant dense<0.000000e+00> : vector<8x512xf32>
    %10 = tpu.matmul %8, %9, %cst {dimension_numbers = #tpu.dot_dimension_numbers<[1], [0], [0], [1], [0, 0, 1, 1], [], []>} : vector<8x128xbf16>, vector<128x512xbf16>, vector<8x512xf32> -> vector<8x512xf32>
    %11 = arith.extf %7 : vector<8x512xbf16> to vector<8x512xf32>
    %12 = arith.addf %11, %10 : vector<8x512xf32>
    %13 = vector.extract_strided_slice %12 {offsets = [0, 0], sizes = [8, 128], strides = [1, 1]} : vector<8x512xf32> to vector<8x128xf32>
    %14 = math.tanh %13 : vector<8x128xf32>
    %15 = vector.extract_strided_slice %12 {offsets = [0, 128], sizes = [8, 128], strides = [1, 1]} : vector<8x512xf32> to vector<8x128xf32>
    %cst_9 = arith.constant 5.000000e-01 : f32
    %16 = vector.broadcast %cst_9 : f32 to vector<8x128xf32>
    %17 = arith.mulf %16, %15 : vector<8x128xf32>
    %18 = math.tanh %17 : vector<8x128xf32>
    %cst_10 = arith.constant 5.000000e-01 : f32
    %19 = vector.broadcast %cst_10 : f32 to vector<8x128xf32>
    %20 = arith.mulf %19, %18 : vector<8x128xf32>
    %cst_11 = arith.constant 5.000000e-01 : f32
    %21 = vector.broadcast %cst_11 : f32 to vector<8x128xf32>
    %22 = arith.addf %20, %21 : vector<8x128xf32>
    %23 = vector.extract_strided_slice %12 {offsets = [0, 256], sizes = [8, 128], strides = [1, 1]} : vector<8x512xf32> to vector<8x128xf32>
    %cst_12 = arith.constant 5.000000e-01 : f32
    %24 = vector.broadcast %cst_12 : f32 to vector<8x128xf32>
    %25 = arith.mulf %24, %23 : vector<8x128xf32>
    %26 = math.tanh %25 : vector<8x128xf32>
    %cst_13 = arith.constant 5.000000e-01 : f32
    %27 = vector.broadcast %cst_13 : f32 to vector<8x128xf32>
    %28 = arith.mulf %27, %26 : vector<8x128xf32>
    %cst_14 = arith.constant 5.000000e-01 : f32
    %29 = vector.broadcast %cst_14 : f32 to vector<8x128xf32>
    %30 = arith.addf %28, %29 : vector<8x128xf32>
    %31 = vector.extract_strided_slice %12 {offsets = [0, 384], sizes = [8, 128], strides = [1, 1]} : vector<8x512xf32> to vector<8x128xf32>
    %cst_15 = arith.constant 5.000000e-01 : f32
    %32 = vector.broadcast %cst_15 : f32 to vector<8x128xf32>
    %33 = arith.mulf %32, %31 : vector<8x128xf32>
    %34 = math.tanh %33 : vector<8x128xf32>
    %cst_16 = arith.constant 5.000000e-01 : f32
    %35 = vector.broadcast %cst_16 : f32 to vector<8x128xf32>
    %36 = arith.mulf %35, %34 : vector<8x128xf32>
    %cst_17 = arith.constant 5.000000e-01 : f32
    %37 = vector.broadcast %cst_17 : f32 to vector<8x128xf32>
    %38 = arith.addf %36, %37 : vector<8x128xf32>
    %39 = arith.mulf %14, %22 : vector<8x128xf32>
    %40 = arith.mulf %4, %30 : vector<8x128xf32>
    %41 = arith.addf %39, %40 : vector<8x128xf32>
    %42 = math.tanh %41 : vector<8x128xf32>
    %43 = arith.mulf %42, %38 : vector<8x128xf32>
    %44 = arith.truncf %43 : vector<8x128xf32> to vector<8x128xbf16>
    %45 = arith.index_cast %c0_i32_4 : i32 to index
    %c0_18 = arith.constant 0 : index
    %c0_19 = arith.constant 0 : index
    %46 = vector.load %arg4[%45, %c0_18, %c0_19] : memref<8x8x128xbf16, #tpu.memory_space<vmem>>, vector<1x8x128xbf16>
    %47 = vector.shape_cast %46 : vector<1x8x128xbf16> to vector<8x128xbf16>
    %48 = vector.shape_cast %44 : vector<8x128xbf16> to vector<1x8x128xbf16>
    tpu.vector_store %arg4[%45, %c0_18, %c0_19], %48 {strides = array<i32>} : memref<8x8x128xbf16, #tpu.memory_space<vmem>>, vector<1x8x128xbf16>,
    %c1_i32 = arith.constant 1 : i32
    %49 = arith.index_cast %c1_i32 : i32 to index
    %c0_20 = arith.constant 0 : index
    %c0_21 = arith.constant 0 : index
    %50 = vector.load %arg2[%49, %c0_20, %c0_21] : memref<8x8x512xbf16, #tpu.memory_space<vmem>>, vector<1x8x512xbf16>
    %51 = vector.shape_cast %50 : vector<1x8x512xbf16> to vector<8x512xbf16>
    %52 = arith.truncf %43 : vector<8x128xf32> to vector<8x128xbf16>
    %c0_22 = arith.constant 0 : index
    %c0_23 = arith.constant 0 : index
    %53 = vector.load %arg7[%c0_22, %c0_23] : memref<128x512xbf16, #tpu.memory_space<vmem>>, vector<128x512xbf16>
    %cst_24 = arith.constant dense<0.000000e+00> : vector<8x512xf32>
    %54 = tpu.matmul %52, %53, %cst_24 {dimension_numbers = #tpu.dot_dimension_numbers<[1], [0], [0], [1], [0, 0, 1, 1], [], []>} : vector<8x128xbf16>, vector<128x512xbf16>, vector<8x512xf32> -> vector<8x512xf32>
    %55 = arith.extf %51 : vector<8x512xbf16> to vector<8x512xf32>
    %56 = arith.addf %55, %54 : vector<8x512xf32>
    %57 = vector.extract_strided_slice %56 {offsets = [0, 0], sizes = [8, 128], strides = [1, 1]} : vector<8x512xf32> to vector<8x128xf32>
    %58 = math.tanh %57 : vector<8x128xf32>
    %59 = vector.extract_strided_slice %56 {offsets = [0, 128], sizes = [8, 128], strides = [1, 1]} : vector<8x512xf32> to vector<8x128xf32>
    %cst_25 = arith.constant 5.000000e-01 : f32
    %60 = vector.broadcast %cst_25 : f32 to vector<8x128xf32>
    %61 = arith.mulf %60, %59 : vector<8x128xf32>
    %62 = math.tanh %61 : vector<8x128xf32>
    %cst_26 = arith.constant 5.000000e-01 : f32
    %63 = vector.broadcast %cst_26 : f32 to vector<8x128xf32>
    %64 = arith.mulf %63, %62 : vector<8x128xf32>
    %cst_27 = arith.constant 5.000000e-01 : f32
    %65 = vector.broadcast %cst_27 : f32 to vector<8x128xf32>
    %66 = arith.addf %64, %65 : vector<8x128xf32>
    %67 = vector.extract_strided_slice %56 {offsets = [0, 256], sizes = [8, 128], strides = [1, 1]} : vector<8x512xf32> to vector<8x128xf32>
    %cst_28 = arith.constant 5.000000e-01 : f32
    %68 = vector.broadcast %cst_28 : f32 to vector<8x128xf32>
    %69 = arith.mulf %68, %67 : vector<8x128xf32>
    %70 = math.tanh %69 : vector<8x128xf32>
    %cst_29 = arith.constant 5.000000e-01 : f32
    %71 = vector.broadcast %cst_29 : f32 to vector<8x128xf32>
    %72 = arith.mulf %71, %70 : vector<8x128xf32>
    %cst_30 = arith.constant 5.000000e-01 : f32
    %73 = vector.broadcast %cst_30 : f32 to vector<8x128xf32>
    %74 = arith.addf %72, %73 : vector<8x128xf32>
    %75 = vector.extract_strided_slice %56 {offsets = [0, 384], sizes = [8, 128], strides = [1, 1]} : vector<8x512xf32> to vector<8x128xf32>
    %cst_31 = arith.constant 5.000000e-01 : f32
    %76 = vector.broadcast %cst_31 : f32 to vector<8x128xf32>
    %77 = arith.mulf %76, %75 : vector<8x128xf32>
    %78 = math.tanh %77 : vector<8x128xf32>
    %cst_32 = arith.constant 5.000000e-01 : f32
    %79 = vector.broadcast %cst_32 : f32 to vector<8x128xf32>
    %80 = arith.mulf %79, %78 : vector<8x128xf32>
    %cst_33 = arith.constant 5.000000e-01 : f32
    %81 = vector.broadcast %cst_33 : f32 to vector<8x128xf32>
    %82 = arith.addf %80, %81 : vector<8x128xf32>
    %83 = arith.mulf %58, %66 : vector<8x128xf32>
    %84 = arith.mulf %41, %74 : vector<8x128xf32>
    %85 = arith.addf %83, %84 : vector<8x128xf32>
    %86 = math.tanh %85 : vector<8x128xf32>
    %87 = arith.mulf %86, %82 : vector<8x128xf32>
    %88 = arith.truncf %87 : vector<8x128xf32> to vector<8x128xbf16>
    %89 = arith.index_cast %c1_i32 : i32 to index
    %c0_34 = arith.constant 0 : index
    %c0_35 = arith.constant 0 : index
    %90 = vector.load %arg4[%89, %c0_34, %c0_35] : memref<8x8x128xbf16, #tpu.memory_space<vmem>>, vector<1x8x128xbf16>
    %91 = vector.shape_cast %90 : vector<1x8x128xbf16> to vector<8x128xbf16>
    %92 = vector.shape_cast %88 : vector<8x128xbf16> to vector<1x8x128xbf16>
    tpu.vector_store %arg4[%89, %c0_34, %c0_35], %92 {strides = array<i32>} : memref<8x8x128xbf16, #tpu.memory_space<vmem>>, vector<1x8x128xbf16>,
    %c2_i32 = arith.constant 2 : i32
    %93 = arith.index_cast %c2_i32 : i32 to index
    %c0_36 = arith.constant 0 : index
    %c0_37 = arith.constant 0 : index
    %94 = vector.load %arg2[%93, %c0_36, %c0_37] : memref<8x8x512xbf16, #tpu.memory_space<vmem>>, vector<1x8x512xbf16>
    %95 = vector.shape_cast %94 : vector<1x8x512xbf16> to vector<8x512xbf16>
    %96 = arith.truncf %87 : vector<8x128xf32> to vector<8x128xbf16>
    %c0_38 = arith.constant 0 : index
    %c0_39 = arith.constant 0 : index
    %97 = vector.load %arg7[%c0_38, %c0_39] : memref<128x512xbf16, #tpu.memory_space<vmem>>, vector<128x512xbf16>
    %cst_40 = arith.constant dense<0.000000e+00> : vector<8x512xf32>
    %98 = tpu.matmul %96, %97, %cst_40 {dimension_numbers = #tpu.dot_dimension_numbers<[1], [0], [0], [1], [0, 0, 1, 1], [], []>} : vector<8x128xbf16>, vector<128x512xbf16>, vector<8x512xf32> -> vector<8x512xf32>
    %99 = arith.extf %95 : vector<8x512xbf16> to vector<8x512xf32>
    %100 = arith.addf %99, %98 : vector<8x512xf32>
    %101 = vector.extract_strided_slice %100 {offsets = [0, 0], sizes = [8, 128], strides = [1, 1]} : vector<8x512xf32> to vector<8x128xf32>
    %102 = math.tanh %101 : vector<8x128xf32>
    %103 = vector.extract_strided_slice %100 {offsets = [0, 128], sizes = [8, 128], strides = [1, 1]} : vector<8x512xf32> to vector<8x128xf32>
    %cst_41 = arith.constant 5.000000e-01 : f32
    %104 = vector.broadcast %cst_41 : f32 to vector<8x128xf32>
    %105 = arith.mulf %104, %103 : vector<8x128xf32>
    %106 = math.tanh %105 : vector<8x128xf32>
    %cst_42 = arith.constant 5.000000e-01 : f32
    %107 = vector.broadcast %cst_42 : f32 to vector<8x128xf32>
    %108 = arith.mulf %107, %106 : vector<8x128xf32>
    %cst_43 = arith.constant 5.000000e-01 : f32
    %109 = vector.broadcast %cst_43 : f32 to vector<8x128xf32>
    %110 = arith.addf %108, %109 : vector<8x128xf32>
    %111 = vector.extract_strided_slice %100 {offsets = [0, 256], sizes = [8, 128], strides = [1, 1]} : vector<8x512xf32> to vector<8x128xf32>
    %cst_44 = arith.constant 5.000000e-01 : f32
    %112 = vector.broadcast %cst_44 : f32 to vector<8x128xf32>
    %113 = arith.mulf %112, %111 : vector<8x128xf32>
    %114 = math.tanh %113 : vector<8x128xf32>
    %cst_45 = arith.constant 5.000000e-01 : f32
    %115 = vector.broadcast %cst_45 : f32 to vector<8x128xf32>
    %116 = arith.mulf %115, %114 : vector<8x128xf32>
    %cst_46 = arith.constant 5.000000e-01 : f32
    %117 = vector.broadcast %cst_46 : f32 to vector<8x128xf32>
    %118 = arith.addf %116, %117 : vector<8x128xf32>
    %119 = vector.extract_strided_slice %100 {offsets = [0, 384], sizes = [8, 128], strides = [1, 1]} : vector<8x512xf32> to vector<8x128xf32>
    %cst_47 = arith.constant 5.000000e-01 : f32
    %120 = vector.broadcast %cst_47 : f32 to vector<8x128xf32>
    %121 = arith.mulf %120, %119 : vector<8x128xf32>
    %122 = math.tanh %121 : vector<8x128xf32>
    %cst_48 = arith.constant 5.000000e-01 : f32
    %123 = vector.broadcast %cst_48 : f32 to vector<8x128xf32>
    %124 = arith.mulf %123, %122 : vector<8x128xf32>
    %cst_49 = arith.constant 5.000000e-01 : f32
    %125 = vector.broadcast %cst_49 : f32 to vector<8x128xf32>
    %126 = arith.addf %124, %125 : vector<8x128xf32>
    %127 = arith.mulf %102, %110 : vector<8x128xf32>
    %128 = arith.mulf %85, %118 : vector<8x128xf32>
    %129 = arith.addf %127, %128 : vector<8x128xf32>
    %130 = math.tanh %129 : vector<8x128xf32>
    %131 = arith.mulf %130, %126 : vector<8x128xf32>
    %132 = arith.truncf %131 : vector<8x128xf32> to vector<8x128xbf16>
    %133 = arith.index_cast %c2_i32 : i32 to index
    %c0_50 = arith.constant 0 : index
    %c0_51 = arith.constant 0 : index
    %134 = vector.load %arg4[%133, %c0_50, %c0_51] : memref<8x8x128xbf16, #tpu.memory_space<vmem>>, vector<1x8x128xbf16>
    %135 = vector.shape_cast %134 : vector<1x8x128xbf16> to vector<8x128xbf16>
    %136 = vector.shape_cast %132 : vector<8x128xbf16> to vector<1x8x128xbf16>
    tpu.vector_store %arg4[%133, %c0_50, %c0_51], %136 {strides = array<i32>} : memref<8x8x128xbf16, #tpu.memory_space<vmem>>, vector<1x8x128xbf16>,
    %c3_i32 = arith.constant 3 : i32
    %137 = arith.index_cast %c3_i32 : i32 to index
    %c0_52 = arith.constant 0 : index
    %c0_53 = arith.constant 0 : index
    %138 = vector.load %arg2[%137, %c0_52, %c0_53] : memref<8x8x512xbf16, #tpu.memory_space<vmem>>, vector<1x8x512xbf16>
    %139 = vector.shape_cast %138 : vector<1x8x512xbf16> to vector<8x512xbf16>
    %140 = arith.truncf %131 : vector<8x128xf32> to vector<8x128xbf16>
    %c0_54 = arith.constant 0 : index
    %c0_55 = arith.constant 0 : index
    %141 = vector.load %arg7[%c0_54, %c0_55] : memref<128x512xbf16, #tpu.memory_space<vmem>>, vector<128x512xbf16>
    %cst_56 = arith.constant dense<0.000000e+00> : vector<8x512xf32>
    %142 = tpu.matmul %140, %141, %cst_56 {dimension_numbers = #tpu.dot_dimension_numbers<[1], [0], [0], [1], [0, 0, 1, 1], [], []>} : vector<8x128xbf16>, vector<128x512xbf16>, vector<8x512xf32> -> vector<8x512xf32>
    %143 = arith.extf %139 : vector<8x512xbf16> to vector<8x512xf32>
    %144 = arith.addf %143, %142 : vector<8x512xf32>
    %145 = vector.extract_strided_slice %144 {offsets = [0, 0], sizes = [8, 128], strides = [1, 1]} : vector<8x512xf32> to vector<8x128xf32>
    %146 = math.tanh %145 : vector<8x128xf32>
    %147 = vector.extract_strided_slice %144 {offsets = [0, 128], sizes = [8, 128], strides = [1, 1]} : vector<8x512xf32> to vector<8x128xf32>
    %cst_57 = arith.constant 5.000000e-01 : f32
    %148 = vector.broadcast %cst_57 : f32 to vector<8x128xf32>
    %149 = arith.mulf %148, %147 : vector<8x128xf32>
    %150 = math.tanh %149 : vector<8x128xf32>
    %cst_58 = arith.constant 5.000000e-01 : f32
    %151 = vector.broadcast %cst_58 : f32 to vector<8x128xf32>
    %152 = arith.mulf %151, %150 : vector<8x128xf32>
    %cst_59 = arith.constant 5.000000e-01 : f32
    %153 = vector.broadcast %cst_59 : f32 to vector<8x128xf32>
    %154 = arith.addf %152, %153 : vector<8x128xf32>
    %155 = vector.extract_strided_slice %144 {offsets = [0, 256], sizes = [8, 128], strides = [1, 1]} : vector<8x512xf32> to vector<8x128xf32>
    %cst_60 = arith.constant 5.000000e-01 : f32
    %156 = vector.broadcast %cst_60 : f32 to vector<8x128xf32>
    %157 = arith.mulf %156, %155 : vector<8x128xf32>
    %158 = math.tanh %157 : vector<8x128xf32>
    %cst_61 = arith.constant 5.000000e-01 : f32
    %159 = vector.broadcast %cst_61 : f32 to vector<8x128xf32>
    %160 = arith.mulf %159, %158 : vector<8x128xf32>
    %cst_62 = arith.constant 5.000000e-01 : f32
    %161 = vector.broadcast %cst_62 : f32 to vector<8x128xf32>
    %162 = arith.addf %160, %161 : vector<8x128xf32>
    %163 = vector.extract_strided_slice %144 {offsets = [0, 384], sizes = [8, 128], strides = [1, 1]} : vector<8x512xf32> to vector<8x128xf32>
    %cst_63 = arith.constant 5.000000e-01 : f32
    %164 = vector.broadcast %cst_63 : f32 to vector<8x128xf32>
    %165 = arith.mulf %164, %163 : vector<8x128xf32>
    %166 = math.tanh %165 : vector<8x128xf32>
    %cst_64 = arith.constant 5.000000e-01 : f32
    %167 = vector.broadcast %cst_64 : f32 to vector<8x128xf32>
    %168 = arith.mulf %167, %166 : vector<8x128xf32>
    %cst_65 = arith.constant 5.000000e-01 : f32
    %169 = vector.broadcast %cst_65 : f32 to vector<8x128xf32>
    %170 = arith.addf %168, %169 : vector<8x128xf32>
    %171 = arith.mulf %146, %154 : vector<8x128xf32>
    %172 = arith.mulf %129, %162 : vector<8x128xf32>
    %173 = arith.addf %171, %172 : vector<8x128xf32>
    %174 = math.tanh %173 : vector<8x128xf32>
    %175 = arith.mulf %174, %170 : vector<8x128xf32>
    %176 = arith.truncf %175 : vector<8x128xf32> to vector<8x128xbf16>
    %177 = arith.index_cast %c3_i32 : i32 to index
    %c0_66 = arith.constant 0 : index
    %c0_67 = arith.constant 0 : index
    %178 = vector.load %arg4[%177, %c0_66, %c0_67] : memref<8x8x128xbf16, #tpu.memory_space<vmem>>, vector<1x8x128xbf16>
    %179 = vector.shape_cast %178 : vector<1x8x128xbf16> to vector<8x128xbf16>
    %180 = vector.shape_cast %176 : vector<8x128xbf16> to vector<1x8x128xbf16>
    tpu.vector_store %arg4[%177, %c0_66, %c0_67], %180 {strides = array<i32>} : memref<8x8x128xbf16, #tpu.memory_space<vmem>>, vector<1x8x128xbf16>,
    %c4_i32 = arith.constant 4 : i32
    %181 = arith.index_cast %c4_i32 : i32 to index
    %c0_68 = arith.constant 0 : index
    %c0_69 = arith.constant 0 : index
    %182 = vector.load %arg2[%181, %c0_68, %c0_69] : memref<8x8x512xbf16, #tpu.memory_space<vmem>>, vector<1x8x512xbf16>
    %183 = vector.shape_cast %182 : vector<1x8x512xbf16> to vector<8x512xbf16>
    %184 = arith.truncf %175 : vector<8x128xf32> to vector<8x128xbf16>
    %c0_70 = arith.constant 0 : index
    %c0_71 = arith.constant 0 : index
    %185 = vector.load %arg7[%c0_70, %c0_71] : memref<128x512xbf16, #tpu.memory_space<vmem>>, vector<128x512xbf16>
    %cst_72 = arith.constant dense<0.000000e+00> : vector<8x512xf32>
    %186 = tpu.matmul %184, %185, %cst_72 {dimension_numbers = #tpu.dot_dimension_numbers<[1], [0], [0], [1], [0, 0, 1, 1], [], []>} : vector<8x128xbf16>, vector<128x512xbf16>, vector<8x512xf32> -> vector<8x512xf32>
    %187 = arith.extf %183 : vector<8x512xbf16> to vector<8x512xf32>
    %188 = arith.addf %187, %186 : vector<8x512xf32>
    %189 = vector.extract_strided_slice %188 {offsets = [0, 0], sizes = [8, 128], strides = [1, 1]} : vector<8x512xf32> to vector<8x128xf32>
    %190 = math.tanh %189 : vector<8x128xf32>
    %191 = vector.extract_strided_slice %188 {offsets = [0, 128], sizes = [8, 128], strides = [1, 1]} : vector<8x512xf32> to vector<8x128xf32>
    %cst_73 = arith.constant 5.000000e-01 : f32
    %192 = vector.broadcast %cst_73 : f32 to vector<8x128xf32>
    %193 = arith.mulf %192, %191 : vector<8x128xf32>
    %194 = math.tanh %193 : vector<8x128xf32>
    %cst_74 = arith.constant 5.000000e-01 : f32
    %195 = vector.broadcast %cst_74 : f32 to vector<8x128xf32>
    %196 = arith.mulf %195, %194 : vector<8x128xf32>
    %cst_75 = arith.constant 5.000000e-01 : f32
    %197 = vector.broadcast %cst_75 : f32 to vector<8x128xf32>
    %198 = arith.addf %196, %197 : vector<8x128xf32>
    %199 = vector.extract_strided_slice %188 {offsets = [0, 256], sizes = [8, 128], strides = [1, 1]} : vector<8x512xf32> to vector<8x128xf32>
    %cst_76 = arith.constant 5.000000e-01 : f32
    %200 = vector.broadcast %cst_76 : f32 to vector<8x128xf32>
    %201 = arith.mulf %200, %199 : vector<8x128xf32>
    %202 = math.tanh %201 : vector<8x128xf32>
    %cst_77 = arith.constant 5.000000e-01 : f32
    %203 = vector.broadcast %cst_77 : f32 to vector<8x128xf32>
    %204 = arith.mulf %203, %202 : vector<8x128xf32>
    %cst_78 = arith.constant 5.000000e-01 : f32
    %205 = vector.broadcast %cst_78 : f32 to vector<8x128xf32>
    %206 = arith.addf %204, %205 : vector<8x128xf32>
    %207 = vector.extract_strided_slice %188 {offsets = [0, 384], sizes = [8, 128], strides = [1, 1]} : vector<8x512xf32> to vector<8x128xf32>
    %cst_79 = arith.constant 5.000000e-01 : f32
    %208 = vector.broadcast %cst_79 : f32 to vector<8x128xf32>
    %209 = arith.mulf %208, %207 : vector<8x128xf32>
    %210 = math.tanh %209 : vector<8x128xf32>
    %cst_80 = arith.constant 5.000000e-01 : f32
    %211 = vector.broadcast %cst_80 : f32 to vector<8x128xf32>
    %212 = arith.mulf %211, %210 : vector<8x128xf32>
    %cst_81 = arith.constant 5.000000e-01 : f32
    %213 = vector.broadcast %cst_81 : f32 to vector<8x128xf32>
    %214 = arith.addf %212, %213 : vector<8x128xf32>
    %215 = arith.mulf %190, %198 : vector<8x128xf32>
    %216 = arith.mulf %173, %206 : vector<8x128xf32>
    %217 = arith.addf %215, %216 : vector<8x128xf32>
    %218 = math.tanh %217 : vector<8x128xf32>
    %219 = arith.mulf %218, %214 : vector<8x128xf32>
    %220 = arith.truncf %219 : vector<8x128xf32> to vector<8x128xbf16>
    %221 = arith.index_cast %c4_i32 : i32 to index
    %c0_82 = arith.constant 0 : index
    %c0_83 = arith.constant 0 : index
    %222 = vector.load %arg4[%221, %c0_82, %c0_83] : memref<8x8x128xbf16, #tpu.memory_space<vmem>>, vector<1x8x128xbf16>
    %223 = vector.shape_cast %222 : vector<1x8x128xbf16> to vector<8x128xbf16>
    %224 = vector.shape_cast %220 : vector<8x128xbf16> to vector<1x8x128xbf16>
    tpu.vector_store %arg4[%221, %c0_82, %c0_83], %224 {strides = array<i32>} : memref<8x8x128xbf16, #tpu.memory_space<vmem>>, vector<1x8x128xbf16>,
    %c5_i32 = arith.constant 5 : i32
    %225 = arith.index_cast %c5_i32 : i32 to index
    %c0_84 = arith.constant 0 : index
    %c0_85 = arith.constant 0 : index
    %226 = vector.load %arg2[%225, %c0_84, %c0_85] : memref<8x8x512xbf16, #tpu.memory_space<vmem>>, vector<1x8x512xbf16>
    %227 = vector.shape_cast %226 : vector<1x8x512xbf16> to vector<8x512xbf16>
    %228 = arith.truncf %219 : vector<8x128xf32> to vector<8x128xbf16>
    %c0_86 = arith.constant 0 : index
    %c0_87 = arith.constant 0 : index
    %229 = vector.load %arg7[%c0_86, %c0_87] : memref<128x512xbf16, #tpu.memory_space<vmem>>, vector<128x512xbf16>
    %cst_88 = arith.constant dense<0.000000e+00> : vector<8x512xf32>
    %230 = tpu.matmul %228, %229, %cst_88 {dimension_numbers = #tpu.dot_dimension_numbers<[1], [0], [0], [1], [0, 0, 1, 1], [], []>} : vector<8x128xbf16>, vector<128x512xbf16>, vector<8x512xf32> -> vector<8x512xf32>
    %231 = arith.extf %227 : vector<8x512xbf16> to vector<8x512xf32>
    %232 = arith.addf %231, %230 : vector<8x512xf32>
    %233 = vector.extract_strided_slice %232 {offsets = [0, 0], sizes = [8, 128], strides = [1, 1]} : vector<8x512xf32> to vector<8x128xf32>
    %234 = math.tanh %233 : vector<8x128xf32>
    %235 = vector.extract_strided_slice %232 {offsets = [0, 128], sizes = [8, 128], strides = [1, 1]} : vector<8x512xf32> to vector<8x128xf32>
    %cst_89 = arith.constant 5.000000e-01 : f32
    %236 = vector.broadcast %cst_89 : f32 to vector<8x128xf32>
    %237 = arith.mulf %236, %235 : vector<8x128xf32>
    %238 = math.tanh %237 : vector<8x128xf32>
    %cst_90 = arith.constant 5.000000e-01 : f32
    %239 = vector.broadcast %cst_90 : f32 to vector<8x128xf32>
    %240 = arith.mulf %239, %238 : vector<8x128xf32>
    %cst_91 = arith.constant 5.000000e-01 : f32
    %241 = vector.broadcast %cst_91 : f32 to vector<8x128xf32>
    %242 = arith.addf %240, %241 : vector<8x128xf32>
    %243 = vector.extract_strided_slice %232 {offsets = [0, 256], sizes = [8, 128], strides = [1, 1]} : vector<8x512xf32> to vector<8x128xf32>
    %cst_92 = arith.constant 5.000000e-01 : f32
    %244 = vector.broadcast %cst_92 : f32 to vector<8x128xf32>
    %245 = arith.mulf %244, %243 : vector<8x128xf32>
    %246 = math.tanh %245 : vector<8x128xf32>
    %cst_93 = arith.constant 5.000000e-01 : f32
    %247 = vector.broadcast %cst_93 : f32 to vector<8x128xf32>
    %248 = arith.mulf %247, %246 : vector<8x128xf32>
    %cst_94 = arith.constant 5.000000e-01 : f32
    %249 = vector.broadcast %cst_94 : f32 to vector<8x128xf32>
    %250 = arith.addf %248, %249 : vector<8x128xf32>
    %251 = vector.extract_strided_slice %232 {offsets = [0, 384], sizes = [8, 128], strides = [1, 1]} : vector<8x512xf32> to vector<8x128xf32>
    %cst_95 = arith.constant 5.000000e-01 : f32
    %252 = vector.broadcast %cst_95 : f32 to vector<8x128xf32>
    %253 = arith.mulf %252, %251 : vector<8x128xf32>
    %254 = math.tanh %253 : vector<8x128xf32>
    %cst_96 = arith.constant 5.000000e-01 : f32
    %255 = vector.broadcast %cst_96 : f32 to vector<8x128xf32>
    %256 = arith.mulf %255, %254 : vector<8x128xf32>
    %cst_97 = arith.constant 5.000000e-01 : f32
    %257 = vector.broadcast %cst_97 : f32 to vector<8x128xf32>
    %258 = arith.addf %256, %257 : vector<8x128xf32>
    %259 = arith.mulf %234, %242 : vector<8x128xf32>
    %260 = arith.mulf %217, %250 : vector<8x128xf32>
    %261 = arith.addf %259, %260 : vector<8x128xf32>
    %262 = math.tanh %261 : vector<8x128xf32>
    %263 = arith.mulf %262, %258 : vector<8x128xf32>
    %264 = arith.truncf %263 : vector<8x128xf32> to vector<8x128xbf16>
    %265 = arith.index_cast %c5_i32 : i32 to index
    %c0_98 = arith.constant 0 : index
    %c0_99 = arith.constant 0 : index
    %266 = vector.load %arg4[%265, %c0_98, %c0_99] : memref<8x8x128xbf16, #tpu.memory_space<vmem>>, vector<1x8x128xbf16>
    %267 = vector.shape_cast %266 : vector<1x8x128xbf16> to vector<8x128xbf16>
    %268 = vector.shape_cast %264 : vector<8x128xbf16> to vector<1x8x128xbf16>
    tpu.vector_store %arg4[%265, %c0_98, %c0_99], %268 {strides = array<i32>} : memref<8x8x128xbf16, #tpu.memory_space<vmem>>, vector<1x8x128xbf16>,
    %c6_i32 = arith.constant 6 : i32
    %269 = arith.index_cast %c6_i32 : i32 to index
    %c0_100 = arith.constant 0 : index
    %c0_101 = arith.constant 0 : index
    %270 = vector.load %arg2[%269, %c0_100, %c0_101] : memref<8x8x512xbf16, #tpu.memory_space<vmem>>, vector<1x8x512xbf16>
    %271 = vector.shape_cast %270 : vector<1x8x512xbf16> to vector<8x512xbf16>
    %272 = arith.truncf %263 : vector<8x128xf32> to vector<8x128xbf16>
    %c0_102 = arith.constant 0 : index
    %c0_103 = arith.constant 0 : index
    %273 = vector.load %arg7[%c0_102, %c0_103] : memref<128x512xbf16, #tpu.memory_space<vmem>>, vector<128x512xbf16>
    %cst_104 = arith.constant dense<0.000000e+00> : vector<8x512xf32>
    %274 = tpu.matmul %272, %273, %cst_104 {dimension_numbers = #tpu.dot_dimension_numbers<[1], [0], [0], [1], [0, 0, 1, 1], [], []>} : vector<8x128xbf16>, vector<128x512xbf16>, vector<8x512xf32> -> vector<8x512xf32>
    %275 = arith.extf %271 : vector<8x512xbf16> to vector<8x512xf32>
    %276 = arith.addf %275, %274 : vector<8x512xf32>
    %277 = vector.extract_strided_slice %276 {offsets = [0, 0], sizes = [8, 128], strides = [1, 1]} : vector<8x512xf32> to vector<8x128xf32>
    %278 = math.tanh %277 : vector<8x128xf32>
    %279 = vector.extract_strided_slice %276 {offsets = [0, 128], sizes = [8, 128], strides = [1, 1]} : vector<8x512xf32> to vector<8x128xf32>
    %cst_105 = arith.constant 5.000000e-01 : f32
    %280 = vector.broadcast %cst_105 : f32 to vector<8x128xf32>
    %281 = arith.mulf %280, %279 : vector<8x128xf32>
    %282 = math.tanh %281 : vector<8x128xf32>
    %cst_106 = arith.constant 5.000000e-01 : f32
    %283 = vector.broadcast %cst_106 : f32 to vector<8x128xf32>
    %284 = arith.mulf %283, %282 : vector<8x128xf32>
    %cst_107 = arith.constant 5.000000e-01 : f32
    %285 = vector.broadcast %cst_107 : f32 to vector<8x128xf32>
    %286 = arith.addf %284, %285 : vector<8x128xf32>
    %287 = vector.extract_strided_slice %276 {offsets = [0, 256], sizes = [8, 128], strides = [1, 1]} : vector<8x512xf32> to vector<8x128xf32>
    %cst_108 = arith.constant 5.000000e-01 : f32
    %288 = vector.broadcast %cst_108 : f32 to vector<8x128xf32>
    %289 = arith.mulf %288, %287 : vector<8x128xf32>
    %290 = math.tanh %289 : vector<8x128xf32>
    %cst_109 = arith.constant 5.000000e-01 : f32
    %291 = vector.broadcast %cst_109 : f32 to vector<8x128xf32>
    %292 = arith.mulf %291, %290 : vector<8x128xf32>
    %cst_110 = arith.constant 5.000000e-01 : f32
    %293 = vector.broadcast %cst_110 : f32 to vector<8x128xf32>
    %294 = arith.addf %292, %293 : vector<8x128xf32>
    %295 = vector.extract_strided_slice %276 {offsets = [0, 384], sizes = [8, 128], strides = [1, 1]} : vector<8x512xf32> to vector<8x128xf32>
    %cst_111 = arith.constant 5.000000e-01 : f32
    %296 = vector.broadcast %cst_111 : f32 to vector<8x128xf32>
    %297 = arith.mulf %296, %295 : vector<8x128xf32>
    %298 = math.tanh %297 : vector<8x128xf32>
    %cst_112 = arith.constant 5.000000e-01 : f32
    %299 = vector.broadcast %cst_112 : f32 to vector<8x128xf32>
    %300 = arith.mulf %299, %298 : vector<8x128xf32>
    %cst_113 = arith.constant 5.000000e-01 : f32
    %301 = vector.broadcast %cst_113 : f32 to vector<8x128xf32>
    %302 = arith.addf %300, %301 : vector<8x128xf32>
    %303 = arith.mulf %278, %286 : vector<8x128xf32>
    %304 = arith.mulf %261, %294 : vector<8x128xf32>
    %305 = arith.addf %303, %304 : vector<8x128xf32>
    %306 = math.tanh %305 : vector<8x128xf32>
    %307 = arith.mulf %306, %302 : vector<8x128xf32>
    %308 = arith.truncf %307 : vector<8x128xf32> to vector<8x128xbf16>
    %309 = arith.index_cast %c6_i32 : i32 to index
    %c0_114 = arith.constant 0 : index
    %c0_115 = arith.constant 0 : index
    %310 = vector.load %arg4[%309, %c0_114, %c0_115] : memref<8x8x128xbf16, #tpu.memory_space<vmem>>, vector<1x8x128xbf16>
    %311 = vector.shape_cast %310 : vector<1x8x128xbf16> to vector<8x128xbf16>
    %312 = vector.shape_cast %308 : vector<8x128xbf16> to vector<1x8x128xbf16>
    tpu.vector_store %arg4[%309, %c0_114, %c0_115], %312 {strides = array<i32>} : memref<8x8x128xbf16, #tpu.memory_space<vmem>>, vector<1x8x128xbf16>,
    %c7_i32 = arith.constant 7 : i32
    %313 = arith.index_cast %c7_i32 : i32 to index
    %c0_116 = arith.constant 0 : index
    %c0_117 = arith.constant 0 : index
    %314 = vector.load %arg2[%313, %c0_116, %c0_117] : memref<8x8x512xbf16, #tpu.memory_space<vmem>>, vector<1x8x512xbf16>
    %315 = vector.shape_cast %314 : vector<1x8x512xbf16> to vector<8x512xbf16>
    %316 = arith.truncf %307 : vector<8x128xf32> to vector<8x128xbf16>
    %c0_118 = arith.constant 0 : index
    %c0_119 = arith.constant 0 : index
    %317 = vector.load %arg7[%c0_118, %c0_119] : memref<128x512xbf16, #tpu.memory_space<vmem>>, vector<128x512xbf16>
    %cst_120 = arith.constant dense<0.000000e+00> : vector<8x512xf32>
    %318 = tpu.matmul %316, %317, %cst_120 {dimension_numbers = #tpu.dot_dimension_numbers<[1], [0], [0], [1], [0, 0, 1, 1], [], []>} : vector<8x128xbf16>, vector<128x512xbf16>, vector<8x512xf32> -> vector<8x512xf32>
    %319 = arith.extf %315 : vector<8x512xbf16> to vector<8x512xf32>
    %320 = arith.addf %319, %318 : vector<8x512xf32>
    %321 = vector.extract_strided_slice %320 {offsets = [0, 0], sizes = [8, 128], strides = [1, 1]} : vector<8x512xf32> to vector<8x128xf32>
    %322 = math.tanh %321 : vector<8x128xf32>
    %323 = vector.extract_strided_slice %320 {offsets = [0, 128], sizes = [8, 128], strides = [1, 1]} : vector<8x512xf32> to vector<8x128xf32>
    %cst_121 = arith.constant 5.000000e-01 : f32
    %324 = vector.broadcast %cst_121 : f32 to vector<8x128xf32>
    %325 = arith.mulf %324, %323 : vector<8x128xf32>
    %326 = math.tanh %325 : vector<8x128xf32>
    %cst_122 = arith.constant 5.000000e-01 : f32
    %327 = vector.broadcast %cst_122 : f32 to vector<8x128xf32>
    %328 = arith.mulf %327, %326 : vector<8x128xf32>
    %cst_123 = arith.constant 5.000000e-01 : f32
    %329 = vector.broadcast %cst_123 : f32 to vector<8x128xf32>
    %330 = arith.addf %328, %329 : vector<8x128xf32>
    %331 = vector.extract_strided_slice %320 {offsets = [0, 256], sizes = [8, 128], strides = [1, 1]} : vector<8x512xf32> to vector<8x128xf32>
    %cst_124 = arith.constant 5.000000e-01 : f32
    %332 = vector.broadcast %cst_124 : f32 to vector<8x128xf32>
    %333 = arith.mulf %332, %331 : vector<8x128xf32>
    %334 = math.tanh %333 : vector<8x128xf32>
    %cst_125 = arith.constant 5.000000e-01 : f32
    %335 = vector.broadcast %cst_125 : f32 to vector<8x128xf32>
    %336 = arith.mulf %335, %334 : vector<8x128xf32>
    %cst_126 = arith.constant 5.000000e-01 : f32
    %337 = vector.broadcast %cst_126 : f32 to vector<8x128xf32>
    %338 = arith.addf %336, %337 : vector<8x128xf32>
    %339 = vector.extract_strided_slice %320 {offsets = [0, 384], sizes = [8, 128], strides = [1, 1]} : vector<8x512xf32> to vector<8x128xf32>
    %cst_127 = arith.constant 5.000000e-01 : f32
    %340 = vector.broadcast %cst_127 : f32 to vector<8x128xf32>
    %341 = arith.mulf %340, %339 : vector<8x128xf32>
    %342 = math.tanh %341 : vector<8x128xf32>
    %cst_128 = arith.constant 5.000000e-01 : f32
    %343 = vector.broadcast %cst_128 : f32 to vector<8x128xf32>
    %344 = arith.mulf %343, %342 : vector<8x128xf32>
    %cst_129 = arith.constant 5.000000e-01 : f32
    %345 = vector.broadcast %cst_129 : f32 to vector<8x128xf32>
    %346 = arith.addf %344, %345 : vector<8x128xf32>
    %347 = arith.mulf %322, %330 : vector<8x128xf32>
    %348 = arith.mulf %305, %338 : vector<8x128xf32>
    %349 = arith.addf %347, %348 : vector<8x128xf32>
    %350 = math.tanh %349 : vector<8x128xf32>
    %351 = arith.mulf %350, %346 : vector<8x128xf32>
    %352 = arith.truncf %351 : vector<8x128xf32> to vector<8x128xbf16>
    %353 = arith.index_cast %c7_i32 : i32 to index
    %c0_130 = arith.constant 0 : index
    %c0_131 = arith.constant 0 : index
    %354 = vector.load %arg4[%353, %c0_130, %c0_131] : memref<8x8x128xbf16, #tpu.memory_space<vmem>>, vector<1x8x128xbf16>
    %355 = vector.shape_cast %354 : vector<1x8x128xbf16> to vector<8x128xbf16>
    %356 = vector.shape_cast %352 : vector<8x128xbf16> to vector<1x8x128xbf16>
    tpu.vector_store %arg4[%353, %c0_130, %c0_131], %356 {strides = array<i32>} : memref<8x8x128xbf16, #tpu.memory_space<vmem>>, vector<1x8x128xbf16>,
    %c8_i32 = arith.constant 8 : i32
    %c0_132 = arith.constant 0 : index
    %c0_133 = arith.constant 0 : index
    %357 = vector.load %arg5[%c0_132, %c0_133] : memref<8x128xf32, #tpu.memory_space<vmem>>, vector<8x128xf32>
    tpu.vector_store %arg5[%c0_132, %c0_133], %351 {strides = array<i32>} : memref<8x128xf32, #tpu.memory_space<vmem>>, vector<8x128xf32>,
    %c0_134 = arith.constant 0 : index
    %c0_135 = arith.constant 0 : index
    %358 = vector.load %arg6[%c0_134, %c0_135] : memref<8x128xf32, #tpu.memory_space<vmem>>, vector<8x128xf32>
    tpu.vector_store %arg6[%c0_134, %c0_135], %349 {strides = array<i32>} : memref<8x128xf32, #tpu.memory_space<vmem>>, vector<8x128xf32>,
    return
  }
  func.func @transform_0(%arg0: i32, %arg1: i32) -> (i32, i32, i32) {
    %c0_i32 = arith.constant 0 : i32
    %c0_i32_0 = arith.constant 0 : i32
    return %arg1, %arg0, %c0_i32 : i32, i32, i32
  }
  func.func @transform_2(%arg0: i32, %arg1: i32) -> (i32, i32, i32) {
    %c0_i32 = arith.constant 0 : i32
    %c0_i32_0 = arith.constant 0 : i32
    return %arg1, %arg0, %c0_i32 : i32, i32, i32
  }
}

module attributes {stable_mosaic.version = 11 : i64} {
  func.func @matmul_bias_kernel(%arg0: i32, %arg1: i32, %arg2: memref<64x128xbf16, #tpu.memory_space<vmem>>, %arg3: memref<128x128xbf16, #tpu.memory_space<vmem>>, %arg4: memref<1x128xf32, #tpu.memory_space<vmem>>, %arg5: memref<64x128xf32, #tpu.memory_space<vmem>>) attributes {dimension_semantics = [#tpu.dimension_semantics<parallel>, #tpu.dimension_semantics<parallel>], iteration_bounds = array<i64: 1, 1>, scalar_prefetch = 0 : i64, scratch_operands = 0 : i64, tpu.core_type = #tpu.core_type<tc>, window_params = [{transform_indices = @transform_0, window_bounds = array<i64: 64, 128>}, {transform_indices = @transform_1, window_bounds = array<i64: 128, 128>}, {transform_indices = @transform_2, window_bounds = array<i64: 1, 128>}, {transform_indices = @transform_3, window_bounds = array<i64: 64, 128>}]} {
    %c0 = arith.constant 0 : index
    %c0_0 = arith.constant 0 : index
    %0 = vector.load %arg2[%c0, %c0_0] : memref<64x128xbf16, #tpu.memory_space<vmem>>, vector<64x128xbf16>
    %c0_1 = arith.constant 0 : index
    %c0_2 = arith.constant 0 : index
    %1 = vector.load %arg3[%c0_1, %c0_2] : memref<128x128xbf16, #tpu.memory_space<vmem>>, vector<128x128xbf16>
    %cst = arith.constant dense<0.000000e+00> : vector<64x128xf32>
    %2 = tpu.matmul %0, %1, %cst {dimension_numbers = #tpu.dot_dimension_numbers<[1], [0], [0], [1], [0, 0, 1, 1], [], []>} : vector<64x128xbf16>, vector<128x128xbf16>, vector<64x128xf32> -> vector<64x128xf32>
    %c0_3 = arith.constant 0 : index
    %c0_4 = arith.constant 0 : index
    %3 = vector.load %arg4[%c0_3, %c0_4] : memref<1x128xf32, #tpu.memory_space<vmem>>, vector<1x128xf32>
    %4 = vector.broadcast %3 : vector<1x128xf32> to vector<64x128xf32>
    %5 = arith.addf %2, %4 : vector<64x128xf32>
    %c0_5 = arith.constant 0 : index
    %c0_6 = arith.constant 0 : index
    %6 = vector.load %arg5[%c0_5, %c0_6] : memref<64x128xf32, #tpu.memory_space<vmem>>, vector<64x128xf32>
    tpu.vector_store %arg5[%c0_5, %c0_6], %5 {strides = array<i32>} : memref<64x128xf32, #tpu.memory_space<vmem>>, vector<64x128xf32>,
    return
  }
  func.func @transform_0(%arg0: i32, %arg1: i32) -> (i32, i32) {
    %c0_i32 = arith.constant 0 : i32
    %c0_i32_0 = arith.constant 0 : i32
    return %arg0, %c0_i32 : i32, i32
  }
  func.func @transform_1(%arg0: i32, %arg1: i32) -> (i32, i32) {
    %c0_i32 = arith.constant 0 : i32
    %c0_i32_0 = arith.constant 0 : i32
    return %c0_i32, %arg1 : i32, i32
  }
  func.func @transform_2(%arg0: i32, %arg1: i32) -> (i32, i32) {
    %c0_i32 = arith.constant 0 : i32
    %c0_i32_0 = arith.constant 0 : i32
    return %c0_i32, %arg1 : i32, i32
  }
  func.func @transform_3(%arg0: i32, %arg1: i32) -> (i32, i32) {
    %c0_i32 = arith.constant 0 : i32
    return %arg0, %arg1 : i32, i32
  }
}

</mosaic_0001>

<llo_original>
// kernel: text_generation_forward.3
$region0: #{text_generation_forward.3}
  #allocation0 [shape = 'u32[]', space=smem, size = 0x4, offset = 0x4, fixed_abs, tag = 'smem constant byte address 0x4 - core index']
  #allocation1 [shape = 'u32[144,128]{1,0:T(1,128)}', space=vmem, size = 0x12000, scoped, tag = 'internal scratch']
  %s0 = inlined_call_operand.vmem [shape: bf16[16,128], index: 0, kind: input, shape index: {}]
  %s1 = inlined_call_operand.vmem [shape: bf16[128,512], index: 1, kind: input, shape index: {}]
  %s2 = inlined_call_operand.vmem [shape: f32[1,512], index: 2, kind: input, shape index: {}]
  %s3 = inlined_call_operand.vmem [shape: bf16[16,512], index: 3, kind: output, shape index: {}]
  %s4 = sld [smem:[#allocation0]]
  $region22: #{text_generation_forward.3} parent=0
    _
  %s6 = ssub.s32 1, %s4
  %s7 = scalar_select 0, %s6, %s4
  // Predicated region
  $region2: #{text_generation_forward.3} parent=0 // pred_check
    _
  $region3: #{text_generation_forward.3} parent=0 // pred_check_branch
    %9 = sbr.rel (0) target = $region5
  $region4: #{text_generation_forward.3} parent=0 // pred_region
    _
  $region5: #{text_generation_forward.3} parent=0 // pred_fallthru
    _
  // Predicated region
  $region6: #{text_generation_forward.3} parent=0 // pred_check
    _
  $region7: #{text_generation_forward.3} parent=0 // pred_check_branch
    %11 = sbr.rel (0) target = $region9
  $region8: #{text_generation_forward.3} parent=0 // pred_region
    _
  $region9: #{text_generation_forward.3} parent=0 // pred_fallthru
    _
  // Predicated region
  $region10: #{text_generation_forward.3} parent=0 // pred_check
    _
  $region11: #{text_generation_forward.3} parent=0 // pred_check_branch
    %13 = sbr.rel (0) target = $region13
  $region12: #{text_generation_forward.3} parent=0 // pred_region
    _
  $region13: #{text_generation_forward.3} parent=0 // pred_fallthru
    _
  %v15 = vld [vmem:[%s0] sm:$0xf]
  %v16 = vld [vmem:[%s0 + $0x4] sm:$0xf]
  %v17 = vld [vmem:[%s1] sm:$0xff]
  %v18 = vld [vmem:[%s1 + $0x8] sm:$0xff]
  %v19 = vld [vmem:[%s1 + $0x10] sm:$0xff]
  %v20 = vld [vmem:[%s1 + $0x18] sm:$0xff]
  %v21 = vld [vmem:[%s1 + $0x20] sm:$0xff]
  %v22 = vld [vmem:[%s1 + $0x28] sm:$0xff]
  %v23 = vld [vmem:[%s1 + $0x30] sm:$0xff]
  %v24 = vld [vmem:[%s1 + $0x38] sm:$0xff]
  %v25 = vld [vmem:[%s1 + $0x40] sm:$0xff]
  %v26 = vld [vmem:[%s1 + $0x48] sm:$0xff]
  %v27 = vld [vmem:[%s1 + $0x50] sm:$0xff]
  %v28 = vld [vmem:[%s1 + $0x58] sm:$0xff]
  %v29 = vld [vmem:[%s1 + $0x60] sm:$0xff]
  %v30 = vld [vmem:[%s1 + $0x68] sm:$0xff]
  %v31 = vld [vmem:[%s1 + $0x70] sm:$0xff]
  %v32 = vld [vmem:[%s1 + $0x78] sm:$0xff]
  %v33 = vld [vmem:[%s1 + $0x80] sm:$0xff]
  %v34 = vld [vmem:[%s1 + $0x88] sm:$0xff]
  %v35 = vld [vmem:[%s1 + $0x90] sm:$0xff]
  %v36 = vld [vmem:[%s1 + $0x98] sm:$0xff]
  %v37 = vld [vmem:[%s1 + $0xa0] sm:$0xff]
  %v38 = vld [vmem:[%s1 + $0xa8] sm:$0xff]
  %v39 = vld [vmem:[%s1 + $0xb0] sm:$0xff]
  %v40 = vld [vmem:[%s1 + $0xb8] sm:$0xff]
  %v41 = vld [vmem:[%s1 + $0xc0] sm:$0xff]
  %v42 = vld [vmem:[%s1 + $0xc8] sm:$0xff]
  %v43 = vld [vmem:[%s1 + $0xd0] sm:$0xff]
  %v44 = vld [vmem:[%s1 + $0xd8] sm:$0xff]
  %v45 = vld [vmem:[%s1 + $0xe0] sm:$0xff]
  %v46 = vld [vmem:[%s1 + $0xe8] sm:$0xff]
  %v47 = vld [vmem:[%s1 + $0xf0] sm:$0xff]
  %v48 = vld [vmem:[%s1 + $0xf8] sm:$0xff]
  %v49 = vld [vmem:[%s2] sm:$0xf]
  %v51 = vlaneseq
  %v52 = vshrl.u32 %v51, 7
  %v53 = vsub.s32 0, %v52
  %v54 = vrot.slane %v49, %v53
  %v55 = vlaneseq
  %v56 = vshrl.u32 %v55, 7
  %v57 = vsub.s32 1, %v56
  %v58 = vrot.slane %v49, %v57
  %v59 = vlaneseq
  %v60 = vshrl.u32 %v59, 7
  %v61 = vsub.s32 2, %v60
  %v62 = vrot.slane %v49, %v61
  %v63 = vlaneseq
  %v64 = vshrl.u32 %v63, 7
  %v65 = vsub.s32 3, %v64
  %v66 = vrot.slane %v49, %v65
  %v73 = vunpack.c.l.b16 %v15
  %v74 = vunpack.c.l.b16 %v16
  %v75 = vpack.c.b16 %v74, %v73
  %v109 = vunpack.c.l.b16 %v17
  %v110 = vunpack.c.h.b16 %v17
  %v111 = vunpack.c.l.b16 %v18
  %v112 = vunpack.c.h.b16 %v18
  %v113 = vunpack.c.l.b16 %v19
  %v114 = vunpack.c.h.b16 %v19
  %v115 = vunpack.c.l.b16 %v20
  %v116 = vunpack.c.h.b16 %v20
  %v117 = vunpack.c.l.b16 %v21
  %v118 = vunpack.c.h.b16 %v21
  %v119 = vunpack.c.l.b16 %v22
  %v120 = vunpack.c.h.b16 %v22
  %v121 = vunpack.c.l.b16 %v23
  %v122 = vunpack.c.h.b16 %v23
  %v123 = vunpack.c.l.b16 %v24
  %v124 = vunpack.c.h.b16 %v24
  %v125 = vunpack.c.l.b16 %v25
  %v126 = vunpack.c.h.b16 %v25
  %v127 = vunpack.c.l.b16 %v26
  %v128 = vunpack.c.h.b16 %v26
  %v129 = vunpack.c.l.b16 %v27
  %v130 = vunpack.c.h.b16 %v27
  %v131 = vunpack.c.l.b16 %v28
  %v132 = vunpack.c.h.b16 %v28
  %v133 = vunpack.c.l.b16 %v29
  %v134 = vunpack.c.h.b16 %v29
  %v135 = vunpack.c.l.b16 %v30
  %v136 = vunpack.c.h.b16 %v30
  %v137 = vunpack.c.l.b16 %v31
  %v138 = vunpack.c.h.b16 %v31
  %v139 = vunpack.c.l.b16 %v32
  %v140 = vunpack.c.h.b16 %v32
  %v141 = vunpack.c.l.b16 %v33
  %v142 = vunpack.c.h.b16 %v33
  %v143 = vunpack.c.l.b16 %v34
  %v144 = vunpack.c.h.b16 %v34
  %v145 = vunpack.c.l.b16 %v35
  %v146 = vunpack.c.h.b16 %v35
  %v147 = vunpack.c.l.b16 %v36
  %v148 = vunpack.c.h.b16 %v36
  %v149 = vunpack.c.l.b16 %v37
  %v150 = vunpack.c.h.b16 %v37
  %v151 = vunpack.c.l.b16 %v38
  %v152 = vunpack.c.h.b16 %v38
  %v153 = vunpack.c.l.b16 %v39
  %v154 = vunpack.c.h.b16 %v39
  %v155 = vunpack.c.l.b16 %v40
  %v156 = vunpack.c.h.b16 %v40
  %v157 = vunpack.c.l.b16 %v41
  %v158 = vunpack.c.h.b16 %v41
  %v159 = vunpack.c.l.b16 %v42
  %v160 = vunpack.c.h.b16 %v42
  %v161 = vunpack.c.l.b16 %v43
  %v162 = vunpack.c.h.b16 %v43
  %v163 = vunpack.c.l.b16 %v44
  %v164 = vunpack.c.h.b16 %v44
  %v165 = vunpack.c.l.b16 %v45
  %v166 = vunpack.c.h.b16 %v45
  %v167 = vunpack.c.l.b16 %v46
  %v168 = vunpack.c.h.b16 %v46
  %v169 = vunpack.c.l.b16 %v47
  %v170 = vunpack.c.h.b16 %v47
  %v171 = vunpack.c.l.b16 %v48
  %v172 = vunpack.c.h.b16 %v48
  %v173 = vpack.c.b16 %v113, %v109
  %v174 = vpack.c.b16 %v114, %v110
  %v175 = vpack.c.b16 %v115, %v111
  %v176 = vpack.c.b16 %v116, %v112
  %v177 = vpack.c.b16 %v121, %v117
  %v178 = vpack.c.b16 %v122, %v118
  %v179 = vpack.c.b16 %v123, %v119
  %v180 = vpack.c.b16 %v124, %v120
  %v181 = vpack.c.b16 %v129, %v125
  %v182 = vpack.c.b16 %v130, %v126
  %v183 = vpack.c.b16 %v131, %v127
  %v184 = vpack.c.b16 %v132, %v128
  %v185 = vpack.c.b16 %v137, %v133
  %v186 = vpack.c.b16 %v138, %v134
  %v187 = vpack.c.b16 %v139, %v135
  %v188 = vpack.c.b16 %v140, %v136
  %v189 = vpack.c.b16 %v145, %v141
  %v190 = vpack.c.b16 %v146, %v142
  %v191 = vpack.c.b16 %v147, %v143
  %v192 = vpack.c.b16 %v148, %v144
  %v193 = vpack.c.b16 %v153, %v149
  %v194 = vpack.c.b16 %v154, %v150
  %v195 = vpack.c.b16 %v155, %v151
  %v196 = vpack.c.b16 %v156, %v152
  %v197 = vpack.c.b16 %v161, %v157
  %v198 = vpack.c.b16 %v162, %v158
  %v199 = vpack.c.b16 %v163, %v159
  %v200 = vpack.c.b16 %v164, %v160
  %v201 = vpack.c.b16 %v169, %v165
  %v202 = vpack.c.b16 %v170, %v166
  %v203 = vpack.c.b16 %v171, %v167
  %v204 = vpack.c.b16 %v172, %v168
  %237 = vmatprep.subr.bf16.mxu0 %v202
  %238 = vmatpush1.bf16.msra.mxu0 %v201
  %239 = vmatprep.subr.bf16.mxu0 %v198
  %240 = vmatpush1.bf16.msra.mxu0 %v197
  %241 = vmatprep.subr.bf16.mxu0 %v194
  %242 = vmatpush1.bf16.msra.mxu0 %v193
  %243 = vmatprep.subr.bf16.mxu0 %v190
  %244 = vmatpush1.bf16.msra.mxu0 %v189
  %245 = vmatprep.subr.bf16.mxu0 %v186
  %246 = vmatpush1.bf16.msra.mxu0 %v185
  %247 = vmatprep.subr.bf16.mxu0 %v182
  %248 = vmatpush1.bf16.msra.mxu0 %v181
  %249 = vmatprep.subr.bf16.mxu0 %v178
  %250 = vmatpush1.bf16.msra.mxu0 %v177
  %251 = vmatprep.subr.bf16.mxu0 %v174
  %252 = vmatpush1.bf16.msra.mxu0 %v173
  %253 = vmatprep.subr.bf16.mxu0 0
  %254 = vmatpush2.bf16.msra.mxu0 0
  %255 = vmatprep.subr.bf16.mxu0 0
  %256 = vmatpush2.bf16.msra.mxu0 0
  %257 = vmatprep.subr.bf16.mxu0 0
  %258 = vmatpush2.bf16.msra.mxu0 0
  %259 = vmatprep.subr.bf16.mxu0 0
  %260 = vmatpush2.bf16.msra.mxu0 0
  %261 = vmatprep.subr.bf16.mxu0 0
  %262 = vmatpush2.bf16.msra.mxu0 0
  %263 = vmatprep.subr.bf16.mxu0 0
  %264 = vmatpush2.bf16.msra.mxu0 0
  %265 = vmatprep.subr.bf16.mxu0 0
  %266 = vmatpush2.bf16.msra.mxu0 0
  %267 = vmatprep.subr.bf16.mxu0 0
  %268 = vmatpush2.bf16.msra.mxu0 0
  %269 = vmatprep.mubr.bf16.mxu0 0
  %270 = vmatmul.mubr.bf16.gmra.mxu0 %v75
  %v271 = vpop.f32.mrf.mxu0
  %v272 = vadd.f32 %v54, %v271
  %v273 = vpop.f32.mrf.mxu0
  %v274 = vadd.f32 %v58, %v273
  %v275 = vpop.f32.mrf.mxu0
  %v276 = vadd.f32 %v54, %v275
  %v277 = vpop.f32.mrf.mxu0
  %v278 = vadd.f32 %v58, %v277
  %279 = vdwg.mxu0
  %280 = vmatprep.subr.bf16.mxu0 %v204
  %281 = vmatpush1.bf16.msra.mxu0 %v203
  %282 = vmatprep.subr.bf16.mxu0 %v200
  %283 = vmatpush1.bf16.msra.mxu0 %v199
  %284 = vmatprep.subr.bf16.mxu0 %v196
  %285 = vmatpush1.bf16.msra.mxu0 %v195
  %286 = vmatprep.subr.bf16.mxu0 %v192
  %287 = vmatpush1.bf16.msra.mxu0 %v191
  %288 = vmatprep.subr.bf16.mxu0 %v188
  %289 = vmatpush1.bf16.msra.mxu0 %v187
  %290 = vmatprep.subr.bf16.mxu0 %v184
  %291 = vmatpush1.bf16.msra.mxu0 %v183
  %292 = vmatprep.subr.bf16.mxu0 %v180
  %293 = vmatpush1.bf16.msra.mxu0 %v179
  %294 = vmatprep.subr.bf16.mxu0 %v176
  %295 = vmatpush1.bf16.msra.mxu0 %v175
  %296 = vmatprep.subr.bf16.mxu0 0
  %297 = vmatpush2.bf16.msra.mxu0 0
  %298 = vmatprep.subr.bf16.mxu0 0
  %299 = vmatpush2.bf16.msra.mxu0 0
  %300 = vmatprep.subr.bf16.mxu0 0
  %301 = vmatpush2.bf16.msra.mxu0 0
  %302 = vmatprep.subr.bf16.mxu0 0
  %303 = vmatpush2.bf16.msra.mxu0 0
  %304 = vmatprep.subr.bf16.mxu0 0
  %305 = vmatpush2.bf16.msra.mxu0 0
  %306 = vmatprep.subr.bf16.mxu0 0
  %307 = vmatpush2.bf16.msra.mxu0 0
  %308 = vmatprep.subr.bf16.mxu0 0
  %309 = vmatpush2.bf16.msra.mxu0 0
  %310 = vmatprep.subr.bf16.mxu0 0
  %311 = vmatpush2.bf16.msra.mxu0 0
  %312 = vmatprep.mubr.bf16.mxu0 0
  %313 = vmatmul.mubr.bf16.gmra.mxu0 %v75
  %v314 = vpop.f32.mrf.mxu0
  %v315 = vadd.f32 %v62, %v314
  %v316 = vpop.f32.mrf.mxu0
  %v317 = vadd.f32 %v66, %v316
  %v318 = vpop.f32.mrf.mxu0
  %v319 = vadd.f32 %v62, %v318
  %v320 = vpop.f32.mrf.mxu0
  %v321 = vadd.f32 %v66, %v320
  %322 = vdwg.mxu0
  %v323 = vpack.c.bf16 %v276, %v272
  %v324 = vpack.c.bf16 %v278, %v274
  %v325 = vpack.c.bf16 %v319, %v315
  %v326 = vpack.c.bf16 %v321, %v317
  %v331 = vunpack.c.l.b16 %v323
  %v332 = vunpack.c.l.b16 %v324
  %v333 = vunpack.c.l.b16 %v325
  %v334 = vunpack.c.l.b16 %v326
  %v335 = vunpack.c.h.b16 %v323
  %v336 = vunpack.c.h.b16 %v324
  %v337 = vunpack.c.h.b16 %v325
  %v338 = vunpack.c.h.b16 %v326
  %v339 = vpack.c.b16 %v332, %v331
  %v340 = vpack.c.b16 %v334, %v333
  %v341 = vpack.c.b16 %v336, %v335
  %v342 = vpack.c.b16 %v338, %v337
  %347 = vst [vmem:[%s3] sm:$0xff] %v339
  %348 = vst [vmem:[%s3 + $0x8] sm:$0xff] %v340
  %349 = vst [vmem:[%s3 + $0x10] sm:$0xff] %v341
  %350 = vst [vmem:[%s3 + $0x18] sm:$0xff] %v342
  // Predicated region
  $region14: #{text_generation_forward.3} parent=0 // pred_check
    _
  $region15: #{text_generation_forward.3} parent=0 // pred_check_branch
    %352 = sbr.rel (0) target = $region17
  $region16: #{text_generation_forward.3} parent=0 // pred_region
    _
  $region17: #{text_generation_forward.3} parent=0 // pred_fallthru
    _
  // Predicated region
  $region18: #{text_generation_forward.3} parent=0 // pred_check
    _
  $region19: #{text_generation_forward.3} parent=0 // pred_check_branch
    %354 = sbr.rel (0) target = $region21
  $region20: #{text_generation_forward.3} parent=0 // pred_region
    _
  $region21: #{text_generation_forward.3} parent=0 // pred_fallthru
    _

// kernel: text_generation_forward.5
$region0: #{text_generation_forward.5}
  #allocation0 [shape = 'u32[]', space=smem, size = 0x4, offset = 0x4, fixed_abs, tag = 'smem constant byte address 0x4 - core index']
  #allocation1 [shape = 'u32[144,128]{1,0:T(1,128)}', space=vmem, size = 0x12000, scoped, tag = 'internal scratch']
  %s0 = inlined_call_operand.vmem [shape: bf16[64,128], index: 0, kind: input, shape index: {}]
  %s1 = inlined_call_operand.vmem [shape: bf16[128,128], index: 1, kind: input, shape index: {}]
  %s2 = inlined_call_operand.vmem [shape: f32[1,128], index: 2, kind: input, shape index: {}]
  %s3 = inlined_call_operand.vmem [shape: f32[64,128], index: 3, kind: output, shape index: {}]
  %s4 = sld [smem:[#allocation0]]
  $region22: #{text_generation_forward.5} parent=0
    _
  %s6 = ssub.s32 1, %s4
  %s7 = scalar_select 0, %s6, %s4
  // Predicated region
  $region2: #{text_generation_forward.5} parent=0 // pred_check
    _
  $region3: #{text_generation_forward.5} parent=0 // pred_check_branch
    %9 = sbr.rel (0) target = $region5
  $region4: #{text_generation_forward.5} parent=0 // pred_region
    _
  $region5: #{text_generation_forward.5} parent=0 // pred_fallthru
    _
  // Predicated region
  $region6: #{text_generation_forward.5} parent=0 // pred_check
    _
  $region7: #{text_generation_forward.5} parent=0 // pred_check_branch
    %11 = sbr.rel (0) target = $region9
  $region8: #{text_generation_forward.5} parent=0 // pred_region
    _
  $region9: #{text_generation_forward.5} parent=0 // pred_fallthru
    _
  // Predicated region
  $region10: #{text_generation_forward.5} parent=0 // pred_check
    _
  $region11: #{text_generation_forward.5} parent=0 // pred_check_branch
    %13 = sbr.rel (0) target = $region13
  $region12: #{text_generation_forward.5} parent=0 // pred_region
    _
  $region13: #{text_generation_forward.5} parent=0 // pred_fallthru
    _
  %v15 = vld [vmem:[%s0] sm:$0xf]
  %v16 = vld [vmem:[%s0 + $0x4] sm:$0xf]
  %v17 = vld [vmem:[%s0 + $0x8] sm:$0xf]
  %v18 = vld [vmem:[%s0 + $0xc] sm:$0xf]
  %v19 = vld [vmem:[%s0 + $0x10] sm:$0xf]
  %v20 = vld [vmem:[%s0 + $0x14] sm:$0xf]
  %v21 = vld [vmem:[%s0 + $0x18] sm:$0xf]
  %v22 = vld [vmem:[%s0 + $0x1c] sm:$0xf]
  %v23 = vld [vmem:[%s1] sm:$0xf]
  %v24 = vld [vmem:[%s1 + $0x4] sm:$0xf]
  %v25 = vld [vmem:[%s1 + $0x8] sm:$0xf]
  %v26 = vld [vmem:[%s1 + $0xc] sm:$0xf]
  %v27 = vld [vmem:[%s1 + $0x10] sm:$0xf]
  %v28 = vld [vmem:[%s1 + $0x14] sm:$0xf]
  %v29 = vld [vmem:[%s1 + $0x18] sm:$0xf]
  %v30 = vld [vmem:[%s1 + $0x1c] sm:$0xf]
  %v31 = vld [vmem:[%s1 + $0x20] sm:$0xf]
  %v32 = vld [vmem:[%s1 + $0x24] sm:$0xf]
  %v33 = vld [vmem:[%s1 + $0x28] sm:$0xf]
  %v34 = vld [vmem:[%s1 + $0x2c] sm:$0xf]
  %v35 = vld [vmem:[%s1 + $0x30] sm:$0xf]
  %v36 = vld [vmem:[%s1 + $0x34] sm:$0xf]
  %v37 = vld [vmem:[%s1 + $0x38] sm:$0xf]
  %v38 = vld [vmem:[%s1 + $0x3c] sm:$0xf]
  %v39 = vld [vmem:[%s2] sm:$0x1]
  %v41 = vlaneseq
  %v42 = vshrl.u32 %v41, 7
  %v43 = vsub.s32 0, %v42
  %v44 = vrot.slane %v39, %v43
  %v54 = vunpack.c.l.b16 %v15
  %v55 = vunpack.c.l.b16 %v16
  %v56 = vunpack.c.l.b16 %v17
  %v57 = vunpack.c.l.b16 %v18
  %v58 = vunpack.c.l.b16 %v19
  %v59 = vunpack.c.l.b16 %v20
  %v60 = vunpack.c.l.b16 %v21
  %v61 = vunpack.c.l.b16 %v22
  %v62 = vpack.c.b16 %v55, %v54
  %v63 = vpack.c.b16 %v57, %v56
  %v64 = vpack.c.b16 %v59, %v58
  %v65 = vpack.c.b16 %v61, %v60
  %v86 = vunpack.c.l.b16 %v23
  %v87 = vunpack.c.l.b16 %v24
  %v88 = vunpack.c.l.b16 %v25
  %v89 = vunpack.c.l.b16 %v26
  %v90 = vunpack.c.l.b16 %v27
  %v91 = vunpack.c.l.b16 %v28
  %v92 = vunpack.c.l.b16 %v29
  %v93 = vunpack.c.l.b16 %v30
  %v94 = vunpack.c.l.b16 %v31
  %v95 = vunpack.c.l.b16 %v32
  %v96 = vunpack.c.l.b16 %v33
  %v97 = vunpack.c.l.b16 %v34
  %v98 = vunpack.c.l.b16 %v35
  %v99 = vunpack.c.l.b16 %v36
  %v100 = vunpack.c.l.b16 %v37
  %v101 = vunpack.c.l.b16 %v38
  %v102 = vpack.c.b16 %v87, %v86
  %v103 = vpack.c.b16 %v89, %v88
  %v104 = vpack.c.b16 %v91, %v90
  %v105 = vpack.c.b16 %v93, %v92
  %v106 = vpack.c.b16 %v95, %v94
  %v107 = vpack.c.b16 %v97, %v96
  %v108 = vpack.c.b16 %v99, %v98
  %v109 = vpack.c.b16 %v101, %v100
  %118 = vmatprep.subr.bf16.mxu0 0
  %119 = vmatpush1.bf16.msra.mxu0 %v109
  %120 = vmatprep.subr.bf16.mxu0 0
  %121 = vmatpush1.bf16.msra.mxu0 %v108
  %122 = vmatprep.subr.bf16.mxu0 0
  %123 = vmatpush1.bf16.msra.mxu0 %v107
  %124 = vmatprep.subr.bf16.mxu0 0
  %125 = vmatpush1.bf16.msra.mxu0 %v106
  %126 = vmatprep.subr.bf16.mxu0 0
  %127 = vmatpush1.bf16.msra.mxu0 %v105
  %128 = vmatprep.subr.bf16.mxu0 0
  %129 = vmatpush1.bf16.msra.mxu0 %v104
  %130 = vmatprep.subr.bf16.mxu0 0
  %131 = vmatpush1.bf16.msra.mxu0 %v103
  %132 = vmatprep.subr.bf16.mxu0 0
  %133 = vmatpush1.bf16.msra.mxu0 %v102
  %134 = vmatprep.subr.bf16.mxu0 0
  %135 = vmatpush2.bf16.msra.mxu0 0
  %136 = vmatprep.subr.bf16.mxu0 0
  %137 = vmatpush2.bf16.msra.mxu0 0
  %138 = vmatprep.subr.bf16.mxu0 0
  %139 = vmatpush2.bf16.msra.mxu0 0
  %140 = vmatprep.subr.bf16.mxu0 0
  %141 = vmatpush2.bf16.msra.mxu0 0
  %142 = vmatprep.subr.bf16.mxu0 0
  %143 = vmatpush2.bf16.msra.mxu0 0
  %144 = vmatprep.subr.bf16.mxu0 0
  %145 = vmatpush2.bf16.msra.mxu0 0
  %146 = vmatprep.subr.bf16.mxu0 0
  %147 = vmatpush2.bf16.msra.mxu0 0
  %148 = vmatprep.subr.bf16.mxu0 0
  %149 = vmatpush2.bf16.msra.mxu0 0
  %150 = vmatprep.mubr.bf16.mxu0 0
  %151 = vmatmul.mubr.bf16.gmra.mxu0 %v62
  %v152 = vpop.f32.mrf.mxu0
  %v153 = vadd.f32 %v44, %v152
  %v154 = vpop.f32.mrf.mxu0
  %v155 = vpop.f32.mrf.mxu0
  %v156 = vadd.f32 %v44, %v155
  %v157 = vpop.f32.mrf.mxu0
  %158 = vmatprep.mubr.bf16.mxu0 0
  %159 = vmatmul.mubr.bf16.gmra.mxu0 %v63
  %v160 = vpop.f32.mrf.mxu0
  %v161 = vadd.f32 %v44, %v160
  %v162 = vpop.f32.mrf.mxu0
  %v163 = vpop.f32.mrf.mxu0
  %v164 = vadd.f32 %v44, %v163
  %v165 = vpop.f32.mrf.mxu0
  %166 = vmatprep.mubr.bf16.mxu0 0
  %167 = vmatmul.mubr.bf16.gmra.mxu0 %v64
  %v168 = vpop.f32.mrf.mxu0
  %v169 = vadd.f32 %v44, %v168
  %v170 = vpop.f32.mrf.mxu0
  %v171 = vpop.f32.mrf.mxu0
  %v172 = vadd.f32 %v44, %v171
  %v173 = vpop.f32.mrf.mxu0
  %174 = vmatprep.mubr.bf16.mxu0 0
  %175 = vmatmul.mubr.bf16.gmra.mxu0 %v65
  %v176 = vpop.f32.mrf.mxu0
  %v177 = vadd.f32 %v44, %v176
  %v178 = vpop.f32.mrf.mxu0
  %v179 = vpop.f32.mrf.mxu0
  %v180 = vadd.f32 %v44, %v179
  %v181 = vpop.f32.mrf.mxu0
  %182 = vdwg.mxu0
  %183 = vst [vmem:[%s3] sm:$0xff] %v153
  %184 = vst [vmem:[%s3 + $0x8] sm:$0xff] %v156
  %185 = vst [vmem:[%s3 + $0x10] sm:$0xff] %v161
  %186 = vst [vmem:[%s3 + $0x18] sm:$0xff] %v164
  %187 = vst [vmem:[%s3 + $0x20] sm:$0xff] %v169
  %188 = vst [vmem:[%s3 + $0x28] sm:$0xff] %v172
  %189 = vst [vmem:[%s3 + $0x30] sm:$0xff] %v177
  %190 = vst [vmem:[%s3 + $0x38] sm:$0xff] %v180
  // Predicated region
  $region14: #{text_generation_forward.5} parent=0 // pred_check
    _
  $region15: #{text_generation_forward.5} parent=0 // pred_check_branch
    %192 = sbr.rel (0) target = $region17
  $region16: #{text_generation_forward.5} parent=0 // pred_region
    _
  $region17: #{text_generation_forward.5} parent=0 // pred_fallthru
    _
  // Predicated region
  $region18: #{text_generation_forward.5} parent=0 // pred_check
    _
  $region19: #{text_generation_forward.5} parent=0 // pred_check_branch
    %194 = sbr.rel (0) target = $region21
  $region20: #{text_generation_forward.5} parent=0 // pred_region
    _
  $region21: #{text_generation_forward.5} parent=0 // pred_fallthru
    _

// kernel: text_generation_forward.4
$region0: #{text_generation_forward.4}
  #allocation0 [shape = 'u32[]', space=smem, size = 0x4, offset = 0x4, fixed_abs, tag = 'smem constant byte address 0x4 - core index']
  #allocation1 [shape = 'u32[144,128]{1,0:T(1,128)}', space=vmem, size = 0x12000, scoped, tag = 'internal scratch']
  #allocation2 [shape = 'f32[8,128]{1,0:T(8,128)}', space=vmem, size = 0x1000, scoped, tag = 'scratch operand']
  #allocation3 [shape = 'f32[8,128]{1,0:T(8,128)}', space=vmem, size = 0x1000, scoped, tag = 'scratch operand']
  #allocation4 [shape = 'bf16[128,512]{1,0:T(8,128)(2,1)}', space=vmem, size = 0x20000, scoped, tag = 'scratch operand']
  #allocation5 [shape = 's32[1]{0}', space=sflag, size = 0x4, scoped, tag = 'scratch operand']
  #allocation6 [shape = 's32[]', space=sflag, size = 0x4, offset = 0, fixed_abs, tag = 'sflag constant byte address 0x0 - dummy sync flag']
  %s0 = inlined_call_operand.vmem [shape: bf16[8,8,512], index: 0, kind: input, shape index: {}]
  %s1 = inlined_call_operand.vmem [shape: bf16[128,512], index: 1, kind: input, shape index: {}]
  %s2 = inlined_call_operand.vmem [shape: bf16[8,8,128], index: 2, kind: output, shape index: {}]
  %s3 = sld [smem:[#allocation0]]
  $region52: #{text_generation_forward.4} parent=0
    _
  %s5 = ssub.s32 1, %s3
  %s6 = scalar_select 0, %s5, %s3
  // Predicated region
  $region2: #{text_generation_forward.4} parent=0 // pred_check
    _
  $region3: #{text_generation_forward.4} parent=0 // pred_check_branch
    %8 = sbr.rel (0) target = $region5
  $region4: #{text_generation_forward.4} parent=0 // pred_region
    _
  $region5: #{text_generation_forward.4} parent=0 // pred_fallthru
    _
  %p10 = scmp.eq.s32.totalorder 0, 0
  // Predicated region
  $region6: #{text_generation_forward.4} parent=0 // pred_check
    %p11 = pneg %p10
  $region7: #{text_generation_forward.4} parent=0 // pred_check_branch
    %13 = sbr.rel (%p11) target = $region9
  $region8: #{text_generation_forward.4} parent=0 // pred_region
    %p15 = scmp.lt.u32.totalorder 256, 8
    %p16 = pneg %p15
    // Predicated region
    $region10: #{text_generation_forward.4} parent=8 // pred_check
      _
    $region11: #{text_generation_forward.4} parent=8 // pred_check_branch
      %18 = sbr.rel (%p15) target = $region13
    $region12: #{text_generation_forward.4} parent=8 // pred_region
      %s34 = sand.u32 256, 7
      %p35 = scmp.eq.s32.totalorder %s34, 0
      // Predicated region
      $region25: #{text_generation_forward.4} parent=12 // pred_check
        %p36 = pneg %p35
      $region26: #{text_generation_forward.4} parent=12 // pred_check_branch
        %38 = sbr.rel (%p36) target = $region28
      $region27: #{text_generation_forward.4} parent=12 // pred_region
        loop: start=0, step=1, limit=1
        $region29: #{text_generation_forward.4} parent=27 // loop_pre_header
          _
        $region30: #{text_generation_forward.4} parent=27 // loop_header
          %s40 = sphi 0, %s44
          %p41 = scmp.ge.s32.totalorder %s40, 1
          %s45 = sphi %s1, %s1
          %s46 = sphi [#allocation4], [#allocation4]
        $region31: #{text_generation_forward.4} parent=27 // loop_header_branch
          %43 = sbr.rel (%p41) target = $region35
        $region32: #{text_generation_forward.4} parent=27 // loop_body
          %v47 = vld [vmem:[%s45] sm:$0xff]
          %48 = vst [vmem:[%s46] sm:$0xff] %v47
          %v49 = vld [vmem:[%s45 + $0x8] sm:$0xff]
          %50 = vst [vmem:[%s46 + $0x8] sm:$0xff] %v49
          %v51 = vld [vmem:[%s45 + $0x10] sm:$0xff]
          %52 = vst [vmem:[%s46 + $0x10] sm:$0xff] %v51
          %v53 = vld [vmem:[%s45 + $0x18] sm:$0xff]
          %54 = vst [vmem:[%s46 + $0x18] sm:$0xff] %v53
          %v55 = vld [vmem:[%s45 + $0x20] sm:$0xff]
          %56 = vst [vmem:[%s46 + $0x20] sm:$0xff] %v55
          %v57 = vld [vmem:[%s45 + $0x28] sm:$0xff]
          %58 = vst [vmem:[%s46 + $0x28] sm:$0xff] %v57
          %v59 = vld [vmem:[%s45 + $0x30] sm:$0xff]
          %60 = vst [vmem:[%s46 + $0x30] sm:$0xff] %v59
          %v61 = vld [vmem:[%s45 + $0x38] sm:$0xff]
          %62 = vst [vmem:[%s46 + $0x38] sm:$0xff] %v61
          %v63 = vld [vmem:[%s45 + $0x40] sm:$0xff]
          %64 = vst [vmem:[%s46 + $0x40] sm:$0xff] %v63
          %v65 = vld [vmem:[%s45 + $0x48] sm:$0xff]
          %66 = vst [vmem:[%s46 + $0x48] sm:$0xff] %v65
          %v67 = vld [vmem:[%s45 + $0x50] sm:$0xff]
          %68 = vst [vmem:[%s46 + $0x50] sm:$0xff] %v67
          %v69 = vld [vmem:[%s45 + $0x58] sm:$0xff]
          %70 = vst [vmem:[%s46 + $0x58] sm:$0xff] %v69
          %v71 = vld [vmem:[%s45 + $0x60] sm:$0xff]
          %72 = vst [vmem:[%s46 + $0x60] sm:$0xff] %v71
          %v73 = vld [vmem:[%s45 + $0x68] sm:$0xff]
          %74 = vst [vmem:[%s46 + $0x68] sm:$0xff] %v73
          %v75 = vld [vmem:[%s45 + $0x70] sm:$0xff]
          %76 = vst [vmem:[%s46 + $0x70] sm:$0xff] %v75
          %v77 = vld [vmem:[%s45 + $0x78] sm:$0xff]
          %78 = vst [vmem:[%s46 + $0x78] sm:$0xff] %v77
          %v79 = vld [vmem:[%s45 + $0x80] sm:$0xff]
          %80 = vst [vmem:[%s46 + $0x80] sm:$0xff] %v79
          %v81 = vld [vmem:[%s45 + $0x88] sm:$0xff]
          %82 = vst [vmem:[%s46 + $0x88] sm:$0xff] %v81
          %v83 = vld [vmem:[%s45 + $0x90] sm:$0xff]
          %84 = vst [vmem:[%s46 + $0x90] sm:$0xff] %v83
          %v85 = vld [vmem:[%s45 + $0x98] sm:$0xff]
          %86 = vst [vmem:[%s46 + $0x98] sm:$0xff] %v85
          %v87 = vld [vmem:[%s45 + $0xa0] sm:$0xff]
          %88 = vst [vmem:[%s46 + $0xa0] sm:$0xff] %v87
          %v89 = vld [vmem:[%s45 + $0xa8] sm:$0xff]
          %90 = vst [vmem:[%s46 + $0xa8] sm:$0xff] %v89
          %v91 = vld [vmem:[%s45 + $0xb0] sm:$0xff]
          %92 = vst [vmem:[%s46 + $0xb0] sm:$0xff] %v91
          %v93 = vld [vmem:[%s45 + $0xb8] sm:$0xff]
          %94 = vst [vmem:[%s46 + $0xb8] sm:$0xff] %v93
          %v95 = vld [vmem:[%s45 + $0xc0] sm:$0xff]
          %96 = vst [vmem:[%s46 + $0xc0] sm:$0xff] %v95
          %v97 = vld [vmem:[%s45 + $0xc8] sm:$0xff]
          %98 = vst [vmem:[%s46 + $0xc8] sm:$0xff] %v97
          %v99 = vld [vmem:[%s45 + $0xd0] sm:$0xff]
          %100 = vst [vmem:[%s46 + $0xd0] sm:$0xff] %v99
          %v101 = vld [vmem:[%s45 + $0xd8] sm:$0xff]
          %102 = vst [vmem:[%s46 + $0xd8] sm:$0xff] %v101
          %v103 = vld [vmem:[%s45 + $0xe0] sm:$0xff]
          %104 = vst [vmem:[%s46 + $0xe0] sm:$0xff] %v103
          %v105 = vld [vmem:[%s45 + $0xe8] sm:$0xff]
          %106 = vst [vmem:[%s46 + $0xe8] sm:$0xff] %v105
          %v107 = vld [vmem:[%s45 + $0xf0] sm:$0xff]
          %108 = vst [vmem:[%s46 + $0xf0] sm:$0xff] %v107
          %v109 = vld [vmem:[%s45 + $0xf8] sm:$0xff]
          %110 = vst [vmem:[%s46 + $0xf8] sm:$0xff] %v109
        $region33: #{text_generation_forward.4} parent=27 // loop_footer
          %s44 = sadd.s32 1, %s40
        $region34: #{text_generation_forward.4} parent=27 // loop_footer_branch
          %39 = sbr.rel target = $region30
        $region35: #{text_generation_forward.4} parent=27 // loop_exit
          _
      $region28: #{text_generation_forward.4} parent=12 // pred_fallthru
        _
      %p111 = pneg %p35
      // Predicated region
      $region36: #{text_generation_forward.4} parent=12 // pred_check
        _
      $region37: #{text_generation_forward.4} parent=12 // pred_check_branch
        %113 = sbr.rel (%p35) target = $region39
      $region38: #{text_generation_forward.4} parent=12 // pred_region
        %s114 = sand.u32 256, 7
      $region39: #{text_generation_forward.4} parent=12 // pred_fallthru
        _
    $region13: #{text_generation_forward.4} parent=8 // pred_fallthru
      _
    // Predicated region
    $region14: #{text_generation_forward.4} parent=8 // pred_check
      %p19 = pneg %p15
    $region15: #{text_generation_forward.4} parent=8 // pred_check_branch
      %21 = sbr.rel (%p19) target = $region17
    $region16: #{text_generation_forward.4} parent=8 // pred_region
      %s22 = sshll.u32 1, 256
      %s23 = ssub.s32 %s22, 1
      loop: start=0, step=1, limit=1
      $region18: #{text_generation_forward.4} parent=16 // loop_pre_header
        _
      $region19: #{text_generation_forward.4} parent=16 // loop_header
        %s25 = sphi 0, %s29
        %p26 = scmp.ge.s32.totalorder %s25, 1
        %s30 = sphi %s1, %s1
        %s31 = sphi [#allocation4], [#allocation4]
      $region20: #{text_generation_forward.4} parent=16 // loop_header_branch
        %28 = sbr.rel (%p26) target = $region24
      $region21: #{text_generation_forward.4} parent=16 // loop_body
        %v32 = vld [vmem:[%s30] sm:%s23]
        %33 = vst [vmem:[%s31] sm:%s23] %v32
      $region22: #{text_generation_forward.4} parent=16 // loop_footer
        %s29 = sadd.s32 1, %s25
      $region23: #{text_generation_forward.4} parent=16 // loop_footer_branch
        %24 = sbr.rel target = $region19
      $region24: #{text_generation_forward.4} parent=16 // loop_exit
        _
    $region17: #{text_generation_forward.4} parent=8 // pred_fallthru
      _
    // Predicated region
    $region40: #{text_generation_forward.4} parent=8 // pred_check
      _
    $region41: #{text_generation_forward.4} parent=8 // pred_check_branch
      %117 = sbr.rel (0) target = $region43
    $region42: #{text_generation_forward.4} parent=8 // pred_region
      %118 = vsyncadd [#allocation5], 4096
    $region43: #{text_generation_forward.4} parent=8 // pred_fallthru
      _
    %s119 = smul.u32 4, 16
    %s120 = smul.u32 %s119, 4
    %s121 = sshll.u32 %s120, 4
    %122 = dma.done [#allocation5], %s121
    %123 = vst [vmem:[#allocation2] sm:$0xff] 0.0
    %v124 = vlaneseq
    %v125 = vand.u32 %v124, 127
    %vm126 = vcmp.lt.s32.totalorder %v125, 32
    %v127 = vsel %vm126, 1.0, 0.0
    %128 = vst [vmem:[#allocation3] sm:$0xff] %v127
  $region9: #{text_generation_forward.4} parent=0 // pred_fallthru
    _
  %v129 = vld [vmem:[#allocation2] sm:$0xff]
  %v130 = vld [vmem:[#allocation3] sm:$0xff]
  %v131 = vld [vmem:[%s0] sm:$0xff]
  %v132 = vld [vmem:[%s0 + $0x8] sm:$0xff]
  %v133 = vpack.c.bf16 %v129, %v129
  %v134 = vld [vmem:[#allocation4] sm:$0xff]
  %v135 = vld [vmem:[#allocation4 + $0x8] sm:$0xff]
  %v136 = vld [vmem:[#allocation4 + $0x10] sm:$0xff]
  %v137 = vld [vmem:[#allocation4 + $0x18] sm:$0xff]
  %v138 = vld [vmem:[#allocation4 + $0x20] sm:$0xff]
  %v139 = vld [vmem:[#allocation4 + $0x28] sm:$0xff]
  %v140 = vld [vmem:[#allocation4 + $0x30] sm:$0xff]
  %v141 = vld [vmem:[#allocation4 + $0x38] sm:$0xff]
  %v142 = vld [vmem:[#allocation4 + $0x40] sm:$0xff]
  %v143 = vld [vmem:[#allocation4 + $0x48] sm:$0xff]
  %v144 = vld [vmem:[#allocation4 + $0x50] sm:$0xff]
  %v145 = vld [vmem:[#allocation4 + $0x58] sm:$0xff]
  %v146 = vld [vmem:[#allocation4 + $0x60] sm:$0xff]
  %v147 = vld [vmem:[#allocation4 + $0x68] sm:$0xff]
  %v148 = vld [vmem:[#allocation4 + $0x70] sm:$0xff]
  %v149 = vld [vmem:[#allocation4 + $0x78] sm:$0xff]
  %v150 = vld [vmem:[#allocation4 + $0x80] sm:$0xff]
  %v151 = vld [vmem:[#allocation4 + $0x88] sm:$0xff]
  %v152 = vld [vmem:[#allocation4 + $0x90] sm:$0xff]
  %v153 = vld [vmem:[#allocation4 + $0x98] sm:$0xff]
  %v154 = vld [vmem:[#allocation4 + $0xa0] sm:$0xff]
  %v155 = vld [vmem:[#allocation4 + $0xa8] sm:$0xff]
  %v156 = vld [vmem:[#allocation4 + $0xb0] sm:$0xff]
  %v157 = vld [vmem:[#allocation4 + $0xb8] sm:$0xff]
  %v158 = vld [vmem:[#allocation4 + $0xc0] sm:$0xff]
  %v159 = vld [vmem:[#allocation4 + $0xc8] sm:$0xff]
  %v160 = vld [vmem:[#allocation4 + $0xd0] sm:$0xff]
  %v161 = vld [vmem:[#allocation4 + $0xd8] sm:$0xff]
  %v162 = vld [vmem:[#allocation4 + $0xe0] sm:$0xff]
  %v163 = vld [vmem:[#allocation4 + $0xe8] sm:$0xff]
  %v164 = vld [vmem:[#allocation4 + $0xf0] sm:$0xff]
  %v165 = vld [vmem:[#allocation4 + $0xf8] sm:$0xff]
  %v198 = vunpack.c.l.b16 %v134
  %v199 = vunpack.c.h.b16 %v134
  %v200 = vunpack.c.l.b16 %v135
  %v201 = vunpack.c.h.b16 %v135
  %v202 = vunpack.c.l.b16 %v136
  %v203 = vunpack.c.h.b16 %v136
  %v204 = vunpack.c.l.b16 %v137
  %v205 = vunpack.c.h.b16 %v137
  %v206 = vunpack.c.l.b16 %v138
  %v207 = vunpack.c.h.b16 %v138
  %v208 = vunpack.c.l.b16 %v139
  %v209 = vunpack.c.h.b16 %v139
  %v210 = vunpack.c.l.b16 %v140
  %v211 = vunpack.c.h.b16 %v140
  %v212 = vunpack.c.l.b16 %v141
  %v213 = vunpack.c.h.b16 %v141
  %v214 = vunpack.c.l.b16 %v142
  %v215 = vunpack.c.h.b16 %v142
  %v216 = vunpack.c.l.b16 %v143
  %v217 = vunpack.c.h.b16 %v143
  %v218 = vunpack.c.l.b16 %v144
  %v219 = vunpack.c.h.b16 %v144
  %v220 = vunpack.c.l.b16 %v145
  %v221 = vunpack.c.h.b16 %v145
  %v222 = vunpack.c.l.b16 %v146
  %v223 = vunpack.c.h.b16 %v146
  %v224 = vunpack.c.l.b16 %v147
  %v225 = vunpack.c.h.b16 %v147
  %v226 = vunpack.c.l.b16 %v148
  %v227 = vunpack.c.h.b16 %v148
  %v228 = vunpack.c.l.b16 %v149
  %v229 = vunpack.c.h.b16 %v149
  %v230 = vunpack.c.l.b16 %v150
  %v231 = vunpack.c.h.b16 %v150
  %v232 = vunpack.c.l.b16 %v151
  %v233 = vunpack.c.h.b16 %v151
  %v234 = vunpack.c.l.b16 %v152
  %v235 = vunpack.c.h.b16 %v152
  %v236 = vunpack.c.l.b16 %v153
  %v237 = vunpack.c.h.b16 %v153
  %v238 = vunpack.c.l.b16 %v154
  %v239 = vunpack.c.h.b16 %v154
  %v240 = vunpack.c.l.b16 %v155
  %v241 = vunpack.c.h.b16 %v155
  %v242 = vunpack.c.l.b16 %v156
  %v243 = vunpack.c.h.b16 %v156
  %v244 = vunpack.c.l.b16 %v157
  %v245 = vunpack.c.h.b16 %v157
  %v246 = vunpack.c.l.b16 %v158
  %v247 = vunpack.c.h.b16 %v158
  %v248 = vunpack.c.l.b16 %v159
  %v249 = vunpack.c.h.b16 %v159
  %v250 = vunpack.c.l.b16 %v160
  %v251 = vunpack.c.h.b16 %v160
  %v252 = vunpack.c.l.b16 %v161
  %v253 = vunpack.c.h.b16 %v161
  %v254 = vunpack.c.l.b16 %v162
  %v255 = vunpack.c.h.b16 %v162
  %v256 = vunpack.c.l.b16 %v163
  %v257 = vunpack.c.h.b16 %v163
  %v258 = vunpack.c.l.b16 %v164
  %v259 = vunpack.c.h.b16 %v164
  %v260 = vunpack.c.l.b16 %v165
  %v261 = vunpack.c.h.b16 %v165
  %v262 = vpack.c.b16 %v202, %v198
  %v263 = vpack.c.b16 %v203, %v199
  %v264 = vpack.c.b16 %v204, %v200
  %v265 = vpack.c.b16 %v205, %v201
  %v266 = vpack.c.b16 %v210, %v206
  %v267 = vpack.c.b16 %v211, %v207
  %v268 = vpack.c.b16 %v212, %v208
  %v269 = vpack.c.b16 %v213, %v209
  %v270 = vpack.c.b16 %v218, %v214
  %v271 = vpack.c.b16 %v219, %v215
  %v272 = vpack.c.b16 %v220, %v216
  %v273 = vpack.c.b16 %v221, %v217
  %v274 = vpack.c.b16 %v226, %v222
  %v275 = vpack.c.b16 %v227, %v223
  %v276 = vpack.c.b16 %v228, %v224
  %v277 = vpack.c.b16 %v229, %v225
  %v278 = vpack.c.b16 %v234, %v230
  %v279 = vpack.c.b16 %v235, %v231
  %v280 = vpack.c.b16 %v236, %v232
  %v281 = vpack.c.b16 %v237, %v233
  %v282 = vpack.c.b16 %v242, %v238
  %v283 = vpack.c.b16 %v243, %v239
  %v284 = vpack.c.b16 %v244, %v240
  %v285 = vpack.c.b16 %v245, %v241
  %v286 = vpack.c.b16 %v250, %v246
  %v287 = vpack.c.b16 %v251, %v247
  %v288 = vpack.c.b16 %v252, %v248
  %v289 = vpack.c.b16 %v253, %v249
  %v290 = vpack.c.b16 %v258, %v254
  %v291 = vpack.c.b16 %v259, %v255
  %v292 = vpack.c.b16 %v260, %v256
  %v293 = vpack.c.b16 %v261, %v257
  %326 = vmatprep.subr.bf16.mxu0 %v291
  %327 = vmatpush1.bf16.msra.mxu0 %v290
  %328 = vmatprep.subr.bf16.mxu0 %v287
  %329 = vmatpush1.bf16.msra.mxu0 %v286
  %330 = vmatprep.subr.bf16.mxu0 %v283
  %331 = vmatpush1.bf16.msra.mxu0 %v282
  %332 = vmatprep.subr.bf16.mxu0 %v279
  %333 = vmatpush1.bf16.msra.mxu0 %v278
  %334 = vmatprep.subr.bf16.mxu0 %v275
  %335 = vmatpush1.bf16.msra.mxu0 %v274
  %336 = vmatprep.subr.bf16.mxu0 %v271
  %337 = vmatpush1.bf16.msra.mxu0 %v270
  %338 = vmatprep.subr.bf16.mxu0 %v267
  %339 = vmatpush1.bf16.msra.mxu0 %v266
  %340 = vmatprep.subr.bf16.mxu0 %v263
  %341 = vmatpush1.bf16.msra.mxu0 %v262
  %342 = vmatprep.subr.bf16.mxu0 0
  %343 = vmatpush2.bf16.msra.mxu0 0
  %344 = vmatprep.subr.bf16.mxu0 0
  %345 = vmatpush2.bf16.msra.mxu0 0
  %346 = vmatprep.subr.bf16.mxu0 0
  %347 = vmatpush2.bf16.msra.mxu0 0
  %348 = vmatprep.subr.bf16.mxu0 0
  %349 = vmatpush2.bf16.msra.mxu0 0
  %350 = vmatprep.subr.bf16.mxu0 0
  %351 = vmatpush2.bf16.msra.mxu0 0
  %352 = vmatprep.subr.bf16.mxu0 0
  %353 = vmatpush2.bf16.msra.mxu0 0
  %354 = vmatprep.subr.bf16.mxu0 0
  %355 = vmatpush2.bf16.msra.mxu0 0
  %356 = vmatprep.subr.bf16.mxu0 0
  %357 = vmatpush2.bf16.msra.mxu0 0
  %358 = vmatprep.mubr.bf16.mxu0 0
  %359 = vmatmul.mubr.bf16.gmra.mxu0 %v133
  %v360 = vpop.f32.mrf.mxu0
  %v361 = vadd.f32 0.0, %v360
  %v362 = vpop.f32.mrf.mxu0
  %v363 = vadd.f32 0.0, %v362
  %v364 = vpop.f32.mrf.mxu0
  %v365 = vpop.f32.mrf.mxu0
  %366 = vdwg.mxu0
  %367 = vmatprep.subr.bf16.mxu0 %v293
  %368 = vmatpush1.bf16.msra.mxu0 %v292
  %369 = vmatprep.subr.bf16.mxu0 %v289
  %370 = vmatpush1.bf16.msra.mxu0 %v288
  %371 = vmatprep.subr.bf16.mxu0 %v285
  %372 = vmatpush1.bf16.msra.mxu0 %v284
  %373 = vmatprep.subr.bf16.mxu0 %v281
  %374 = vmatpush1.bf16.msra.mxu0 %v280
  %375 = vmatprep.subr.bf16.mxu0 %v277
  %376 = vmatpush1.bf16.msra.mxu0 %v276
  %377 = vmatprep.subr.bf16.mxu0 %v273
  %378 = vmatpush1.bf16.msra.mxu0 %v272
  %379 = vmatprep.subr.bf16.mxu0 %v269
  %380 = vmatpush1.bf16.msra.mxu0 %v268
  %381 = vmatprep.subr.bf16.mxu0 %v265
  %382 = vmatpush1.bf16.msra.mxu0 %v264
  %383 = vmatprep.subr.bf16.mxu0 0
  %384 = vmatpush2.bf16.msra.mxu0 0
  %385 = vmatprep.subr.bf16.mxu0 0
  %386 = vmatpush2.bf16.msra.mxu0 0
  %387 = vmatprep.subr.bf16.mxu0 0
  %388 = vmatpush2.bf16.msra.mxu0 0
  %389 = vmatprep.subr.bf16.mxu0 0
  %390 = vmatpush2.bf16.msra.mxu0 0
  %391 = vmatprep.subr.bf16.mxu0 0
  %392 = vmatpush2.bf16.msra.mxu0 0
  %393 = vmatprep.subr.bf16.mxu0 0
  %394 = vmatpush2.bf16.msra.mxu0 0
  %395 = vmatprep.subr.bf16.mxu0 0
  %396 = vmatpush2.bf16.msra.mxu0 0
  %397 = vmatprep.subr.bf16.mxu0 0
  %398 = vmatpush2.bf16.msra.mxu0 0
  %399 = vmatprep.mubr.bf16.mxu0 0
  %400 = vmatmul.mubr.bf16.gmra.mxu0 %v133
  %v401 = vpop.f32.mrf.mxu0
  %v402 = vadd.f32 0.0, %v401
  %v403 = vpop.f32.mrf.mxu0
  %v404 = vadd.f32 0.0, %v403
  %v405 = vpop.f32.mrf.mxu0
  %v406 = vpop.f32.mrf.mxu0
  %407 = vdwg.mxu0
  %v408 = vunpack.c.l.bf16 %v131
  %v409 = vunpack.c.h.bf16 %v131
  %v410 = vunpack.c.l.bf16 %v132
  %v411 = vunpack.c.h.bf16 %v132
  %v412 = vadd.f32 %v408, %v361
  %v413 = vadd.f32 %v409, %v363
  %v414 = vadd.f32 %v410, %v402
  %v415 = vadd.f32 %v411, %v404
  %v416 = vtanh.pop %v412
  %v417 = vmul.f32 %v413, 0.5
  %v418 = vtanh.pop %v417
  %v419 = vmul.f32 %v418, 0.5
  %v420 = vadd.f32 %v419, 0.5
  %v421 = vmul.f32 %v414, 0.5
  %v422 = vtanh.pop %v421
  %v423 = vmul.f32 %v422, 0.5
  %v424 = vadd.f32 %v423, 0.5
  %v425 = vmul.f32 %v415, 0.5
  %v426 = vtanh.pop %v425
  %v427 = vmul.f32 %v426, 0.5
  %v428 = vadd.f32 %v427, 0.5
  %v429 = vmul.f32 %v416, %v420
  %v430 = vmul.f32 %v130, %v424
  %v431 = vadd.f32 %v429, %v430
  %v432 = vtanh.pop %v431
  %v433 = vmul.f32 %v432, %v428
  %v434 = vpack.c.bf16 %v433, %v433
  %435 = vst [vmem:[%s2] sm:$0xf] %v434
  %s436 = scalar_lea.vmem %s0, 16
  %v437 = vld [vmem:[%s436] sm:$0xff]
  %v438 = vld [vmem:[%s436 + $0x8] sm:$0xff]
  %v439 = vld [vmem:[#allocation4] sm:$0xff]
  %v440 = vld [vmem:[#allocation4 + $0x8] sm:$0xff]
  %v441 = vld [vmem:[#allocation4 + $0x10] sm:$0xff]
  %v442 = vld [vmem:[#allocation4 + $0x18] sm:$0xff]
  %v443 = vld [vmem:[#allocation4 + $0x20] sm:$0xff]
  %v444 = vld [vmem:[#allocation4 + $0x28] sm:$0xff]
  %v445 = vld [vmem:[#allocation4 + $0x30] sm:$0xff]
  %v446 = vld [vmem:[#allocation4 + $0x38] sm:$0xff]
  %v447 = vld [vmem:[#allocation4 + $0x40] sm:$0xff]
  %v448 = vld [vmem:[#allocation4 + $0x48] sm:$0xff]
  %v449 = vld [vmem:[#allocation4 + $0x50] sm:$0xff]
  %v450 = vld [vmem:[#allocation4 + $0x58] sm:$0xff]
  %v451 = vld [vmem:[#allocation4 + $0x60] sm:$0xff]
  %v452 = vld [vmem:[#allocation4 + $0x68] sm:$0xff]
  %v453 = vld [vmem:[#allocation4 + $0x70] sm:$0xff]
  %v454 = vld [vmem:[#allocation4 + $0x78] sm:$0xff]
  %v455 = vld [vmem:[#allocation4 + $0x80] sm:$0xff]
  %v456 = vld [vmem:[#allocation4 + $0x88] sm:$0xff]
  %v457 = vld [vmem:[#allocation4 + $0x90] sm:$0xff]
  %v458 = vld [vmem:[#allocation4 + $0x98] sm:$0xff]
  %v459 = vld [vmem:[#allocation4 + $0xa0] sm:$0xff]
  %v460 = vld [vmem:[#allocation4 + $0xa8] sm:$0xff]
  %v461 = vld [vmem:[#allocation4 + $0xb0] sm:$0xff]
  %v462 = vld [vmem:[#allocation4 + $0xb8] sm:$0xff]
  %v463 = vld [vmem:[#allocation4 + $0xc0] sm:$0xff]
  %v464 = vld [vmem:[#allocation4 + $0xc8] sm:$0xff]
  %v465 = vld [vmem:[#allocation4 + $0xd0] sm:$0xff]
  %v466 = vld [vmem:[#allocation4 + $0xd8] sm:$0xff]
  %v467 = vld [vmem:[#allocation4 + $0xe0] sm:$0xff]
  %v468 = vld [vmem:[#allocation4 + $0xe8] sm:$0xff]
  %v469 = vld [vmem:[#allocation4 + $0xf0] sm:$0xff]
  %v470 = vld [vmem:[#allocation4 + $0xf8] sm:$0xff]
  %v503 = vunpack.c.l.b16 %v439
  %v504 = vunpack.c.h.b16 %v439
  %v505 = vunpack.c.l.b16 %v440
  %v506 = vunpack.c.h.b16 %v440
  %v507 = vunpack.c.l.b16 %v441
  %v508 = vunpack.c.h.b16 %v441
  %v509 = vunpack.c.l.b16 %v442
  %v510 = vunpack.c.h.b16 %v442
  %v511 = vunpack.c.l.b16 %v443
  %v512 = vunpack.c.h.b16 %v443
  %v513 = vunpack.c.l.b16 %v444
  %v514 = vunpack.c.h.b16 %v444
  %v515 = vunpack.c.l.b16 %v445
  %v516 = vunpack.c.h.b16 %v445
  %v517 = vunpack.c.l.b16 %v446
  %v518 = vunpack.c.h.b16 %v446
  %v519 = vunpack.c.l.b16 %v447
  %v520 = vunpack.c.h.b16 %v447
  %v521 = vunpack.c.l.b16 %v448
  %v522 = vunpack.c.h.b16 %v448
  %v523 = vunpack.c.l.b16 %v449
  %v524 = vunpack.c.h.b16 %v449
  %v525 = vunpack.c.l.b16 %v450
  %v526 = vunpack.c.h.b16 %v450
  %v527 = vunpack.c.l.b16 %v451
  %v528 = vunpack.c.h.b16 %v451
  %v529 = vunpack.c.l.b16 %v452
  %v530 = vunpack.c.h.b16 %v452
  %v531 = vunpack.c.l.b16 %v453
  %v532 = vunpack.c.h.b16 %v453
  %v533 = vunpack.c.l.b16 %v454
  %v534 = vunpack.c.h.b16 %v454
  %v535 = vunpack.c.l.b16 %v455
  %v536 = vunpack.c.h.b16 %v455
  %v537 = vunpack.c.l.b16 %v456
  %v538 = vunpack.c.h.b16 %v456
  %v539 = vunpack.c.l.b16 %v457
  %v540 = vunpack.c.h.b16 %v457
  %v541 = vunpack.c.l.b16 %v458
  %v542 = vunpack.c.h.b16 %v458
  %v543 = vunpack.c.l.b16 %v459
  %v544 = vunpack.c.h.b16 %v459
  %v545 = vunpack.c.l.b16 %v460
  %v546 = vunpack.c.h.b16 %v460
  %v547 = vunpack.c.l.b16 %v461
  %v548 = vunpack.c.h.b16 %v461
  %v549 = vunpack.c.l.b16 %v462
  %v550 = vunpack.c.h.b16 %v462
  %v551 = vunpack.c.l.b16 %v463
  %v552 = vunpack.c.h.b16 %v463
  %v553 = vunpack.c.l.b16 %v464
  %v554 = vunpack.c.h.b16 %v464
  %v555 = vunpack.c.l.b16 %v465
  %v556 = vunpack.c.h.b16 %v465
  %v557 = vunpack.c.l.b16 %v466
  %v558 = vunpack.c.h.b16 %v466
  %v559 = vunpack.c.l.b16 %v467
  %v560 = vunpack.c.h.b16 %v467
  %v561 = vunpack.c.l.b16 %v468
  %v562 = vunpack.c.h.b16 %v468
  %v563 = vunpack.c.l.b16 %v469
  %v564 = vunpack.c.h.b16 %v469
  %v565 = vunpack.c.l.b16 %v470
  %v566 = vunpack.c.h.b16 %v470
  %v567 = vpack.c.b16 %v507, %v503
  %v568 = vpack.c.b16 %v508, %v504
  %v569 = vpack.c.b16 %v509, %v505
  %v570 = vpack.c.b16 %v510, %v506
  %v571 = vpack.c.b16 %v515, %v511
  %v572 = vpack.c.b16 %v516, %v512
  %v573 = vpack.c.b16 %v517, %v513
  %v574 = vpack.c.b16 %v518, %v514
  %v575 = vpack.c.b16 %v523, %v519
  %v576 = vpack.c.b16 %v524, %v520
  %v577 = vpack.c.b16 %v525, %v521
  %v578 = vpack.c.b16 %v526, %v522
  %v579 = vpack.c.b16 %v531, %v527
  %v580 = vpack.c.b16 %v532, %v528
  %v581 = vpack.c.b16 %v533, %v529
  %v582 = vpack.c.b16 %v534, %v530
  %v583 = vpack.c.b16 %v539, %v535
  %v584 = vpack.c.b16 %v540, %v536
  %v585 = vpack.c.b16 %v541, %v537
  %v586 = vpack.c.b16 %v542, %v538
  %v587 = vpack.c.b16 %v547, %v543
  %v588 = vpack.c.b16 %v548, %v544
  %v589 = vpack.c.b16 %v549, %v545
  %v590 = vpack.c.b16 %v550, %v546
  %v591 = vpack.c.b16 %v555, %v551
  %v592 = vpack.c.b16 %v556, %v552
  %v593 = vpack.c.b16 %v557, %v553
  %v594 = vpack.c.b16 %v558, %v554
  %v595 = vpack.c.b16 %v563, %v559
  %v596 = vpack.c.b16 %v564, %v560
  %v597 = vpack.c.b16 %v565, %v561
  %v598 = vpack.c.b16 %v566, %v562
  %631 = vmatprep.subr.bf16.mxu0 %v596
  %632 = vmatpush1.bf16.msra.mxu0 %v595
  %633 = vmatprep.subr.bf16.mxu0 %v592
  %634 = vmatpush1.bf16.msra.mxu0 %v591
  %635 = vmatprep.subr.bf16.mxu0 %v588
  %636 = vmatpush1.bf16.msra.mxu0 %v587
  %637 = vmatprep.subr.bf16.mxu0 %v584
  %638 = vmatpush1.bf16.msra.mxu0 %v583
  %639 = vmatprep.subr.bf16.mxu0 %v580
  %640 = vmatpush1.bf16.msra.mxu0 %v579
  %641 = vmatprep.subr.bf16.mxu0 %v576
  %642 = vmatpush1.bf16.msra.mxu0 %v575
  %643 = vmatprep.subr.bf16.mxu0 %v572
  %644 = vmatpush1.bf16.msra.mxu0 %v571
  %645 = vmatprep.subr.bf16.mxu0 %v568
  %646 = vmatpush1.bf16.msra.mxu0 %v567
  %647 = vmatprep.subr.bf16.mxu0 0
  %648 = vmatpush2.bf16.msra.mxu0 0
  %649 = vmatprep.subr.bf16.mxu0 0
  %650 = vmatpush2.bf16.msra.mxu0 0
  %651 = vmatprep.subr.bf16.mxu0 0
  %652 = vmatpush2.bf16.msra.mxu0 0
  %653 = vmatprep.subr.bf16.mxu0 0
  %654 = vmatpush2.bf16.msra.mxu0 0
  %655 = vmatprep.subr.bf16.mxu0 0
  %656 = vmatpush2.bf16.msra.mxu0 0
  %657 = vmatprep.subr.bf16.mxu0 0
  %658 = vmatpush2.bf16.msra.mxu0 0
  %659 = vmatprep.subr.bf16.mxu0 0
  %660 = vmatpush2.bf16.msra.mxu0 0
  %661 = vmatprep.subr.bf16.mxu0 0
  %662 = vmatpush2.bf16.msra.mxu0 0
  %663 = vmatprep.mubr.bf16.mxu0 0
  %664 = vmatmul.mubr.bf16.gmra.mxu0 %v434
  %v665 = vpop.f32.mrf.mxu0
  %v666 = vadd.f32 0.0, %v665
  %v667 = vpop.f32.mrf.mxu0
  %v668 = vadd.f32 0.0, %v667
  %v669 = vpop.f32.mrf.mxu0
  %v670 = vpop.f32.mrf.mxu0
  %671 = vdwg.mxu0
  %672 = vmatprep.subr.bf16.mxu0 %v598
  %673 = vmatpush1.bf16.msra.mxu0 %v597
  %674 = vmatprep.subr.bf16.mxu0 %v594
  %675 = vmatpush1.bf16.msra.mxu0 %v593
  %676 = vmatprep.subr.bf16.mxu0 %v590
  %677 = vmatpush1.bf16.msra.mxu0 %v589
  %678 = vmatprep.subr.bf16.mxu0 %v586
  %679 = vmatpush1.bf16.msra.mxu0 %v585
  %680 = vmatprep.subr.bf16.mxu0 %v582
  %681 = vmatpush1.bf16.msra.mxu0 %v581
  %682 = vmatprep.subr.bf16.mxu0 %v578
  %683 = vmatpush1.bf16.msra.mxu0 %v577
  %684 = vmatprep.subr.bf16.mxu0 %v574
  %685 = vmatpush1.bf16.msra.mxu0 %v573
  %686 = vmatprep.subr.bf16.mxu0 %v570
  %687 = vmatpush1.bf16.msra.mxu0 %v569
  %688 = vmatprep.subr.bf16.mxu0 0
  %689 = vmatpush2.bf16.msra.mxu0 0
  %690 = vmatprep.subr.bf16.mxu0 0
  %691 = vmatpush2.bf16.msra.mxu0 0
  %692 = vmatprep.subr.bf16.mxu0 0
  %693 = vmatpush2.bf16.msra.mxu0 0
  %694 = vmatprep.subr.bf16.mxu0 0
  %695 = vmatpush2.bf16.msra.mxu0 0
  %696 = vmatprep.subr.bf16.mxu0 0
  %697 = vmatpush2.bf16.msra.mxu0 0
  %698 = vmatprep.subr.bf16.mxu0 0
  %699 = vmatpush2.bf16.msra.mxu0 0
  %700 = vmatprep.subr.bf16.mxu0 0
  %701 = vmatpush2.bf16.msra.mxu0 0
  %702 = vmatprep.subr.bf16.mxu0 0
  %703 = vmatpush2.bf16.msra.mxu0 0
  %704 = vmatprep.mubr.bf16.mxu0 0
  %705 = vmatmul.mubr.bf16.gmra.mxu0 %v434
  %v706 = vpop.f32.mrf.mxu0
  %v707 = vadd.f32 0.0, %v706
  %v708 = vpop.f32.mrf.mxu0
  %v709 = vadd.f32 0.0, %v708
  %v710 = vpop.f32.mrf.mxu0
  %v711 = vpop.f32.mrf.mxu0
  %712 = vdwg.mxu0
  %v713 = vunpack.c.l.bf16 %v437
  %v714 = vunpack.c.h.bf16 %v437
  %v715 = vunpack.c.l.bf16 %v438
  %v716 = vunpack.c.h.bf16 %v438
  %v717 = vadd.f32 %v713, %v666
  %v718 = vadd.f32 %v714, %v668
  %v719 = vadd.f32 %v715, %v707
  %v720 = vadd.f32 %v716, %v709
  %v721 = vtanh.pop %v717
  %v722 = vmul.f32 %v718, 0.5
  %v723 = vtanh.pop %v722
  %v724 = vmul.f32 %v723, 0.5
  %v725 = vadd.f32 %v724, 0.5
  %v726 = vmul.f32 %v719, 0.5
  %v727 = vtanh.pop %v726
  %v728 = vmul.f32 %v727, 0.5
  %v729 = vadd.f32 %v728, 0.5
  %v730 = vmul.f32 %v720, 0.5
  %v731 = vtanh.pop %v730
  %v732 = vmul.f32 %v731, 0.5
  %v733 = vadd.f32 %v732, 0.5
  %v734 = vmul.f32 %v721, %v725
  %v735 = vmul.f32 %v431, %v729
  %v736 = vadd.f32 %v734, %v735
  %v737 = vtanh.pop %v736
  %v738 = vmul.f32 %v737, %v733
  %v739 = vpack.c.bf16 %v738, %v738
  %s740 = scalar_lea.vmem %s2, 4
  %741 = vst [vmem:[%s740] sm:$0xf] %v739
  %s742 = scalar_lea.vmem %s0, 32
  %v743 = vld [vmem:[%s742] sm:$0xff]
  %v744 = vld [vmem:[%s742 + $0x8] sm:$0xff]
  %v745 = vld [vmem:[#allocation4] sm:$0xff]
  %v746 = vld [vmem:[#allocation4 + $0x8] sm:$0xff]
  %v747 = vld [vmem:[#allocation4 + $0x10] sm:$0xff]
  %v748 = vld [vmem:[#allocation4 + $0x18] sm:$0xff]
  %v749 = vld [vmem:[#allocation4 + $0x20] sm:$0xff]
  %v750 = vld [vmem:[#allocation4 + $0x28] sm:$0xff]
  %v751 = vld [vmem:[#allocation4 + $0x30] sm:$0xff]
  %v752 = vld [vmem:[#allocation4 + $0x38] sm:$0xff]
  %v753 = vld [vmem:[#allocation4 + $0x40] sm:$0xff]
  %v754 = vld [vmem:[#allocation4 + $0x48] sm:$0xff]
  %v755 = vld [vmem:[#allocation4 + $0x50] sm:$0xff]
  %v756 = vld [vmem:[#allocation4 + $0x58] sm:$0xff]
  %v757 = vld [vmem:[#allocation4 + $0x60] sm:$0xff]
  %v758 = vld [vmem:[#allocation4 + $0x68] sm:$0xff]
  %v759 = vld [vmem:[#allocation4 + $0x70] sm:$0xff]
  %v760 = vld [vmem:[#allocation4 + $0x78] sm:$0xff]
  %v761 = vld [vmem:[#allocation4 + $0x80] sm:$0xff]
  %v762 = vld [vmem:[#allocation4 + $0x88] sm:$0xff]
  %v763 = vld [vmem:[#allocation4 + $0x90] sm:$0xff]
  %v764 = vld [vmem:[#allocation4 + $0x98] sm:$0xff]
  %v765 = vld [vmem:[#allocation4 + $0xa0] sm:$0xff]
  %v766 = vld [vmem:[#allocation4 + $0xa8] sm:$0xff]
  %v767 = vld [vmem:[#allocation4 + $0xb0] sm:$0xff]
  %v768 = vld [vmem:[#allocation4 + $0xb8] sm:$0xff]
  %v769 = vld [vmem:[#allocation4 + $0xc0] sm:$0xff]
  %v770 = vld [vmem:[#allocation4 + $0xc8] sm:$0xff]
  %v771 = vld [vmem:[#allocation4 + $0xd0] sm:$0xff]
  %v772 = vld [vmem:[#allocation4 + $0xd8] sm:$0xff]
  %v773 = vld [vmem:[#allocation4 + $0xe0] sm:$0xff]
  %v774 = vld [vmem:[#allocation4 + $0xe8] sm:$0xff]
  %v775 = vld [vmem:[#allocation4 + $0xf0] sm:$0xff]
  %v776 = vld [vmem:[#allocation4 + $0xf8] sm:$0xff]
  %v809 = vunpack.c.l.b16 %v745
  %v810 = vunpack.c.h.b16 %v745
  %v811 = vunpack.c.l.b16 %v746
  %v812 = vunpack.c.h.b16 %v746
  %v813 = vunpack.c.l.b16 %v747
  %v814 = vunpack.c.h.b16 %v747
  %v815 = vunpack.c.l.b16 %v748
  %v816 = vunpack.c.h.b16 %v748
  %v817 = vunpack.c.l.b16 %v749
  %v818 = vunpack.c.h.b16 %v749
  %v819 = vunpack.c.l.b16 %v750
  %v820 = vunpack.c.h.b16 %v750
  %v821 = vunpack.c.l.b16 %v751
  %v822 = vunpack.c.h.b16 %v751
  %v823 = vunpack.c.l.b16 %v752
  %v824 = vunpack.c.h.b16 %v752
  %v825 = vunpack.c.l.b16 %v753
  %v826 = vunpack.c.h.b16 %v753
  %v827 = vunpack.c.l.b16 %v754
  %v828 = vunpack.c.h.b16 %v754
  %v829 = vunpack.c.l.b16 %v755
  %v830 = vunpack.c.h.b16 %v755
  %v831 = vunpack.c.l.b16 %v756
  %v832 = vunpack.c.h.b16 %v756
  %v833 = vunpack.c.l.b16 %v757
  %v834 = vunpack.c.h.b16 %v757
  %v835 = vunpack.c.l.b16 %v758
  %v836 = vunpack.c.h.b16 %v758
  %v837 = vunpack.c.l.b16 %v759
  %v838 = vunpack.c.h.b16 %v759
  %v839 = vunpack.c.l.b16 %v760
  %v840 = vunpack.c.h.b16 %v760
  %v841 = vunpack.c.l.b16 %v761
  %v842 = vunpack.c.h.b16 %v761
  %v843 = vunpack.c.l.b16 %v762
  %v844 = vunpack.c.h.b16 %v762
  %v845 = vunpack.c.l.b16 %v763
  %v846 = vunpack.c.h.b16 %v763
  %v847 = vunpack.c.l.b16 %v764
  %v848 = vunpack.c.h.b16 %v764
  %v849 = vunpack.c.l.b16 %v765
  %v850 = vunpack.c.h.b16 %v765
  %v851 = vunpack.c.l.b16 %v766
  %v852 = vunpack.c.h.b16 %v766
  %v853 = vunpack.c.l.b16 %v767
  %v854 = vunpack.c.h.b16 %v767
  %v855 = vunpack.c.l.b16 %v768
  %v856 = vunpack.c.h.b16 %v768
  %v857 = vunpack.c.l.b16 %v769
  %v858 = vunpack.c.h.b16 %v769
  %v859 = vunpack.c.l.b16 %v770
  %v860 = vunpack.c.h.b16 %v770
  %v861 = vunpack.c.l.b16 %v771
  %v862 = vunpack.c.h.b16 %v771
  %v863 = vunpack.c.l.b16 %v772
  %v864 = vunpack.c.h.b16 %v772
  %v865 = vunpack.c.l.b16 %v773
  %v866 = vunpack.c.h.b16 %v773
  %v867 = vunpack.c.l.b16 %v774
  %v868 = vunpack.c.h.b16 %v774
  %v869 = vunpack.c.l.b16 %v775
  %v870 = vunpack.c.h.b16 %v775
  %v871 = vunpack.c.l.b16 %v776
  %v872 = vunpack.c.h.b16 %v776
  %v873 = vpack.c.b16 %v813, %v809
  %v874 = vpack.c.b16 %v814, %v810
  %v875 = vpack.c.b16 %v815, %v811
  %v876 = vpack.c.b16 %v816, %v812
  %v877 = vpack.c.b16 %v821, %v817
  %v878 = vpack.c.b16 %v822, %v818
  %v879 = vpack.c.b16 %v823, %v819
  %v880 = vpack.c.b16 %v824, %v820
  %v881 = vpack.c.b16 %v829, %v825
  %v882 = vpack.c.b16 %v830, %v826
  %v883 = vpack.c.b16 %v831, %v827
  %v884 = vpack.c.b16 %v832, %v828
  %v885 = vpack.c.b16 %v837, %v833
  %v886 = vpack.c.b16 %v838, %v834
  %v887 = vpack.c.b16 %v839, %v835
  %v888 = vpack.c.b16 %v840, %v836
  %v889 = vpack.c.b16 %v845, %v841
  %v890 = vpack.c.b16 %v846, %v842
  %v891 = vpack.c.b16 %v847, %v843
  %v892 = vpack.c.b16 %v848, %v844
  %v893 = vpack.c.b16 %v853, %v849
  %v894 = vpack.c.b16 %v854, %v850
  %v895 = vpack.c.b16 %v855, %v851
  %v896 = vpack.c.b16 %v856, %v852
  %v897 = vpack.c.b16 %v861, %v857
  %v898 = vpack.c.b16 %v862, %v858
  %v899 = vpack.c.b16 %v863, %v859
  %v900 = vpack.c.b16 %v864, %v860
  %v901 = vpack.c.b16 %v869, %v865
  %v902 = vpack.c.b16 %v870, %v866
  %v903 = vpack.c.b16 %v871, %v867
  %v904 = vpack.c.b16 %v872, %v868
  %937 = vmatprep.subr.bf16.mxu0 %v902
  %938 = vmatpush1.bf16.msra.mxu0 %v901
  %939 = vmatprep.subr.bf16.mxu0 %v898
  %940 = vmatpush1.bf16.msra.mxu0 %v897
  %941 = vmatprep.subr.bf16.mxu0 %v894
  %942 = vmatpush1.bf16.msra.mxu0 %v893
  %943 = vmatprep.subr.bf16.mxu0 %v890
  %944 = vmatpush1.bf16.msra.mxu0 %v889
  %945 = vmatprep.subr.bf16.mxu0 %v886
  %946 = vmatpush1.bf16.msra.mxu0 %v885
  %947 = vmatprep.subr.bf16.mxu0 %v882
  %948 = vmatpush1.bf16.msra.mxu0 %v881
  %949 = vmatprep.subr.bf16.mxu0 %v878
  %950 = vmatpush1.bf16.msra.mxu0 %v877
  %951 = vmatprep.subr.bf16.mxu0 %v874
  %952 = vmatpush1.bf16.msra.mxu0 %v873
  %953 = vmatprep.subr.bf16.mxu0 0
  %954 = vmatpush2.bf16.msra.mxu0 0
  %955 = vmatprep.subr.bf16.mxu0 0
  %956 = vmatpush2.bf16.msra.mxu0 0
  %957 = vmatprep.subr.bf16.mxu0 0
  %958 = vmatpush2.bf16.msra.mxu0 0
  %959 = vmatprep.subr.bf16.mxu0 0
  %960 = vmatpush2.bf16.msra.mxu0 0
  %961 = vmatprep.subr.bf16.mxu0 0
  %962 = vmatpush2.bf16.msra.mxu0 0
  %963 = vmatprep.subr.bf16.mxu0 0
  %964 = vmatpush2.bf16.msra.mxu0 0
  %965 = vmatprep.subr.bf16.mxu0 0
  %966 = vmatpush2.bf16.msra.mxu0 0
  %967 = vmatprep.subr.bf16.mxu0 0
  %968 = vmatpush2.bf16.msra.mxu0 0
  %969 = vmatprep.mubr.bf16.mxu0 0
  %970 = vmatmul.mubr.bf16.gmra.mxu0 %v739
  %v971 = vpop.f32.mrf.mxu0
  %v972 = vadd.f32 0.0, %v971
  %v973 = vpop.f32.mrf.mxu0
  %v974 = vadd.f32 0.0, %v973
  %v975 = vpop.f32.mrf.mxu0
  %v976 = vpop.f32.mrf.mxu0
  %977 = vdwg.mxu0
  %978 = vmatprep.subr.bf16.mxu0 %v904
  %979 = vmatpush1.bf16.msra.mxu0 %v903
  %980 = vmatprep.subr.bf16.mxu0 %v900
  %981 = vmatpush1.bf16.msra.mxu0 %v899
  %982 = vmatprep.subr.bf16.mxu0 %v896
  %983 = vmatpush1.bf16.msra.mxu0 %v895
  %984 = vmatprep.subr.bf16.mxu0 %v892
  %985 = vmatpush1.bf16.msra.mxu0 %v891
  %986 = vmatprep.subr.bf16.mxu0 %v888
  %987 = vmatpush1.bf16.msra.mxu0 %v887
  %988 = vmatprep.subr.bf16.mxu0 %v884
  %989 = vmatpush1.bf16.msra.mxu0 %v883
  %990 = vmatprep.subr.bf16.mxu0 %v880
  %991 = vmatpush1.bf16.msra.mxu0 %v879
  %992 = vmatprep.subr.bf16.mxu0 %v876
  %993 = vmatpush1.bf16.msra.mxu0 %v875
  %994 = vmatprep.subr.bf16.mxu0 0
  %995 = vmatpush2.bf16.msra.mxu0 0
  %996 = vmatprep.subr.bf16.mxu0 0
  %997 = vmatpush2.bf16.msra.mxu0 0
  %998 = vmatprep.subr.bf16.mxu0 0
  %999 = vmatpush2.bf16.msra.mxu0 0
  %1000 = vmatprep.subr.bf16.mxu0 0
  %1001 = vmatpush2.bf16.msra.mxu0 0
  %1002 = vmatprep.subr.bf16.mxu0 0
  %1003 = vmatpush2.bf16.msra.mxu0 0
  %1004 = vmatprep.subr.bf16.mxu0 0
  %1005 = vmatpush2.bf16.msra.mxu0 0
  %1006 = vmatprep.subr.bf16.mxu0 0
  %1007 = vmatpush2.bf16.msra.mxu0 0
  %1008 = vmatprep.subr.bf16.mxu0 0
  %1009 = vmatpush2.bf16.msra.mxu0 0
  %1010 = vmatprep.mubr.bf16.mxu0 0
  %1011 = vmatmul.mubr.bf16.gmra.mxu0 %v739
  %v1012 = vpop.f32.mrf.mxu0
  %v1013 = vadd.f32 0.0, %v1012
  %v1014 = vpop.f32.mrf.mxu0
  %v1015 = vadd.f32 0.0, %v1014
  %v1016 = vpop.f32.mrf.mxu0
  %v1017 = vpop.f32.mrf.mxu0
  %1018 = vdwg.mxu0
  %v1019 = vunpack.c.l.bf16 %v743
  %v1020 = vunpack.c.h.bf16 %v743
  %v1021 = vunpack.c.l.bf16 %v744
  %v1022 = vunpack.c.h.bf16 %v744
  %v1023 = vadd.f32 %v1019, %v972
  %v1024 = vadd.f32 %v1020, %v974
  %v1025 = vadd.f32 %v1021, %v1013
  %v1026 = vadd.f32 %v1022, %v1015
  %v1027 = vtanh.pop %v1023
  %v1028 = vmul.f32 %v1024, 0.5
  %v1029 = vtanh.pop %v1028
  %v1030 = vmul.f32 %v1029, 0.5
  %v1031 = vadd.f32 %v1030, 0.5
  %v1032 = vmul.f32 %v1025, 0.5
  %v1033 = vtanh.pop %v1032
  %v1034 = vmul.f32 %v1033, 0.5
  %v1035 = vadd.f32 %v1034, 0.5
  %v1036 = vmul.f32 %v1026, 0.5
  %v1037 = vtanh.pop %v1036
  %v1038 = vmul.f32 %v1037, 0.5
  %v1039 = vadd.f32 %v1038, 0.5
  %v1040 = vmul.f32 %v1027, %v1031
  %v1041 = vmul.f32 %v736, %v1035
  %v1042 = vadd.f32 %v1040, %v1041
  %v1043 = vtanh.pop %v1042
  %v1044 = vmul.f32 %v1043, %v1039
  %v1045 = vpack.c.bf16 %v1044, %v1044
  %s1046 = scalar_lea.vmem %s2, 8
  %1047 = vst [vmem:[%s1046] sm:$0xf] %v1045
  %s1048 = scalar_lea.vmem %s0, 48
  %v1049 = vld [vmem:[%s1048] sm:$0xff]
  %v1050 = vld [vmem:[%s1048 + $0x8] sm:$0xff]
  %v1051 = vld [vmem:[#allocation4] sm:$0xff]
  %v1052 = vld [vmem:[#allocation4 + $0x8] sm:$0xff]
  %v1053 = vld [vmem:[#allocation4 + $0x10] sm:$0xff]
  %v1054 = vld [vmem:[#allocation4 + $0x18] sm:$0xff]
  %v1055 = vld [vmem:[#allocation4 + $0x20] sm:$0xff]
  %v1056 = vld [vmem:[#allocation4 + $0x28] sm:$0xff]
  %v1057 = vld [vmem:[#allocation4 + $0x30] sm:$0xff]
  %v1058 = vld [vmem:[#allocation4 + $0x38] sm:$0xff]
  %v1059 = vld [vmem:[#allocation4 + $0x40] sm:$0xff]
  %v1060 = vld [vmem:[#allocation4 + $0x48] sm:$0xff]
  %v1061 = vld [vmem:[#allocation4 + $0x50] sm:$0xff]
  %v1062 = vld [vmem:[#allocation4 + $0x58] sm:$0xff]
  %v1063 = vld [vmem:[#allocation4 + $0x60] sm:$0xff]
  %v1064 = vld [vmem:[#allocation4 + $0x68] sm:$0xff]
  %v1065 = vld [vmem:[#allocation4 + $0x70] sm:$0xff]
  %v1066 = vld [vmem:[#allocation4 + $0x78] sm:$0xff]
  %v1067 = vld [vmem:[#allocation4 + $0x80] sm:$0xff]
  %v1068 = vld [vmem:[#allocation4 + $0x88] sm:$0xff]
  %v1069 = vld [vmem:[#allocation4 + $0x90] sm:$0xff]
  %v1070 = vld [vmem:[#allocation4 + $0x98] sm:$0xff]
  %v1071 = vld [vmem:[#allocation4 + $0xa0] sm:$0xff]
  %v1072 = vld [vmem:[#allocation4 + $0xa8] sm:$0xff]
  %v1073 = vld [vmem:[#allocation4 + $0xb0] sm:$0xff]
  %v1074 = vld [vmem:[#allocation4 + $0xb8] sm:$0xff]
  %v1075 = vld [vmem:[#allocation4 + $0xc0] sm:$0xff]
  %v1076 = vld [vmem:[#allocation4 + $0xc8] sm:$0xff]
  %v1077 = vld [vmem:[#allocation4 + $0xd0] sm:$0xff]
  %v1078 = vld [vmem:[#allocation4 + $0xd8] sm:$0xff]
  %v1079 = vld [vmem:[#allocation4 + $0xe0] sm:$0xff]
  %v1080 = vld [vmem:[#allocation4 + $0xe8] sm:$0xff]
  %v1081 = vld [vmem:[#allocation4 + $0xf0] sm:$0xff]
  %v1082 = vld [vmem:[#allocation4 + $0xf8] sm:$0xff]
  %v1115 = vunpack.c.l.b16 %v1051
  %v1116 = vunpack.c.h.b16 %v1051
  %v1117 = vunpack.c.l.b16 %v1052
  %v1118 = vunpack.c.h.b16 %v1052
  %v1119 = vunpack.c.l.b16 %v1053
  %v1120 = vunpack.c.h.b16 %v1053
  %v1121 = vunpack.c.l.b16 %v1054
  %v1122 = vunpack.c.h.b16 %v1054
  %v1123 = vunpack.c.l.b16 %v1055
  %v1124 = vunpack.c.h.b16 %v1055
  %v1125 = vunpack.c.l.b16 %v1056
  %v1126 = vunpack.c.h.b16 %v1056
  %v1127 = vunpack.c.l.b16 %v1057
  %v1128 = vunpack.c.h.b16 %v1057
  %v1129 = vunpack.c.l.b16 %v1058
  %v1130 = vunpack.c.h.b16 %v1058
  %v1131 = vunpack.c.l.b16 %v1059
  %v1132 = vunpack.c.h.b16 %v1059
  %v1133 = vunpack.c.l.b16 %v1060
  %v1134 = vunpack.c.h.b16 %v1060
  %v1135 = vunpack.c.l.b16 %v1061
  %v1136 = vunpack.c.h.b16 %v1061
  %v1137 = vunpack.c.l.b16 %v1062
  %v1138 = vunpack.c.h.b16 %v1062
  %v1139 = vunpack.c.l.b16 %v1063
  %v1140 = vunpack.c.h.b16 %v1063
  %v1141 = vunpack.c.l.b16 %v1064
  %v1142 = vunpack.c.h.b16 %v1064
  %v1143 = vunpack.c.l.b16 %v1065
  %v1144 = vunpack.c.h.b16 %v1065
  %v1145 = vunpack.c.l.b16 %v1066
  %v1146 = vunpack.c.h.b16 %v1066
  %v1147 = vunpack.c.l.b16 %v1067
  %v1148 = vunpack.c.h.b16 %v1067
  %v1149 = vunpack.c.l.b16 %v1068
  %v1150 = vunpack.c.h.b16 %v1068
  %v1151 = vunpack.c.l.b16 %v1069
  %v1152 = vunpack.c.h.b16 %v1069
  %v1153 = vunpack.c.l.b16 %v1070
  %v1154 = vunpack.c.h.b16 %v1070
  %v1155 = vunpack.c.l.b16 %v1071
  %v1156 = vunpack.c.h.b16 %v1071
  %v1157 = vunpack.c.l.b16 %v1072
  %v1158 = vunpack.c.h.b16 %v1072
  %v1159 = vunpack.c.l.b16 %v1073
  %v1160 = vunpack.c.h.b16 %v1073
  %v1161 = vunpack.c.l.b16 %v1074
  %v1162 = vunpack.c.h.b16 %v1074
  %v1163 = vunpack.c.l.b16 %v1075
  %v1164 = vunpack.c.h.b16 %v1075
  %v1165 = vunpack.c.l.b16 %v1076
  %v1166 = vunpack.c.h.b16 %v1076
  %v1167 = vunpack.c.l.b16 %v1077
  %v1168 = vunpack.c.h.b16 %v1077
  %v1169 = vunpack.c.l.b16 %v1078
  %v1170 = vunpack.c.h.b16 %v1078
  %v1171 = vunpack.c.l.b16 %v1079
  %v1172 = vunpack.c.h.b16 %v1079
  %v1173 = vunpack.c.l.b16 %v1080
  %v1174 = vunpack.c.h.b16 %v1080
  %v1175 = vunpack.c.l.b16 %v1081
  %v1176 = vunpack.c.h.b16 %v1081
  %v1177 = vunpack.c.l.b16 %v1082
  %v1178 = vunpack.c.h.b16 %v1082
  %v1179 = vpack.c.b16 %v1119, %v1115
  %v1180 = vpack.c.b16 %v1120, %v1116
  %v1181 = vpack.c.b16 %v1121, %v1117
  %v1182 = vpack.c.b16 %v1122, %v1118
  %v1183 = vpack.c.b16 %v1127, %v1123
  %v1184 = vpack.c.b16 %v1128, %v1124
  %v1185 = vpack.c.b16 %v1129, %v1125
  %v1186 = vpack.c.b16 %v1130, %v1126
  %v1187 = vpack.c.b16 %v1135, %v1131
  %v1188 = vpack.c.b16 %v1136, %v1132
  %v1189 = vpack.c.b16 %v1137, %v1133
  %v1190 = vpack.c.b16 %v1138, %v1134
  %v1191 = vpack.c.b16 %v1143, %v1139
  %v1192 = vpack.c.b16 %v1144, %v1140
  %v1193 = vpack.c.b16 %v1145, %v1141
  %v1194 = vpack.c.b16 %v1146, %v1142
  %v1195 = vpack.c.b16 %v1151, %v1147
  %v1196 = vpack.c.b16 %v1152, %v1148
  %v1197 = vpack.c.b16 %v1153, %v1149
  %v1198 = vpack.c.b16 %v1154, %v1150
  %v1199 = vpack.c.b16 %v1159, %v1155
  %v1200 = vpack.c.b16 %v1160, %v1156
  %v1201 = vpack.c.b16 %v1161, %v1157
  %v1202 = vpack.c.b16 %v1162, %v1158
  %v1203 = vpack.c.b16 %v1167, %v1163
  %v1204 = vpack.c.b16 %v1168, %v1164
  %v1205 = vpack.c.b16 %v1169, %v1165
  %v1206 = vpack.c.b16 %v1170, %v1166
  %v1207 = vpack.c.b16 %v1175, %v1171
  %v1208 = vpack.c.b16 %v1176, %v1172
  %v1209 = vpack.c.b16 %v1177, %v1173
  %v1210 = vpack.c.b16 %v1178, %v1174
  %1243 = vmatprep.subr.bf16.mxu0 %v1208
  %1244 = vmatpush1.bf16.msra.mxu0 %v1207
  %1245 = vmatprep.subr.bf16.mxu0 %v1204
  %1246 = vmatpush1.bf16.msra.mxu0 %v1203
  %1247 = vmatprep.subr.bf16.mxu0 %v1200
  %1248 = vmatpush1.bf16.msra.mxu0 %v1199
  %1249 = vmatprep.subr.bf16.mxu0 %v1196
  %1250 = vmatpush1.bf16.msra.mxu0 %v1195
  %1251 = vmatprep.subr.bf16.mxu0 %v1192
  %1252 = vmatpush1.bf16.msra.mxu0 %v1191
  %1253 = vmatprep.subr.bf16.mxu0 %v1188
  %1254 = vmatpush1.bf16.msra.mxu0 %v1187
  %1255 = vmatprep.subr.bf16.mxu0 %v1184
  %1256 = vmatpush1.bf16.msra.mxu0 %v1183
  %1257 = vmatprep.subr.bf16.mxu0 %v1180
  %1258 = vmatpush1.bf16.msra.mxu0 %v1179
  %1259 = vmatprep.subr.bf16.mxu0 0
  %1260 = vmatpush2.bf16.msra.mxu0 0
  %1261 = vmatprep.subr.bf16.mxu0 0
  %1262 = vmatpush2.bf16.msra.mxu0 0
  %1263 = vmatprep.subr.bf16.mxu0 0
  %1264 = vmatpush2.bf16.msra.mxu0 0
  %1265 = vmatprep.subr.bf16.mxu0 0
  %1266 = vmatpush2.bf16.msra.mxu0 0
  %1267 = vmatprep.subr.bf16.mxu0 0
  %1268 = vmatpush2.bf16.msra.mxu0 0
  %1269 = vmatprep.subr.bf16.mxu0 0
  %1270 = vmatpush2.bf16.msra.mxu0 0
  %1271 = vmatprep.subr.bf16.mxu0 0
  %1272 = vmatpush2.bf16.msra.mxu0 0
  %1273 = vmatprep.subr.bf16.mxu0 0
  %1274 = vmatpush2.bf16.msra.mxu0 0
  %1275 = vmatprep.mubr.bf16.mxu0 0
  %1276 = vmatmul.mubr.bf16.gmra.mxu0 %v1045
  %v1277 = vpop.f32.mrf.mxu0
  %v1278 = vadd.f32 0.0, %v1277
  %v1279 = vpop.f32.mrf.mxu0
  %v1280 = vadd.f32 0.0, %v1279
  %v1281 = vpop.f32.mrf.mxu0
  %v1282 = vpop.f32.mrf.mxu0
  %1283 = vdwg.mxu0
  %1284 = vmatprep.subr.bf16.mxu0 %v1210
  %1285 = vmatpush1.bf16.msra.mxu0 %v1209
  %1286 = vmatprep.subr.bf16.mxu0 %v1206
  %1287 = vmatpush1.bf16.msra.mxu0 %v1205
  %1288 = vmatprep.subr.bf16.mxu0 %v1202
  %1289 = vmatpush1.bf16.msra.mxu0 %v1201
  %1290 = vmatprep.subr.bf16.mxu0 %v1198
  %1291 = vmatpush1.bf16.msra.mxu0 %v1197
  %1292 = vmatprep.subr.bf16.mxu0 %v1194
  %1293 = vmatpush1.bf16.msra.mxu0 %v1193
  %1294 = vmatprep.subr.bf16.mxu0 %v1190
  %1295 = vmatpush1.bf16.msra.mxu0 %v1189
  %1296 = vmatprep.subr.bf16.mxu0 %v1186
  %1297 = vmatpush1.bf16.msra.mxu0 %v1185
  %1298 = vmatprep.subr.bf16.mxu0 %v1182
  %1299 = vmatpush1.bf16.msra.mxu0 %v1181
  %1300 = vmatprep.subr.bf16.mxu0 0
  %1301 = vmatpush2.bf16.msra.mxu0 0
  %1302 = vmatprep.subr.bf16.mxu0 0
  %1303 = vmatpush2.bf16.msra.mxu0 0
  %1304 = vmatprep.subr.bf16.mxu0 0
  %1305 = vmatpush2.bf16.msra.mxu0 0
  %1306 = vmatprep.subr.bf16.mxu0 0
  %1307 = vmatpush2.bf16.msra.mxu0 0
  %1308 = vmatprep.subr.bf16.mxu0 0
  %1309 = vmatpush2.bf16.msra.mxu0 0
  %1310 = vmatprep.subr.bf16.mxu0 0
  %1311 = vmatpush2.bf16.msra.mxu0 0
  %1312 = vmatprep.subr.bf16.mxu0 0
  %1313 = vmatpush2.bf16.msra.mxu0 0
  %1314 = vmatprep.subr.bf16.mxu0 0
  %1315 = vmatpush2.bf16.msra.mxu0 0
  %1316 = vmatprep.mubr.bf16.mxu0 0
  %1317 = vmatmul.mubr.bf16.gmra.mxu0 %v1045
  %v1318 = vpop.f32.mrf.mxu0
  %v1319 = vadd.f32 0.0, %v1318
  %v1320 = vpop.f32.mrf.mxu0
  %v1321 = vadd.f32 0.0, %v1320
  %v1322 = vpop.f32.mrf.mxu0
  %v1323 = vpop.f32.mrf.mxu0
  %1324 = vdwg.mxu0
  %v1325 = vunpack.c.l.bf16 %v1049
  %v1326 = vunpack.c.h.bf16 %v1049
  %v1327 = vunpack.c.l.bf16 %v1050
  %v1328 = vunpack.c.h.bf16 %v1050
  %v1329 = vadd.f32 %v1325, %v1278
  %v1330 = vadd.f32 %v1326, %v1280
  %v1331 = vadd.f32 %v1327, %v1319
  %v1332 = vadd.f32 %v1328, %v1321
  %v1333 = vtanh.pop %v1329
  %v1334 = vmul.f32 %v1330, 0.5
  %v1335 = vtanh.pop %v1334
  %v1336 = vmul.f32 %v1335, 0.5
  %v1337 = vadd.f32 %v1336, 0.5
  %v1338 = vmul.f32 %v1331, 0.5
  %v1339 = vtanh.pop %v1338
  %v1340 = vmul.f32 %v1339, 0.5
  %v1341 = vadd.f32 %v1340, 0.5
  %v1342 = vmul.f32 %v1332, 0.5
  %v1343 = vtanh.pop %v1342
  %v1344 = vmul.f32 %v1343, 0.5
  %v1345 = vadd.f32 %v1344, 0.5
  %v1346 = vmul.f32 %v1333, %v1337
  %v1347 = vmul.f32 %v1042, %v1341
  %v1348 = vadd.f32 %v1346, %v1347
  %v1349 = vtanh.pop %v1348
  %v1350 = vmul.f32 %v1349, %v1345
  %v1351 = vpack.c.bf16 %v1350, %v1350
  %s1352 = scalar_lea.vmem %s2, 12
  %1353 = vst [vmem:[%s1352] sm:$0xf] %v1351
  %s1354 = scalar_lea.vmem %s0, 64
  %v1355 = vld [vmem:[%s1354] sm:$0xff]
  %v1356 = vld [vmem:[%s1354 + $0x8] sm:$0xff]
  %v1357 = vld [vmem:[#allocation4] sm:$0xff]
  %v1358 = vld [vmem:[#allocation4 + $0x8] sm:$0xff]
  %v1359 = vld [vmem:[#allocation4 + $0x10] sm:$0xff]
  %v1360 = vld [vmem:[#allocation4 + $0x18] sm:$0xff]
  %v1361 = vld [vmem:[#allocation4 + $0x20] sm:$0xff]
  %v1362 = vld [vmem:[#allocation4 + $0x28] sm:$0xff]
  %v1363 = vld [vmem:[#allocation4 + $0x30] sm:$0xff]
  %v1364 = vld [vmem:[#allocation4 + $0x38] sm:$0xff]
  %v1365 = vld [vmem:[#allocation4 + $0x40] sm:$0xff]
  %v1366 = vld [vmem:[#allocation4 + $0x48] sm:$0xff]
  %v1367 = vld [vmem:[#allocation4 + $0x50] sm:$0xff]
  %v1368 = vld [vmem:[#allocation4 + $0x58] sm:$0xff]
  %v1369 = vld [vmem:[#allocation4 + $0x60] sm:$0xff]
  %v1370 = vld [vmem:[#allocation4 + $0x68] sm:$0xff]
  %v1371 = vld [vmem:[#allocation4 + $0x70] sm:$0xff]
  %v1372 = vld [vmem:[#allocation4 + $0x78] sm:$0xff]
  %v1373 = vld [vmem:[#allocation4 + $0x80] sm:$0xff]
  %v1374 = vld [vmem:[#allocation4 + $0x88] sm:$0xff]
  %v1375 = vld [vmem:[#allocation4 + $0x90] sm:$0xff]
  %v1376 = vld [vmem:[#allocation4 + $0x98] sm:$0xff]
  %v1377 = vld [vmem:[#allocation4 + $0xa0] sm:$0xff]
  %v1378 = vld [vmem:[#allocation4 + $0xa8] sm:$0xff]
  %v1379 = vld [vmem:[#allocation4 + $0xb0] sm:$0xff]
  %v1380 = vld [vmem:[#allocation4 + $0xb8] sm:$0xff]
  %v1381 = vld [vmem:[#allocation4 + $0xc0] sm:$0xff]
  %v1382 = vld [vmem:[#allocation4 + $0xc8] sm:$0xff]
  %v1383 = vld [vmem:[#allocation4 + $0xd0] sm:$0xff]
  %v1384 = vld [vmem:[#allocation4 + $0xd8] sm:$0xff]
  %v1385 = vld [vmem:[#allocation4 + $0xe0] sm:$0xff]
  %v1386 = vld [vmem:[#allocation4 + $0xe8] sm:$0xff]
  %v1387 = vld [vmem:[#allocation4 + $0xf0] sm:$0xff]
  %v1388 = vld [vmem:[#allocation4 + $0xf8] sm:$0xff]
  %v1421 = vunpack.c.l.b16 %v1357
  %v1422 = vunpack.c.h.b16 %v1357
  %v1423 = vunpack.c.l.b16 %v1358
  %v1424 = vunpack.c.h.b16 %v1358
  %v1425 = vunpack.c.l.b16 %v1359
  %v1426 = vunpack.c.h.b16 %v1359
  %v1427 = vunpack.c.l.b16 %v1360
  %v1428 = vunpack.c.h.b16 %v1360
  %v1429 = vunpack.c.l.b16 %v1361
  %v1430 = vunpack.c.h.b16 %v1361
  %v1431 = vunpack.c.l.b16 %v1362
  %v1432 = vunpack.c.h.b16 %v1362
  %v1433 = vunpack.c.l.b16 %v1363
  %v1434 = vunpack.c.h.b16 %v1363
  %v1435 = vunpack.c.l.b16 %v1364
  %v1436 = vunpack.c.h.b16 %v1364
  %v1437 = vunpack.c.l.b16 %v1365
  %v1438 = vunpack.c.h.b16 %v1365
  %v1439 = vunpack.c.l.b16 %v1366
  %v1440 = vunpack.c.h.b16 %v1366
  %v1441 = vunpack.c.l.b16 %v1367
  %v1442 = vunpack.c.h.b16 %v1367
  %v1443 = vunpack.c.l.b16 %v1368
  %v1444 = vunpack.c.h.b16 %v1368
  %v1445 = vunpack.c.l.b16 %v1369
  %v1446 = vunpack.c.h.b16 %v1369
  %v1447 = vunpack.c.l.b16 %v1370
  %v1448 = vunpack.c.h.b16 %v1370
  %v1449 = vunpack.c.l.b16 %v1371
  %v1450 = vunpack.c.h.b16 %v1371
  %v1451 = vunpack.c.l.b16 %v1372
  %v1452 = vunpack.c.h.b16 %v1372
  %v1453 = vunpack.c.l.b16 %v1373
  %v1454 = vunpack.c.h.b16 %v1373
  %v1455 = vunpack.c.l.b16 %v1374
  %v1456 = vunpack.c.h.b16 %v1374
  %v1457 = vunpack.c.l.b16 %v1375
  %v1458 = vunpack.c.h.b16 %v1375
  %v1459 = vunpack.c.l.b16 %v1376
  %v1460 = vunpack.c.h.b16 %v1376
  %v1461 = vunpack.c.l.b16 %v1377
  %v1462 = vunpack.c.h.b16 %v1377
  %v1463 = vunpack.c.l.b16 %v1378
  %v1464 = vunpack.c.h.b16 %v1378
  %v1465 = vunpack.c.l.b16 %v1379
  %v1466 = vunpack.c.h.b16 %v1379
  %v1467 = vunpack.c.l.b16 %v1380
  %v1468 = vunpack.c.h.b16 %v1380
  %v1469 = vunpack.c.l.b16 %v1381
  %v1470 = vunpack.c.h.b16 %v1381
  %v1471 = vunpack.c.l.b16 %v1382
  %v1472 = vunpack.c.h.b16 %v1382
  %v1473 = vunpack.c.l.b16 %v1383
  %v1474 = vunpack.c.h.b16 %v1383
  %v1475 = vunpack.c.l.b16 %v1384
  %v1476 = vunpack.c.h.b16 %v1384
  %v1477 = vunpack.c.l.b16 %v1385
  %v1478 = vunpack.c.h.b16 %v1385
  %v1479 = vunpack.c.l.b16 %v1386
  %v1480 = vunpack.c.h.b16 %v1386
  %v1481 = vunpack.c.l.b16 %v1387
  %v1482 = vunpack.c.h.b16 %v1387
  %v1483 = vunpack.c.l.b16 %v1388
  %v1484 = vunpack.c.h.b16 %v1388
  %v1485 = vpack.c.b16 %v1425, %v1421
  %v1486 = vpack.c.b16 %v1426, %v1422
  %v1487 = vpack.c.b16 %v1427, %v1423
  %v1488 = vpack.c.b16 %v1428, %v1424
  %v1489 = vpack.c.b16 %v1433, %v1429
  %v1490 = vpack.c.b16 %v1434, %v1430
  %v1491 = vpack.c.b16 %v1435, %v1431
  %v1492 = vpack.c.b16 %v1436, %v1432
  %v1493 = vpack.c.b16 %v1441, %v1437
  %v1494 = vpack.c.b16 %v1442, %v1438
  %v1495 = vpack.c.b16 %v1443, %v1439
  %v1496 = vpack.c.b16 %v1444, %v1440
  %v1497 = vpack.c.b16 %v1449, %v1445
  %v1498 = vpack.c.b16 %v1450, %v1446
  %v1499 = vpack.c.b16 %v1451, %v1447
  %v1500 = vpack.c.b16 %v1452, %v1448
  %v1501 = vpack.c.b16 %v1457, %v1453
  %v1502 = vpack.c.b16 %v1458, %v1454
  %v1503 = vpack.c.b16 %v1459, %v1455
  %v1504 = vpack.c.b16 %v1460, %v1456
  %v1505 = vpack.c.b16 %v1465, %v1461
  %v1506 = vpack.c.b16 %v1466, %v1462
  %v1507 = vpack.c.b16 %v1467, %v1463
  %v1508 = vpack.c.b16 %v1468, %v1464
  %v1509 = vpack.c.b16 %v1473, %v1469
  %v1510 = vpack.c.b16 %v1474, %v1470
  %v1511 = vpack.c.b16 %v1475, %v1471
  %v1512 = vpack.c.b16 %v1476, %v1472
  %v1513 = vpack.c.b16 %v1481, %v1477
  %v1514 = vpack.c.b16 %v1482, %v1478
  %v1515 = vpack.c.b16 %v1483, %v1479
  %v1516 = vpack.c.b16 %v1484, %v1480
  %1549 = vmatprep.subr.bf16.mxu0 %v1514
  %1550 = vmatpush1.bf16.msra.mxu0 %v1513
  %1551 = vmatprep.subr.bf16.mxu0 %v1510
  %1552 = vmatpush1.bf16.msra.mxu0 %v1509
  %1553 = vmatprep.subr.bf16.mxu0 %v1506
  %1554 = vmatpush1.bf16.msra.mxu0 %v1505
  %1555 = vmatprep.subr.bf16.mxu0 %v1502
  %1556 = vmatpush1.bf16.msra.mxu0 %v1501
  %1557 = vmatprep.subr.bf16.mxu0 %v1498
  %1558 = vmatpush1.bf16.msra.mxu0 %v1497
  %1559 = vmatprep.subr.bf16.mxu0 %v1494
  %1560 = vmatpush1.bf16.msra.mxu0 %v1493
  %1561 = vmatprep.subr.bf16.mxu0 %v1490
  %1562 = vmatpush1.bf16.msra.mxu0 %v1489
  %1563 = vmatprep.subr.bf16.mxu0 %v1486
  %1564 = vmatpush1.bf16.msra.mxu0 %v1485
  %1565 = vmatprep.subr.bf16.mxu0 0
  %1566 = vmatpush2.bf16.msra.mxu0 0
  %1567 = vmatprep.subr.bf16.mxu0 0
  %1568 = vmatpush2.bf16.msra.mxu0 0
  %1569 = vmatprep.subr.bf16.mxu0 0
  %1570 = vmatpush2.bf16.msra.mxu0 0
  %1571 = vmatprep.subr.bf16.mxu0 0
  %1572 = vmatpush2.bf16.msra.mxu0 0
  %1573 = vmatprep.subr.bf16.mxu0 0
  %1574 = vmatpush2.bf16.msra.mxu0 0
  %1575 = vmatprep.subr.bf16.mxu0 0
  %1576 = vmatpush2.bf16.msra.mxu0 0
  %1577 = vmatprep.subr.bf16.mxu0 0
  %1578 = vmatpush2.bf16.msra.mxu0 0
  %1579 = vmatprep.subr.bf16.mxu0 0
  %1580 = vmatpush2.bf16.msra.mxu0 0
  %1581 = vmatprep.mubr.bf16.mxu0 0
  %1582 = vmatmul.mubr.bf16.gmra.mxu0 %v1351
  %v1583 = vpop.f32.mrf.mxu0
  %v1584 = vadd.f32 0.0, %v1583
  %v1585 = vpop.f32.mrf.mxu0
  %v1586 = vadd.f32 0.0, %v1585
  %v1587 = vpop.f32.mrf.mxu0
  %v1588 = vpop.f32.mrf.mxu0
  %1589 = vdwg.mxu0
  %1590 = vmatprep.subr.bf16.mxu0 %v1516
  %1591 = vmatpush1.bf16.msra.mxu0 %v1515
  %1592 = vmatprep.subr.bf16.mxu0 %v1512
  %1593 = vmatpush1.bf16.msra.mxu0 %v1511
  %1594 = vmatprep.subr.bf16.mxu0 %v1508
  %1595 = vmatpush1.bf16.msra.mxu0 %v1507
  %1596 = vmatprep.subr.bf16.mxu0 %v1504
  %1597 = vmatpush1.bf16.msra.mxu0 %v1503
  %1598 = vmatprep.subr.bf16.mxu0 %v1500
  %1599 = vmatpush1.bf16.msra.mxu0 %v1499
  %1600 = vmatprep.subr.bf16.mxu0 %v1496
  %1601 = vmatpush1.bf16.msra.mxu0 %v1495
  %1602 = vmatprep.subr.bf16.mxu0 %v1492
  %1603 = vmatpush1.bf16.msra.mxu0 %v1491
  %1604 = vmatprep.subr.bf16.mxu0 %v1488
  %1605 = vmatpush1.bf16.msra.mxu0 %v1487
  %1606 = vmatprep.subr.bf16.mxu0 0
  %1607 = vmatpush2.bf16.msra.mxu0 0
  %1608 = vmatprep.subr.bf16.mxu0 0
  %1609 = vmatpush2.bf16.msra.mxu0 0
  %1610 = vmatprep.subr.bf16.mxu0 0
  %1611 = vmatpush2.bf16.msra.mxu0 0
  %1612 = vmatprep.subr.bf16.mxu0 0
  %1613 = vmatpush2.bf16.msra.mxu0 0
  %1614 = vmatprep.subr.bf16.mxu0 0
  %1615 = vmatpush2.bf16.msra.mxu0 0
  %1616 = vmatprep.subr.bf16.mxu0 0
  %1617 = vmatpush2.bf16.msra.mxu0 0
  %1618 = vmatprep.subr.bf16.mxu0 0
  %1619 = vmatpush2.bf16.msra.mxu0 0
  %1620 = vmatprep.subr.bf16.mxu0 0
  %1621 = vmatpush2.bf16.msra.mxu0 0
  %1622 = vmatprep.mubr.bf16.mxu0 0
  %1623 = vmatmul.mubr.bf16.gmra.mxu0 %v1351
  %v1624 = vpop.f32.mrf.mxu0
  %v1625 = vadd.f32 0.0, %v1624
  %v1626 = vpop.f32.mrf.mxu0
  %v1627 = vadd.f32 0.0, %v1626
  %v1628 = vpop.f32.mrf.mxu0
  %v1629 = vpop.f32.mrf.mxu0
  %1630 = vdwg.mxu0
  %v1631 = vunpack.c.l.bf16 %v1355
  %v1632 = vunpack.c.h.bf16 %v1355
  %v1633 = vunpack.c.l.bf16 %v1356
  %v1634 = vunpack.c.h.bf16 %v1356
  %v1635 = vadd.f32 %v1631, %v1584
  %v1636 = vadd.f32 %v1632, %v1586
  %v1637 = vadd.f32 %v1633, %v1625
  %v1638 = vadd.f32 %v1634, %v1627
  %v1639 = vtanh.pop %v1635
  %v1640 = vmul.f32 %v1636, 0.5
  %v1641 = vtanh.pop %v1640
  %v1642 = vmul.f32 %v1641, 0.5
  %v1643 = vadd.f32 %v1642, 0.5
  %v1644 = vmul.f32 %v1637, 0.5
  %v1645 = vtanh.pop %v1644
  %v1646 = vmul.f32 %v1645, 0.5
  %v1647 = vadd.f32 %v1646, 0.5
  %v1648 = vmul.f32 %v1638, 0.5
  %v1649 = vtanh.pop %v1648
  %v1650 = vmul.f32 %v1649, 0.5
  %v1651 = vadd.f32 %v1650, 0.5
  %v1652 = vmul.f32 %v1639, %v1643
  %v1653 = vmul.f32 %v1348, %v1647
  %v1654 = vadd.f32 %v1652, %v1653
  %v1655 = vtanh.pop %v1654
  %v1656 = vmul.f32 %v1655, %v1651
  %v1657 = vpack.c.bf16 %v1656, %v1656
  %s1658 = scalar_lea.vmem %s2, 16
  %1659 = vst [vmem:[%s1658] sm:$0xf] %v1657
  %s1660 = scalar_lea.vmem %s0, 80
  %v1661 = vld [vmem:[%s1660] sm:$0xff]
  %v1662 = vld [vmem:[%s1660 + $0x8] sm:$0xff]
  %v1663 = vld [vmem:[#allocation4] sm:$0xff]
  %v1664 = vld [vmem:[#allocation4 + $0x8] sm:$0xff]
  %v1665 = vld [vmem:[#allocation4 + $0x10] sm:$0xff]
  %v1666 = vld [vmem:[#allocation4 + $0x18] sm:$0xff]
  %v1667 = vld [vmem:[#allocation4 + $0x20] sm:$0xff]
  %v1668 = vld [vmem:[#allocation4 + $0x28] sm:$0xff]
  %v1669 = vld [vmem:[#allocation4 + $0x30] sm:$0xff]
  %v1670 = vld [vmem:[#allocation4 + $0x38] sm:$0xff]
  %v1671 = vld [vmem:[#allocation4 + $0x40] sm:$0xff]
  %v1672 = vld [vmem:[#allocation4 + $0x48] sm:$0xff]
  %v1673 = vld [vmem:[#allocation4 + $0x50] sm:$0xff]
  %v1674 = vld [vmem:[#allocation4 + $0x58] sm:$0xff]
  %v1675 = vld [vmem:[#allocation4 + $0x60] sm:$0xff]
  %v1676 = vld [vmem:[#allocation4 + $0x68] sm:$0xff]
  %v1677 = vld [vmem:[#allocation4 + $0x70] sm:$0xff]
  %v1678 = vld [vmem:[#allocation4 + $0x78] sm:$0xff]
  %v1679 = vld [vmem:[#allocation4 + $0x80] sm:$0xff]
  %v1680 = vld [vmem:[#allocation4 + $0x88] sm:$0xff]
  %v1681 = vld [vmem:[#allocation4 + $0x90] sm:$0xff]
  %v1682 = vld [vmem:[#allocation4 + $0x98] sm:$0xff]
  %v1683 = vld [vmem:[#allocation4 + $0xa0] sm:$0xff]
  %v1684 = vld [vmem:[#allocation4 + $0xa8] sm:$0xff]
  %v1685 = vld [vmem:[#allocation4 + $0xb0] sm:$0xff]
  %v1686 = vld [vmem:[#allocation4 + $0xb8] sm:$0xff]
  %v1687 = vld [vmem:[#allocation4 + $0xc0] sm:$0xff]
  %v1688 = vld [vmem:[#allocation4 + $0xc8] sm:$0xff]
  %v1689 = vld [vmem:[#allocation4 + $0xd0] sm:$0xff]
  %v1690 = vld [vmem:[#allocation4 + $0xd8] sm:$0xff]
  %v1691 = vld [vmem:[#allocation4 + $0xe0] sm:$0xff]
  %v1692 = vld [vmem:[#allocation4 + $0xe8] sm:$0xff]
  %v1693 = vld [vmem:[#allocation4 + $0xf0] sm:$0xff]
  %v1694 = vld [vmem:[#allocation4 + $0xf8] sm:$0xff]
  %v1727 = vunpack.c.l.b16 %v1663
  %v1728 = vunpack.c.h.b16 %v1663
  %v1729 = vunpack.c.l.b16 %v1664
  %v1730 = vunpack.c.h.b16 %v1664
  %v1731 = vunpack.c.l.b16 %v1665
  %v1732 = vunpack.c.h.b16 %v1665
  %v1733 = vunpack.c.l.b16 %v1666
  %v1734 = vunpack.c.h.b16 %v1666
  %v1735 = vunpack.c.l.b16 %v1667
  %v1736 = vunpack.c.h.b16 %v1667
  %v1737 = vunpack.c.l.b16 %v1668
  %v1738 = vunpack.c.h.b16 %v1668
  %v1739 = vunpack.c.l.b16 %v1669
  %v1740 = vunpack.c.h.b16 %v1669
  %v1741 = vunpack.c.l.b16 %v1670
  %v1742 = vunpack.c.h.b16 %v1670
  %v1743 = vunpack.c.l.b16 %v1671
  %v1744 = vunpack.c.h.b16 %v1671
  %v1745 = vunpack.c.l.b16 %v1672
  %v1746 = vunpack.c.h.b16 %v1672
  %v1747 = vunpack.c.l.b16 %v1673
  %v1748 = vunpack.c.h.b16 %v1673
  %v1749 = vunpack.c.l.b16 %v1674
  %v1750 = vunpack.c.h.b16 %v1674
  %v1751 = vunpack.c.l.b16 %v1675
  %v1752 = vunpack.c.h.b16 %v1675
  %v1753 = vunpack.c.l.b16 %v1676
  %v1754 = vunpack.c.h.b16 %v1676
  %v1755 = vunpack.c.l.b16 %v1677
  %v1756 = vunpack.c.h.b16 %v1677
  %v1757 = vunpack.c.l.b16 %v1678
  %v1758 = vunpack.c.h.b16 %v1678
  %v1759 = vunpack.c.l.b16 %v1679
  %v1760 = vunpack.c.h.b16 %v1679
  %v1761 = vunpack.c.l.b16 %v1680
  %v1762 = vunpack.c.h.b16 %v1680
  %v1763 = vunpack.c.l.b16 %v1681
  %v1764 = vunpack.c.h.b16 %v1681
  %v1765 = vunpack.c.l.b16 %v1682
  %v1766 = vunpack.c.h.b16 %v1682
  %v1767 = vunpack.c.l.b16 %v1683
  %v1768 = vunpack.c.h.b16 %v1683
  %v1769 = vunpack.c.l.b16 %v1684
  %v1770 = vunpack.c.h.b16 %v1684
  %v1771 = vunpack.c.l.b16 %v1685
  %v1772 = vunpack.c.h.b16 %v1685
  %v1773 = vunpack.c.l.b16 %v1686
  %v1774 = vunpack.c.h.b16 %v1686
  %v1775 = vunpack.c.l.b16 %v1687
  %v1776 = vunpack.c.h.b16 %v1687
  %v1777 = vunpack.c.l.b16 %v1688
  %v1778 = vunpack.c.h.b16 %v1688
  %v1779 = vunpack.c.l.b16 %v1689
  %v1780 = vunpack.c.h.b16 %v1689
  %v1781 = vunpack.c.l.b16 %v1690
  %v1782 = vunpack.c.h.b16 %v1690
  %v1783 = vunpack.c.l.b16 %v1691
  %v1784 = vunpack.c.h.b16 %v1691
  %v1785 = vunpack.c.l.b16 %v1692
  %v1786 = vunpack.c.h.b16 %v1692
  %v1787 = vunpack.c.l.b16 %v1693
  %v1788 = vunpack.c.h.b16 %v1693
  %v1789 = vunpack.c.l.b16 %v1694
  %v1790 = vunpack.c.h.b16 %v1694
  %v1791 = vpack.c.b16 %v1731, %v1727
  %v1792 = vpack.c.b16 %v1732, %v1728
  %v1793 = vpack.c.b16 %v1733, %v1729
  %v1794 = vpack.c.b16 %v1734, %v1730
  %v1795 = vpack.c.b16 %v1739, %v1735
  %v1796 = vpack.c.b16 %v1740, %v1736
  %v1797 = vpack.c.b16 %v1741, %v1737
  %v1798 = vpack.c.b16 %v1742, %v1738
  %v1799 = vpack.c.b16 %v1747, %v1743
  %v1800 = vpack.c.b16 %v1748, %v1744
  %v1801 = vpack.c.b16 %v1749, %v1745
  %v1802 = vpack.c.b16 %v1750, %v1746
  %v1803 = vpack.c.b16 %v1755, %v1751
  %v1804 = vpack.c.b16 %v1756, %v1752
  %v1805 = vpack.c.b16 %v1757, %v1753
  %v1806 = vpack.c.b16 %v1758, %v1754
  %v1807 = vpack.c.b16 %v1763, %v1759
  %v1808 = vpack.c.b16 %v1764, %v1760
  %v1809 = vpack.c.b16 %v1765, %v1761
  %v1810 = vpack.c.b16 %v1766, %v1762
  %v1811 = vpack.c.b16 %v1771, %v1767
  %v1812 = vpack.c.b16 %v1772, %v1768
  %v1813 = vpack.c.b16 %v1773, %v1769
  %v1814 = vpack.c.b16 %v1774, %v1770
  %v1815 = vpack.c.b16 %v1779, %v1775
  %v1816 = vpack.c.b16 %v1780, %v1776
  %v1817 = vpack.c.b16 %v1781, %v1777
  %v1818 = vpack.c.b16 %v1782, %v1778
  %v1819 = vpack.c.b16 %v1787, %v1783
  %v1820 = vpack.c.b16 %v1788, %v1784
  %v1821 = vpack.c.b16 %v1789, %v1785
  %v1822 = vpack.c.b16 %v1790, %v1786
  %1855 = vmatprep.subr.bf16.mxu0 %v1820
  %1856 = vmatpush1.bf16.msra.mxu0 %v1819
  %1857 = vmatprep.subr.bf16.mxu0 %v1816
  %1858 = vmatpush1.bf16.msra.mxu0 %v1815
  %1859 = vmatprep.subr.bf16.mxu0 %v1812
  %1860 = vmatpush1.bf16.msra.mxu0 %v1811
  %1861 = vmatprep.subr.bf16.mxu0 %v1808
  %1862 = vmatpush1.bf16.msra.mxu0 %v1807
  %1863 = vmatprep.subr.bf16.mxu0 %v1804
  %1864 = vmatpush1.bf16.msra.mxu0 %v1803
  %1865 = vmatprep.subr.bf16.mxu0 %v1800
  %1866 = vmatpush1.bf16.msra.mxu0 %v1799
  %1867 = vmatprep.subr.bf16.mxu0 %v1796
  %1868 = vmatpush1.bf16.msra.mxu0 %v1795
  %1869 = vmatprep.subr.bf16.mxu0 %v1792
  %1870 = vmatpush1.bf16.msra.mxu0 %v1791
  %1871 = vmatprep.subr.bf16.mxu0 0
  %1872 = vmatpush2.bf16.msra.mxu0 0
  %1873 = vmatprep.subr.bf16.mxu0 0
  %1874 = vmatpush2.bf16.msra.mxu0 0
  %1875 = vmatprep.subr.bf16.mxu0 0
  %1876 = vmatpush2.bf16.msra.mxu0 0
  %1877 = vmatprep.subr.bf16.mxu0 0
  %1878 = vmatpush2.bf16.msra.mxu0 0
  %1879 = vmatprep.subr.bf16.mxu0 0
  %1880 = vmatpush2.bf16.msra.mxu0 0
  %1881 = vmatprep.subr.bf16.mxu0 0
  %1882 = vmatpush2.bf16.msra.mxu0 0
  %1883 = vmatprep.subr.bf16.mxu0 0
  %1884 = vmatpush2.bf16.msra.mxu0 0
  %1885 = vmatprep.subr.bf16.mxu0 0
  %1886 = vmatpush2.bf16.msra.mxu0 0
  %1887 = vmatprep.mubr.bf16.mxu0 0
  %1888 = vmatmul.mubr.bf16.gmra.mxu0 %v1657
  %v1889 = vpop.f32.mrf.mxu0
  %v1890 = vadd.f32 0.0, %v1889
  %v1891 = vpop.f32.mrf.mxu0
  %v1892 = vadd.f32 0.0, %v1891
  %v1893 = vpop.f32.mrf.mxu0
  %v1894 = vpop.f32.mrf.mxu0
  %1895 = vdwg.mxu0
  %1896 = vmatprep.subr.bf16.mxu0 %v1822
  %1897 = vmatpush1.bf16.msra.mxu0 %v1821
  %1898 = vmatprep.subr.bf16.mxu0 %v1818
  %1899 = vmatpush1.bf16.msra.mxu0 %v1817
  %1900 = vmatprep.subr.bf16.mxu0 %v1814
  %1901 = vmatpush1.bf16.msra.mxu0 %v1813
  %1902 = vmatprep.subr.bf16.mxu0 %v1810
  %1903 = vmatpush1.bf16.msra.mxu0 %v1809
  %1904 = vmatprep.subr.bf16.mxu0 %v1806
  %1905 = vmatpush1.bf16.msra.mxu0 %v1805
  %1906 = vmatprep.subr.bf16.mxu0 %v1802
  %1907 = vmatpush1.bf16.msra.mxu0 %v1801
  %1908 = vmatprep.subr.bf16.mxu0 %v1798
  %1909 = vmatpush1.bf16.msra.mxu0 %v1797
  %1910 = vmatprep.subr.bf16.mxu0 %v1794
  %1911 = vmatpush1.bf16.msra.mxu0 %v1793
  %1912 = vmatprep.subr.bf16.mxu0 0
  %1913 = vmatpush2.bf16.msra.mxu0 0
  %1914 = vmatprep.subr.bf16.mxu0 0
  %1915 = vmatpush2.bf16.msra.mxu0 0
  %1916 = vmatprep.subr.bf16.mxu0 0
  %1917 = vmatpush2.bf16.msra.mxu0 0
  %1918 = vmatprep.subr.bf16.mxu0 0
  %1919 = vmatpush2.bf16.msra.mxu0 0
  %1920 = vmatprep.subr.bf16.mxu0 0
  %1921 = vmatpush2.bf16.msra.mxu0 0
  %1922 = vmatprep.subr.bf16.mxu0 0
  %1923 = vmatpush2.bf16.msra.mxu0 0
  %1924 = vmatprep.subr.bf16.mxu0 0
  %1925 = vmatpush2.bf16.msra.mxu0 0
  %1926 = vmatprep.subr.bf16.mxu0 0
  %1927 = vmatpush2.bf16.msra.mxu0 0
  %1928 = vmatprep.mubr.bf16.mxu0 0
  %1929 = vmatmul.mubr.bf16.gmra.mxu0 %v1657
  %v1930 = vpop.f32.mrf.mxu0
  %v1931 = vadd.f32 0.0, %v1930
  %v1932 = vpop.f32.mrf.mxu0
  %v1933 = vadd.f32 0.0, %v1932
  %v1934 = vpop.f32.mrf.mxu0
  %v1935 = vpop.f32.mrf.mxu0
  %1936 = vdwg.mxu0
  %v1937 = vunpack.c.l.bf16 %v1661
  %v1938 = vunpack.c.h.bf16 %v1661
  %v1939 = vunpack.c.l.bf16 %v1662
  %v1940 = vunpack.c.h.bf16 %v1662
  %v1941 = vadd.f32 %v1937, %v1890
  %v1942 = vadd.f32 %v1938, %v1892
  %v1943 = vadd.f32 %v1939, %v1931
  %v1944 = vadd.f32 %v1940, %v1933
  %v1945 = vtanh.pop %v1941
  %v1946 = vmul.f32 %v1942, 0.5
  %v1947 = vtanh.pop %v1946
  %v1948 = vmul.f32 %v1947, 0.5
  %v1949 = vadd.f32 %v1948, 0.5
  %v1950 = vmul.f32 %v1943, 0.5
  %v1951 = vtanh.pop %v1950
  %v1952 = vmul.f32 %v1951, 0.5
  %v1953 = vadd.f32 %v1952, 0.5
  %v1954 = vmul.f32 %v1944, 0.5
  %v1955 = vtanh.pop %v1954
  %v1956 = vmul.f32 %v1955, 0.5
  %v1957 = vadd.f32 %v1956, 0.5
  %v1958 = vmul.f32 %v1945, %v1949
  %v1959 = vmul.f32 %v1654, %v1953
  %v1960 = vadd.f32 %v1958, %v1959
  %v1961 = vtanh.pop %v1960
  %v1962 = vmul.f32 %v1961, %v1957
  %v1963 = vpack.c.bf16 %v1962, %v1962
  %s1964 = scalar_lea.vmem %s2, 20
  %1965 = vst [vmem:[%s1964] sm:$0xf] %v1963
  %s1966 = scalar_lea.vmem %s0, 96
  %v1967 = vld [vmem:[%s1966] sm:$0xff]
  %v1968 = vld [vmem:[%s1966 + $0x8] sm:$0xff]
  %v1969 = vld [vmem:[#allocation4] sm:$0xff]
  %v1970 = vld [vmem:[#allocation4 + $0x8] sm:$0xff]
  %v1971 = vld [vmem:[#allocation4 + $0x10] sm:$0xff]
  %v1972 = vld [vmem:[#allocation4 + $0x18] sm:$0xff]
  %v1973 = vld [vmem:[#allocation4 + $0x20] sm:$0xff]
  %v1974 = vld [vmem:[#allocation4 + $0x28] sm:$0xff]
  %v1975 = vld [vmem:[#allocation4 + $0x30] sm:$0xff]
  %v1976 = vld [vmem:[#allocation4 + $0x38] sm:$0xff]
  %v1977 = vld [vmem:[#allocation4 + $0x40] sm:$0xff]
  %v1978 = vld [vmem:[#allocation4 + $0x48] sm:$0xff]
  %v1979 = vld [vmem:[#allocation4 + $0x50] sm:$0xff]
  %v1980 = vld [vmem:[#allocation4 + $0x58] sm:$0xff]
  %v1981 = vld [vmem:[#allocation4 + $0x60] sm:$0xff]
  %v1982 = vld [vmem:[#allocation4 + $0x68] sm:$0xff]
  %v1983 = vld [vmem:[#allocation4 + $0x70] sm:$0xff]
  %v1984 = vld [vmem:[#allocation4 + $0x78] sm:$0xff]
  %v1985 = vld [vmem:[#allocation4 + $0x80] sm:$0xff]
  %v1986 = vld [vmem:[#allocation4 + $0x88] sm:$0xff]
  %v1987 = vld [vmem:[#allocation4 + $0x90] sm:$0xff]
  %v1988 = vld [vmem:[#allocation4 + $0x98] sm:$0xff]
  %v1989 = vld [vmem:[#allocation4 + $0xa0] sm:$0xff]
  %v1990 = vld [vmem:[#allocation4 + $0xa8] sm:$0xff]
  %v1991 = vld [vmem:[#allocation4 + $0xb0] sm:$0xff]
  %v1992 = vld [vmem:[#allocation4 + $0xb8] sm:$0xff]
  %v1993 = vld [vmem:[#allocation4 + $0xc0] sm:$0xff]
  %v1994 = vld [vmem:[#allocation4 + $0xc8] sm:$0xff]
  %v1995 = vld [vmem:[#allocation4 + $0xd0] sm:$0xff]
  %v1996 = vld [vmem:[#allocation4 + $0xd8] sm:$0xff]
  %v1997 = vld [vmem:[#allocation4 + $0xe0] sm:$0xff]
  %v1998 = vld [vmem:[#allocation4 + $0xe8] sm:$0xff]
  %v1999 = vld [vmem:[#allocation4 + $0xf0] sm:$0xff]
  %v2000 = vld [vmem:[#allocation4 + $0xf8] sm:$0xff]
  %v2033 = vunpack.c.l.b16 %v1969
  %v2034 = vunpack.c.h.b16 %v1969
  %v2035 = vunpack.c.l.b16 %v1970
  %v2036 = vunpack.c.h.b16 %v1970
  %v2037 = vunpack.c.l.b16 %v1971
  %v2038 = vunpack.c.h.b16 %v1971
  %v2039 = vunpack.c.l.b16 %v1972
  %v2040 = vunpack.c.h.b16 %v1972
  %v2041 = vunpack.c.l.b16 %v1973
  %v2042 = vunpack.c.h.b16 %v1973
  %v2043 = vunpack.c.l.b16 %v1974
  %v2044 = vunpack.c.h.b16 %v1974
  %v2045 = vunpack.c.l.b16 %v1975
  %v2046 = vunpack.c.h.b16 %v1975
  %v2047 = vunpack.c.l.b16 %v1976
  %v2048 = vunpack.c.h.b16 %v1976
  %v2049 = vunpack.c.l.b16 %v1977
  %v2050 = vunpack.c.h.b16 %v1977
  %v2051 = vunpack.c.l.b16 %v1978
  %v2052 = vunpack.c.h.b16 %v1978
  %v2053 = vunpack.c.l.b16 %v1979
  %v2054 = vunpack.c.h.b16 %v1979
  %v2055 = vunpack.c.l.b16 %v1980
  %v2056 = vunpack.c.h.b16 %v1980
  %v2057 = vunpack.c.l.b16 %v1981
  %v2058 = vunpack.c.h.b16 %v1981
  %v2059 = vunpack.c.l.b16 %v1982
  %v2060 = vunpack.c.h.b16 %v1982
  %v2061 = vunpack.c.l.b16 %v1983
  %v2062 = vunpack.c.h.b16 %v1983
  %v2063 = vunpack.c.l.b16 %v1984
  %v2064 = vunpack.c.h.b16 %v1984
  %v2065 = vunpack.c.l.b16 %v1985
  %v2066 = vunpack.c.h.b16 %v1985
  %v2067 = vunpack.c.l.b16 %v1986
  %v2068 = vunpack.c.h.b16 %v1986
  %v2069 = vunpack.c.l.b16 %v1987
  %v2070 = vunpack.c.h.b16 %v1987
  %v2071 = vunpack.c.l.b16 %v1988
  %v2072 = vunpack.c.h.b16 %v1988
  %v2073 = vunpack.c.l.b16 %v1989
  %v2074 = vunpack.c.h.b16 %v1989
  %v2075 = vunpack.c.l.b16 %v1990
  %v2076 = vunpack.c.h.b16 %v1990
  %v2077 = vunpack.c.l.b16 %v1991
  %v2078 = vunpack.c.h.b16 %v1991
  %v2079 = vunpack.c.l.b16 %v1992
  %v2080 = vunpack.c.h.b16 %v1992
  %v2081 = vunpack.c.l.b16 %v1993
  %v2082 = vunpack.c.h.b16 %v1993
  %v2083 = vunpack.c.l.b16 %v1994
  %v2084 = vunpack.c.h.b16 %v1994
  %v2085 = vunpack.c.l.b16 %v1995
  %v2086 = vunpack.c.h.b16 %v1995
  %v2087 = vunpack.c.l.b16 %v1996
  %v2088 = vunpack.c.h.b16 %v1996
  %v2089 = vunpack.c.l.b16 %v1997
  %v2090 = vunpack.c.h.b16 %v1997
  %v2091 = vunpack.c.l.b16 %v1998
  %v2092 = vunpack.c.h.b16 %v1998
  %v2093 = vunpack.c.l.b16 %v1999
  %v2094 = vunpack.c.h.b16 %v1999
  %v2095 = vunpack.c.l.b16 %v2000
  %v2096 = vunpack.c.h.b16 %v2000
  %v2097 = vpack.c.b16 %v2037, %v2033
  %v2098 = vpack.c.b16 %v2038, %v2034
  %v2099 = vpack.c.b16 %v2039, %v2035
  %v2100 = vpack.c.b16 %v2040, %v2036
  %v2101 = vpack.c.b16 %v2045, %v2041
  %v2102 = vpack.c.b16 %v2046, %v2042
  %v2103 = vpack.c.b16 %v2047, %v2043
  %v2104 = vpack.c.b16 %v2048, %v2044
  %v2105 = vpack.c.b16 %v2053, %v2049
  %v2106 = vpack.c.b16 %v2054, %v2050
  %v2107 = vpack.c.b16 %v2055, %v2051
  %v2108 = vpack.c.b16 %v2056, %v2052
  %v2109 = vpack.c.b16 %v2061, %v2057
  %v2110 = vpack.c.b16 %v2062, %v2058
  %v2111 = vpack.c.b16 %v2063, %v2059
  %v2112 = vpack.c.b16 %v2064, %v2060
  %v2113 = vpack.c.b16 %v2069, %v2065
  %v2114 = vpack.c.b16 %v2070, %v2066
  %v2115 = vpack.c.b16 %v2071, %v2067
  %v2116 = vpack.c.b16 %v2072, %v2068
  %v2117 = vpack.c.b16 %v2077, %v2073
  %v2118 = vpack.c.b16 %v2078, %v2074
  %v2119 = vpack.c.b16 %v2079, %v2075
  %v2120 = vpack.c.b16 %v2080, %v2076
  %v2121 = vpack.c.b16 %v2085, %v2081
  %v2122 = vpack.c.b16 %v2086, %v2082
  %v2123 = vpack.c.b16 %v2087, %v2083
  %v2124 = vpack.c.b16 %v2088, %v2084
  %v2125 = vpack.c.b16 %v2093, %v2089
  %v2126 = vpack.c.b16 %v2094, %v2090
  %v2127 = vpack.c.b16 %v2095, %v2091
  %v2128 = vpack.c.b16 %v2096, %v2092
  %2161 = vmatprep.subr.bf16.mxu0 %v2126
  %2162 = vmatpush1.bf16.msra.mxu0 %v2125
  %2163 = vmatprep.subr.bf16.mxu0 %v2122
  %2164 = vmatpush1.bf16.msra.mxu0 %v2121
  %2165 = vmatprep.subr.bf16.mxu0 %v2118
  %2166 = vmatpush1.bf16.msra.mxu0 %v2117
  %2167 = vmatprep.subr.bf16.mxu0 %v2114
  %2168 = vmatpush1.bf16.msra.mxu0 %v2113
  %2169 = vmatprep.subr.bf16.mxu0 %v2110
  %2170 = vmatpush1.bf16.msra.mxu0 %v2109
  %2171 = vmatprep.subr.bf16.mxu0 %v2106
  %2172 = vmatpush1.bf16.msra.mxu0 %v2105
  %2173 = vmatprep.subr.bf16.mxu0 %v2102
  %2174 = vmatpush1.bf16.msra.mxu0 %v2101
  %2175 = vmatprep.subr.bf16.mxu0 %v2098
  %2176 = vmatpush1.bf16.msra.mxu0 %v2097
  %2177 = vmatprep.subr.bf16.mxu0 0
  %2178 = vmatpush2.bf16.msra.mxu0 0
  %2179 = vmatprep.subr.bf16.mxu0 0
  %2180 = vmatpush2.bf16.msra.mxu0 0
  %2181 = vmatprep.subr.bf16.mxu0 0
  %2182 = vmatpush2.bf16.msra.mxu0 0
  %2183 = vmatprep.subr.bf16.mxu0 0
  %2184 = vmatpush2.bf16.msra.mxu0 0
  %2185 = vmatprep.subr.bf16.mxu0 0
  %2186 = vmatpush2.bf16.msra.mxu0 0
  %2187 = vmatprep.subr.bf16.mxu0 0
  %2188 = vmatpush2.bf16.msra.mxu0 0
  %2189 = vmatprep.subr.bf16.mxu0 0
  %2190 = vmatpush2.bf16.msra.mxu0 0
  %2191 = vmatprep.subr.bf16.mxu0 0
  %2192 = vmatpush2.bf16.msra.mxu0 0
  %2193 = vmatprep.mubr.bf16.mxu0 0
  %2194 = vmatmul.mubr.bf16.gmra.mxu0 %v1963
  %v2195 = vpop.f32.mrf.mxu0
  %v2196 = vadd.f32 0.0, %v2195
  %v2197 = vpop.f32.mrf.mxu0
  %v2198 = vadd.f32 0.0, %v2197
  %v2199 = vpop.f32.mrf.mxu0
  %v2200 = vpop.f32.mrf.mxu0
  %2201 = vdwg.mxu0
  %2202 = vmatprep.subr.bf16.mxu0 %v2128
  %2203 = vmatpush1.bf16.msra.mxu0 %v2127
  %2204 = vmatprep.subr.bf16.mxu0 %v2124
  %2205 = vmatpush1.bf16.msra.mxu0 %v2123
  %2206 = vmatprep.subr.bf16.mxu0 %v2120
  %2207 = vmatpush1.bf16.msra.mxu0 %v2119
  %2208 = vmatprep.subr.bf16.mxu0 %v2116
  %2209 = vmatpush1.bf16.msra.mxu0 %v2115
  %2210 = vmatprep.subr.bf16.mxu0 %v2112
  %2211 = vmatpush1.bf16.msra.mxu0 %v2111
  %2212 = vmatprep.subr.bf16.mxu0 %v2108
  %2213 = vmatpush1.bf16.msra.mxu0 %v2107
  %2214 = vmatprep.subr.bf16.mxu0 %v2104
  %2215 = vmatpush1.bf16.msra.mxu0 %v2103
  %2216 = vmatprep.subr.bf16.mxu0 %v2100
  %2217 = vmatpush1.bf16.msra.mxu0 %v2099
  %2218 = vmatprep.subr.bf16.mxu0 0
  %2219 = vmatpush2.bf16.msra.mxu0 0
  %2220 = vmatprep.subr.bf16.mxu0 0
  %2221 = vmatpush2.bf16.msra.mxu0 0
  %2222 = vmatprep.subr.bf16.mxu0 0
  %2223 = vmatpush2.bf16.msra.mxu0 0
  %2224 = vmatprep.subr.bf16.mxu0 0
  %2225 = vmatpush2.bf16.msra.mxu0 0
  %2226 = vmatprep.subr.bf16.mxu0 0
  %2227 = vmatpush2.bf16.msra.mxu0 0
  %2228 = vmatprep.subr.bf16.mxu0 0
  %2229 = vmatpush2.bf16.msra.mxu0 0
  %2230 = vmatprep.subr.bf16.mxu0 0
  %2231 = vmatpush2.bf16.msra.mxu0 0
  %2232 = vmatprep.subr.bf16.mxu0 0
  %2233 = vmatpush2.bf16.msra.mxu0 0
  %2234 = vmatprep.mubr.bf16.mxu0 0
  %2235 = vmatmul.mubr.bf16.gmra.mxu0 %v1963
  %v2236 = vpop.f32.mrf.mxu0
  %v2237 = vadd.f32 0.0, %v2236
  %v2238 = vpop.f32.mrf.mxu0
  %v2239 = vadd.f32 0.0, %v2238
  %v2240 = vpop.f32.mrf.mxu0
  %v2241 = vpop.f32.mrf.mxu0
  %2242 = vdwg.mxu0
  %v2243 = vunpack.c.l.bf16 %v1967
  %v2244 = vunpack.c.h.bf16 %v1967
  %v2245 = vunpack.c.l.bf16 %v1968
  %v2246 = vunpack.c.h.bf16 %v1968
  %v2247 = vadd.f32 %v2243, %v2196
  %v2248 = vadd.f32 %v2244, %v2198
  %v2249 = vadd.f32 %v2245, %v2237
  %v2250 = vadd.f32 %v2246, %v2239
  %v2251 = vtanh.pop %v2247
  %v2252 = vmul.f32 %v2248, 0.5
  %v2253 = vtanh.pop %v2252
  %v2254 = vmul.f32 %v2253, 0.5
  %v2255 = vadd.f32 %v2254, 0.5
  %v2256 = vmul.f32 %v2249, 0.5
  %v2257 = vtanh.pop %v2256
  %v2258 = vmul.f32 %v2257, 0.5
  %v2259 = vadd.f32 %v2258, 0.5
  %v2260 = vmul.f32 %v2250, 0.5
  %v2261 = vtanh.pop %v2260
  %v2262 = vmul.f32 %v2261, 0.5
  %v2263 = vadd.f32 %v2262, 0.5
  %v2264 = vmul.f32 %v2251, %v2255
  %v2265 = vmul.f32 %v1960, %v2259
  %v2266 = vadd.f32 %v2264, %v2265
  %v2267 = vtanh.pop %v2266
  %v2268 = vmul.f32 %v2267, %v2263
  %v2269 = vpack.c.bf16 %v2268, %v2268
  %s2270 = scalar_lea.vmem %s2, 24
  %2271 = vst [vmem:[%s2270] sm:$0xf] %v2269
  %s2272 = scalar_lea.vmem %s0, 112
  %v2273 = vld [vmem:[%s2272] sm:$0xff]
  %v2274 = vld [vmem:[%s2272 + $0x8] sm:$0xff]
  %v2275 = vld [vmem:[#allocation4] sm:$0xff]
  %v2276 = vld [vmem:[#allocation4 + $0x8] sm:$0xff]
  %v2277 = vld [vmem:[#allocation4 + $0x10] sm:$0xff]
  %v2278 = vld [vmem:[#allocation4 + $0x18] sm:$0xff]
  %v2279 = vld [vmem:[#allocation4 + $0x20] sm:$0xff]
  %v2280 = vld [vmem:[#allocation4 + $0x28] sm:$0xff]
  %v2281 = vld [vmem:[#allocation4 + $0x30] sm:$0xff]
  %v2282 = vld [vmem:[#allocation4 + $0x38] sm:$0xff]
  %v2283 = vld [vmem:[#allocation4 + $0x40] sm:$0xff]
  %v2284 = vld [vmem:[#allocation4 + $0x48] sm:$0xff]
  %v2285 = vld [vmem:[#allocation4 + $0x50] sm:$0xff]
  %v2286 = vld [vmem:[#allocation4 + $0x58] sm:$0xff]
  %v2287 = vld [vmem:[#allocation4 + $0x60] sm:$0xff]
  %v2288 = vld [vmem:[#allocation4 + $0x68] sm:$0xff]
  %v2289 = vld [vmem:[#allocation4 + $0x70] sm:$0xff]
  %v2290 = vld [vmem:[#allocation4 + $0x78] sm:$0xff]
  %v2291 = vld [vmem:[#allocation4 + $0x80] sm:$0xff]
  %v2292 = vld [vmem:[#allocation4 + $0x88] sm:$0xff]
  %v2293 = vld [vmem:[#allocation4 + $0x90] sm:$0xff]
  %v2294 = vld [vmem:[#allocation4 + $0x98] sm:$0xff]
  %v2295 = vld [vmem:[#allocation4 + $0xa0] sm:$0xff]
  %v2296 = vld [vmem:[#allocation4 + $0xa8] sm:$0xff]
  %v2297 = vld [vmem:[#allocation4 + $0xb0] sm:$0xff]
  %v2298 = vld [vmem:[#allocation4 + $0xb8] sm:$0xff]
  %v2299 = vld [vmem:[#allocation4 + $0xc0] sm:$0xff]
  %v2300 = vld [vmem:[#allocation4 + $0xc8] sm:$0xff]
  %v2301 = vld [vmem:[#allocation4 + $0xd0] sm:$0xff]
  %v2302 = vld [vmem:[#allocation4 + $0xd8] sm:$0xff]
  %v2303 = vld [vmem:[#allocation4 + $0xe0] sm:$0xff]
  %v2304 = vld [vmem:[#allocation4 + $0xe8] sm:$0xff]
  %v2305 = vld [vmem:[#allocation4 + $0xf0] sm:$0xff]
  %v2306 = vld [vmem:[#allocation4 + $0xf8] sm:$0xff]
  %v2339 = vunpack.c.l.b16 %v2275
  %v2340 = vunpack.c.h.b16 %v2275
  %v2341 = vunpack.c.l.b16 %v2276
  %v2342 = vunpack.c.h.b16 %v2276
  %v2343 = vunpack.c.l.b16 %v2277
  %v2344 = vunpack.c.h.b16 %v2277
  %v2345 = vunpack.c.l.b16 %v2278
  %v2346 = vunpack.c.h.b16 %v2278
  %v2347 = vunpack.c.l.b16 %v2279
  %v2348 = vunpack.c.h.b16 %v2279
  %v2349 = vunpack.c.l.b16 %v2280
  %v2350 = vunpack.c.h.b16 %v2280
  %v2351 = vunpack.c.l.b16 %v2281
  %v2352 = vunpack.c.h.b16 %v2281
  %v2353 = vunpack.c.l.b16 %v2282
  %v2354 = vunpack.c.h.b16 %v2282
  %v2355 = vunpack.c.l.b16 %v2283
  %v2356 = vunpack.c.h.b16 %v2283
  %v2357 = vunpack.c.l.b16 %v2284
  %v2358 = vunpack.c.h.b16 %v2284
  %v2359 = vunpack.c.l.b16 %v2285
  %v2360 = vunpack.c.h.b16 %v2285
  %v2361 = vunpack.c.l.b16 %v2286
  %v2362 = vunpack.c.h.b16 %v2286
  %v2363 = vunpack.c.l.b16 %v2287
  %v2364 = vunpack.c.h.b16 %v2287
  %v2365 = vunpack.c.l.b16 %v2288
  %v2366 = vunpack.c.h.b16 %v2288
  %v2367 = vunpack.c.l.b16 %v2289
  %v2368 = vunpack.c.h.b16 %v2289
  %v2369 = vunpack.c.l.b16 %v2290
  %v2370 = vunpack.c.h.b16 %v2290
  %v2371 = vunpack.c.l.b16 %v2291
  %v2372 = vunpack.c.h.b16 %v2291
  %v2373 = vunpack.c.l.b16 %v2292
  %v2374 = vunpack.c.h.b16 %v2292
  %v2375 = vunpack.c.l.b16 %v2293
  %v2376 = vunpack.c.h.b16 %v2293
  %v2377 = vunpack.c.l.b16 %v2294
  %v2378 = vunpack.c.h.b16 %v2294
  %v2379 = vunpack.c.l.b16 %v2295
  %v2380 = vunpack.c.h.b16 %v2295
  %v2381 = vunpack.c.l.b16 %v2296
  %v2382 = vunpack.c.h.b16 %v2296
  %v2383 = vunpack.c.l.b16 %v2297
  %v2384 = vunpack.c.h.b16 %v2297
  %v2385 = vunpack.c.l.b16 %v2298
  %v2386 = vunpack.c.h.b16 %v2298
  %v2387 = vunpack.c.l.b16 %v2299
  %v2388 = vunpack.c.h.b16 %v2299
  %v2389 = vunpack.c.l.b16 %v2300
  %v2390 = vunpack.c.h.b16 %v2300
  %v2391 = vunpack.c.l.b16 %v2301
  %v2392 = vunpack.c.h.b16 %v2301
  %v2393 = vunpack.c.l.b16 %v2302
  %v2394 = vunpack.c.h.b16 %v2302
  %v2395 = vunpack.c.l.b16 %v2303
  %v2396 = vunpack.c.h.b16 %v2303
  %v2397 = vunpack.c.l.b16 %v2304
  %v2398 = vunpack.c.h.b16 %v2304
  %v2399 = vunpack.c.l.b16 %v2305
  %v2400 = vunpack.c.h.b16 %v2305
  %v2401 = vunpack.c.l.b16 %v2306
  %v2402 = vunpack.c.h.b16 %v2306
  %v2403 = vpack.c.b16 %v2343, %v2339
  %v2404 = vpack.c.b16 %v2344, %v2340
  %v2405 = vpack.c.b16 %v2345, %v2341
  %v2406 = vpack.c.b16 %v2346, %v2342
  %v2407 = vpack.c.b16 %v2351, %v2347
  %v2408 = vpack.c.b16 %v2352, %v2348
  %v2409 = vpack.c.b16 %v2353, %v2349
  %v2410 = vpack.c.b16 %v2354, %v2350
  %v2411 = vpack.c.b16 %v2359, %v2355
  %v2412 = vpack.c.b16 %v2360, %v2356
  %v2413 = vpack.c.b16 %v2361, %v2357
  %v2414 = vpack.c.b16 %v2362, %v2358
  %v2415 = vpack.c.b16 %v2367, %v2363
  %v2416 = vpack.c.b16 %v2368, %v2364
  %v2417 = vpack.c.b16 %v2369, %v2365
  %v2418 = vpack.c.b16 %v2370, %v2366
  %v2419 = vpack.c.b16 %v2375, %v2371
  %v2420 = vpack.c.b16 %v2376, %v2372
  %v2421 = vpack.c.b16 %v2377, %v2373
  %v2422 = vpack.c.b16 %v2378, %v2374
  %v2423 = vpack.c.b16 %v2383, %v2379
  %v2424 = vpack.c.b16 %v2384, %v2380
  %v2425 = vpack.c.b16 %v2385, %v2381
  %v2426 = vpack.c.b16 %v2386, %v2382
  %v2427 = vpack.c.b16 %v2391, %v2387
  %v2428 = vpack.c.b16 %v2392, %v2388
  %v2429 = vpack.c.b16 %v2393, %v2389
  %v2430 = vpack.c.b16 %v2394, %v2390
  %v2431 = vpack.c.b16 %v2399, %v2395
  %v2432 = vpack.c.b16 %v2400, %v2396
  %v2433 = vpack.c.b16 %v2401, %v2397
  %v2434 = vpack.c.b16 %v2402, %v2398
  %2467 = vmatprep.subr.bf16.mxu0 %v2432
  %2468 = vmatpush1.bf16.msra.mxu0 %v2431
  %2469 = vmatprep.subr.bf16.mxu0 %v2428
  %2470 = vmatpush1.bf16.msra.mxu0 %v2427
  %2471 = vmatprep.subr.bf16.mxu0 %v2424
  %2472 = vmatpush1.bf16.msra.mxu0 %v2423
  %2473 = vmatprep.subr.bf16.mxu0 %v2420
  %2474 = vmatpush1.bf16.msra.mxu0 %v2419
  %2475 = vmatprep.subr.bf16.mxu0 %v2416
  %2476 = vmatpush1.bf16.msra.mxu0 %v2415
  %2477 = vmatprep.subr.bf16.mxu0 %v2412
  %2478 = vmatpush1.bf16.msra.mxu0 %v2411
  %2479 = vmatprep.subr.bf16.mxu0 %v2408
  %2480 = vmatpush1.bf16.msra.mxu0 %v2407
  %2481 = vmatprep.subr.bf16.mxu0 %v2404
  %2482 = vmatpush1.bf16.msra.mxu0 %v2403
  %2483 = vmatprep.subr.bf16.mxu0 0
  %2484 = vmatpush2.bf16.msra.mxu0 0
  %2485 = vmatprep.subr.bf16.mxu0 0
  %2486 = vmatpush2.bf16.msra.mxu0 0
  %2487 = vmatprep.subr.bf16.mxu0 0
  %2488 = vmatpush2.bf16.msra.mxu0 0
  %2489 = vmatprep.subr.bf16.mxu0 0
  %2490 = vmatpush2.bf16.msra.mxu0 0
  %2491 = vmatprep.subr.bf16.mxu0 0
  %2492 = vmatpush2.bf16.msra.mxu0 0
  %2493 = vmatprep.subr.bf16.mxu0 0
  %2494 = vmatpush2.bf16.msra.mxu0 0
  %2495 = vmatprep.subr.bf16.mxu0 0
  %2496 = vmatpush2.bf16.msra.mxu0 0
  %2497 = vmatprep.subr.bf16.mxu0 0
  %2498 = vmatpush2.bf16.msra.mxu0 0
  %2499 = vmatprep.mubr.bf16.mxu0 0
  %2500 = vmatmul.mubr.bf16.gmra.mxu0 %v2269
  %v2501 = vpop.f32.mrf.mxu0
  %v2502 = vadd.f32 0.0, %v2501
  %v2503 = vpop.f32.mrf.mxu0
  %v2504 = vadd.f32 0.0, %v2503
  %v2505 = vpop.f32.mrf.mxu0
  %v2506 = vpop.f32.mrf.mxu0
  %2507 = vdwg.mxu0
  %2508 = vmatprep.subr.bf16.mxu0 %v2434
  %2509 = vmatpush1.bf16.msra.mxu0 %v2433
  %2510 = vmatprep.subr.bf16.mxu0 %v2430
  %2511 = vmatpush1.bf16.msra.mxu0 %v2429
  %2512 = vmatprep.subr.bf16.mxu0 %v2426
  %2513 = vmatpush1.bf16.msra.mxu0 %v2425
  %2514 = vmatprep.subr.bf16.mxu0 %v2422
  %2515 = vmatpush1.bf16.msra.mxu0 %v2421
  %2516 = vmatprep.subr.bf16.mxu0 %v2418
  %2517 = vmatpush1.bf16.msra.mxu0 %v2417
  %2518 = vmatprep.subr.bf16.mxu0 %v2414
  %2519 = vmatpush1.bf16.msra.mxu0 %v2413
  %2520 = vmatprep.subr.bf16.mxu0 %v2410
  %2521 = vmatpush1.bf16.msra.mxu0 %v2409
  %2522 = vmatprep.subr.bf16.mxu0 %v2406
  %2523 = vmatpush1.bf16.msra.mxu0 %v2405
  %2524 = vmatprep.subr.bf16.mxu0 0
  %2525 = vmatpush2.bf16.msra.mxu0 0
  %2526 = vmatprep.subr.bf16.mxu0 0
  %2527 = vmatpush2.bf16.msra.mxu0 0
  %2528 = vmatprep.subr.bf16.mxu0 0
  %2529 = vmatpush2.bf16.msra.mxu0 0
  %2530 = vmatprep.subr.bf16.mxu0 0
  %2531 = vmatpush2.bf16.msra.mxu0 0
  %2532 = vmatprep.subr.bf16.mxu0 0
  %2533 = vmatpush2.bf16.msra.mxu0 0
  %2534 = vmatprep.subr.bf16.mxu0 0
  %2535 = vmatpush2.bf16.msra.mxu0 0
  %2536 = vmatprep.subr.bf16.mxu0 0
  %2537 = vmatpush2.bf16.msra.mxu0 0
  %2538 = vmatprep.subr.bf16.mxu0 0
  %2539 = vmatpush2.bf16.msra.mxu0 0
  %2540 = vmatprep.mubr.bf16.mxu0 0
  %2541 = vmatmul.mubr.bf16.gmra.mxu0 %v2269
  %v2542 = vpop.f32.mrf.mxu0
  %v2543 = vadd.f32 0.0, %v2542
  %v2544 = vpop.f32.mrf.mxu0
  %v2545 = vadd.f32 0.0, %v2544
  %v2546 = vpop.f32.mrf.mxu0
  %v2547 = vpop.f32.mrf.mxu0
  %2548 = vdwg.mxu0
  %v2549 = vunpack.c.l.bf16 %v2273
  %v2550 = vunpack.c.h.bf16 %v2273
  %v2551 = vunpack.c.l.bf16 %v2274
  %v2552 = vunpack.c.h.bf16 %v2274
  %v2553 = vadd.f32 %v2549, %v2502
  %v2554 = vadd.f32 %v2550, %v2504
  %v2555 = vadd.f32 %v2551, %v2543
  %v2556 = vadd.f32 %v2552, %v2545
  %v2557 = vtanh.pop %v2553
  %v2558 = vmul.f32 %v2554, 0.5
  %v2559 = vtanh.pop %v2558
  %v2560 = vmul.f32 %v2559, 0.5
  %v2561 = vadd.f32 %v2560, 0.5
  %v2562 = vmul.f32 %v2555, 0.5
  %v2563 = vtanh.pop %v2562
  %v2564 = vmul.f32 %v2563, 0.5
  %v2565 = vadd.f32 %v2564, 0.5
  %v2566 = vmul.f32 %v2556, 0.5
  %v2567 = vtanh.pop %v2566
  %v2568 = vmul.f32 %v2567, 0.5
  %v2569 = vadd.f32 %v2568, 0.5
  %v2570 = vmul.f32 %v2557, %v2561
  %v2571 = vmul.f32 %v2266, %v2565
  %v2572 = vadd.f32 %v2570, %v2571
  %v2573 = vtanh.pop %v2572
  %v2574 = vmul.f32 %v2573, %v2569
  %v2575 = vpack.c.bf16 %v2574, %v2574
  %s2576 = scalar_lea.vmem %s2, 28
  %2577 = vst [vmem:[%s2576] sm:$0xf] %v2575
  %2578 = vst [vmem:[#allocation2] sm:$0xff] %v2574
  %2579 = vst [vmem:[#allocation3] sm:$0xff] %v2572
  // Predicated region
  $region44: #{text_generation_forward.4} parent=0 // pred_check
    _
  $region45: #{text_generation_forward.4} parent=0 // pred_check_branch
    %2581 = sbr.rel (0) target = $region47
  $region46: #{text_generation_forward.4} parent=0 // pred_region
    _
  $region47: #{text_generation_forward.4} parent=0 // pred_fallthru
    _
  // Predicated region
  $region48: #{text_generation_forward.4} parent=0 // pred_check
    _
  $region49: #{text_generation_forward.4} parent=0 // pred_check_branch
    %2583 = sbr.rel (0) target = $region51
  $region50: #{text_generation_forward.4} parent=0 // pred_region
    _
  $region51: #{text_generation_forward.4} parent=0 // pred_fallthru
    _
  %2584 = vsyncmov [#allocation5]
  %s2585 = vpop.sfrf %2584
  %p2586 = scmp.eq.s32.totalorder %s2585, 0
  %p2587 = pneg %p2586
  %2589 = shalt.err (%p2587)

</llo_original>
